<compile_context>
chip_gen: v7x
topology: tpu7x:2x2x1
jax: 0.10.0
libtpu: 0.0.40
codegen_flags: <defaults>
</compile_context>

<pallas_src>
import jax
import jax.numpy as jnp
from jax.experimental import pallas as pl
from jax.experimental.pallas import tpu as pltpu

EPS = 1e-5          # nn.LayerNorm default
LOGITS_PAD = 128    # lane-dense logits slab width (2 + n_models + n_prompts <= 128)
BATCH_TILE = 16     # batch rows per grid step (bf16 sublane-packing friendly)
D_P1 = 512          # project hidden width
D_Z = 256           # z width
D_M1 = 512          # head_main hidden width


# ---------------------------------------------------------------------------
# Static slab layouts (shared between the parameter builder and the kernel)
# ---------------------------------------------------------------------------
def _wA_parts(H, FFN):      # bf16 weights whose input (row) dim is H
    return [('w_qkv', 3 * H), ('wo', H), ('wf1', FFN), ('wp1', D_P1)]


def _wD_parts():            # bf16 weights whose input (row) dim is 512
    return [('wp2', D_Z), ('wm2', D_Z), ('w_big', LOGITS_PAD)]


def _bias_parts(H, FFN):    # all f32 bias / LayerNorm vectors, one [1, W] slab
    return [('b_qkv', 3 * H), ('bo', H), ('ln1g', H), ('ln1b', H),
            ('bf1', FFN), ('bf2', H), ('ln2g', H), ('ln2b', H),
            ('bp1', D_P1), ('bp2', D_Z), ('lng', D_Z), ('lnb', D_Z),
            ('bm1', D_M1), ('bm2', D_Z), ('b_big', LOGITS_PAD)]


def _layout(parts):
    d, off = {}, 0
    for name, w in parts:
        d[name] = (off, w)
        off += w
    return d, off


def _layernorm(x, g, b):
    # two-pass mean / variance (matches nn.LayerNorm; avoids E[x^2]-E[x]^2
    # catastrophic cancellation)
    mu = jnp.mean(x, axis=-1, keepdims=True)
    d = x - mu
    var = jnp.mean(d * d, axis=-1, keepdims=True)
    return d * jax.lax.rsqrt(var + EPS) * g + b


# ---------------------------------------------------------------------------
# Fused kernel: embedding -> encoder layer -> CLS pool -> project/LN -> heads
# One grid step processes BATCH_TILE sequences.
# ---------------------------------------------------------------------------
def make_fused_kernel(H, FFN, S, VOCAB, bias_layout, wA_layout, wD_layout):
    scale = 1.0 / (float(H) ** 0.5)

    def kernel(ids_ref, mask_ref, tok_ref, pos_ref,
               wA_ref, wf2_ref, wm1_ref, wD_ref, bias_ref,
               z_ref, logits_ref):
        BT = ids_ref.shape[0]
        BS = BT * S
        bf16 = jnp.bfloat16

        def bias(name):
            off, w = bias_layout[name]
            return bias_ref[:, off:off + w]          # [1, w], 128-aligned slice

        def wA(name):
            off, w = wA_layout[name]
            return wA_ref[:, off:off + w]

        def wD(name):
            off, w = wD_layout[name]
            return wD_ref[:, off:off + w]

        # ---- embedding lookup in-kernel: one-hot @ tok_emb (MXU, no gather) --
        ids = ids_ref[...]                                            # [BT,S,1] i32
        iota_v = jax.lax.broadcasted_iota(jnp.int32, (BT, S, VOCAB), 2)
        onehot = (ids == iota_v).astype(bf16)                         # [BT,S,VOCAB]
        emb = jnp.dot(onehot.reshape(BS, VOCAB), tok_ref[...],
                      preferred_element_type=jnp.float32)             # [BS,H] f32
        x2 = (emb.reshape(BT, S, H) + pos_ref[...][None, :, :]).reshape(BS, H)

        # ---- fused QKV projection: one [BS,H] @ [H,3H] MXU matmul ------------
        qkv = jnp.dot(x2.astype(bf16), wA('w_qkv'),
                      preferred_element_type=jnp.float32) + bias('b_qkv')
        qkv_bf = qkv.astype(bf16)                                     # cast once
        q = qkv_bf[:, 0 * H:1 * H].reshape(BT, S, H)
        k = qkv_bf[:, 1 * H:2 * H].reshape(BT, S, H)
        v = qkv_bf[:, 2 * H:3 * H].reshape(BT, S, H)

        # ---- single-head self-attention (f32 softmax, bf16 matmul inputs) ----
        mask = mask_ref[...]                                          # [BT,S] f32
        scores = jnp.einsum('bqd,bkd->bqk', q, k,
                            preferred_element_type=jnp.float32) * scale
        scores = scores + (1.0 - mask)[:, None, :] * (-1e9)
        scores = scores - jnp.max(scores, axis=-1, keepdims=True)
        p = jnp.exp(scores)
        # approx reciprocal -> EUP slot; ~1e-3 rel err, fine for inference logits
        p = p * pl.reciprocal(jnp.sum(p, axis=-1, keepdims=True), approx=True)
        ctx = jnp.einsum('bqk,bkd->bqd', p.astype(bf16), v,
                         preferred_element_type=jnp.float32)          # [BT,S,H]

        attn = jnp.dot(ctx.reshape(BS, H).astype(bf16), wA('wo'),
                       preferred_element_type=jnp.float32) + bias('bo')
        h1 = _layernorm(x2 + attn, bias('ln1g'), bias('ln1b'))        # [BS,H] f32

        # ---- FFN --------------------------------------------------------------
        f = jnp.maximum(
            jnp.dot(h1.astype(bf16), wA('wf1'),
                    preferred_element_type=jnp.float32) + bias('bf1'), 0.0)
        f = jnp.dot(f.astype(bf16), wf2_ref[...],
                    preferred_element_type=jnp.float32) + bias('bf2')
        h2 = _layernorm(h1 + f, bias('ln2g'), bias('ln2b'))           # [BS,H]

        # ---- CLS pooling (row 0 of each sequence); batch pre-padded outside ---
        h_cls = h2.reshape(BT, S, H)[:, 0, :]                         # [BT,H]

        # ---- project: Linear(H,512) -> ReLU -> Linear(512,256) -> LayerNorm ---
        pp = jnp.maximum(
            jnp.dot(h_cls.astype(bf16), wA('wp1'),
                    preferred_element_type=jnp.float32) + bias('bp1'), 0.0)
        zp = jnp.dot(pp.astype(bf16), wD('wp2'),
                     preferred_element_type=jnp.float32) + bias('bp2')
        z = _layernorm(zp, bias('lng'), bias('lnb'))                  # [BT,256]
        z_ref[...] = z

        # ---- head_main trunk (Dropout = identity at inference) ----------------
        z_bf = z.astype(bf16)
        m = jnp.maximum(
            jnp.dot(z_bf, wm1_ref[...],
                    preferred_element_type=jnp.float32) + bias('bm1'), 0.0)
        m = jnp.maximum(
            jnp.dot(m.astype(bf16), wD('wm2'),
                    preferred_element_type=jnp.float32) + bias('bm2'), 0.0)

        # ---- all three logit heads, one lane-dense slab; split-dot (no concat)
        # rows 0:256 of w_big -> head_main final Linear (input m)
        # rows 256:512        -> head_model | head_prompt (input z; GRL = id fwd)
        w_big = wD('w_big')                                           # [512,128]
        logits_ref[...] = (
            jnp.dot(m.astype(bf16), w_big[0:D_Z, :],
                    preferred_element_type=jnp.float32)
            + jnp.dot(z_bf, w_big[D_Z:2 * D_Z, :],
                      preferred_element_type=jnp.float32)
            + bias('b_big'))

    return kernel


# ---------------------------------------------------------------------------
# Wrapper
# ---------------------------------------------------------------------------
def model_forward(input_ids, attention_mask, params, n_models, n_prompts):
    tok_emb, pos_emb, wA, wf2, wm1, wD, bias_slab = params
    VOCAB, H = tok_emb.shape
    S = pos_emb.shape[0]
    FFN = wf2.shape[0]
    B = input_ids.shape[0]

    BT = BATCH_TILE
    B_pad = ((B + BT - 1) // BT) * BT
    pad = B_pad - B

    # pre-pad batch to whole tiles; pad rows get ids=0 / mask=1 so every softmax
    # row stays finite (results sliced off below)
    ids_p = jnp.pad(input_ids.astype(jnp.int32), ((0, pad), (0, 0)))[..., None]
    mask_p = jnp.pad(attention_mask.astype(jnp.float32), ((0, pad), (0, 0)),
                     constant_values=1.0)

    bias_layout, _ = _layout(_bias_parts(H, FFN))
    wA_layout, _ = _layout(_wA_parts(H, FFN))
    wD_layout, _ = _layout(_wD_parts())
    kernel = make_fused_kernel(H, FFN, S, VOCAB, bias_layout, wA_layout, wD_layout)

    # ---- cost / VMEM hints --------------------------------------------------
    n_tiles = B_pad // BT
    BS_t = BT * S
    flops_tile = (2 * BS_t * VOCAB * H                       # embedding one-hot matmul
                  + 2 * BS_t * H * (3 * H)                   # qkv
                  + 4 * BT * S * S * H                       # attn scores + ctx
                  + 2 * BS_t * H * H                         # wo
                  + 4 * BS_t * H * FFN                       # ffn
                  + 2 * BT * (H * D_P1 + D_P1 * D_Z + D_Z * D_M1
                              + D_M1 * D_Z + 2 * D_Z * LOGITS_PAD))
    bytes_in = sum(int(a.size) * a.dtype.itemsize
                   for a in (ids_p, mask_p, tok_emb, pos_emb, wA, wf2, wm1, wD,
                             bias_slab))
    bytes_out = (B_pad * D_Z + B_pad * LOGITS_PAD) * 4
    cost = pl.CostEstimate(flops=int(flops_tile * n_tiles),
                           transcendentals=int(B_pad * S * S + 4 * B_pad * S),
                           bytes_accessed=int(bytes_in + bytes_out))

    z_out, logits_out = pl.pallas_call(
        kernel,
        grid=(n_tiles,),
        out_shape=(jax.ShapeDtypeStruct((B_pad, D_Z), jnp.float32),
                   jax.ShapeDtypeStruct((B_pad, LOGITS_PAD), jnp.float32)),
        in_specs=[
            pl.BlockSpec((BT, S, 1), lambda i: (i, 0, 0)),       # input_ids
            pl.BlockSpec((BT, S), lambda i: (i, 0)),             # attention_mask
            pl.BlockSpec(tok_emb.shape, lambda i: (0, 0)),       # tok_emb (bf16)
            pl.BlockSpec(pos_emb.shape, lambda i: (0, 0)),       # pos_emb (f32)
            pl.BlockSpec(wA.shape, lambda i: (0, 0)),            # weights, in-dim H
            pl.BlockSpec(wf2.shape, lambda i: (0, 0)),           # wf2
            pl.BlockSpec(wm1.shape, lambda i: (0, 0)),           # wm1
            pl.BlockSpec(wD.shape, lambda i: (0, 0)),            # weights, in-dim 512
            pl.BlockSpec(bias_slab.shape, lambda i: (0, 0)),     # bias/LN slab
        ],
        out_specs=(pl.BlockSpec((BT, D_Z), lambda i: (i, 0)),
                   pl.BlockSpec((BT, LOGITS_PAD), lambda i: (i, 0))),
        compiler_params=pltpu.CompilerParams(
            dimension_semantics=("parallel",),
            vmem_limit_bytes=32 * 1024 * 1024),
        cost_estimate=cost,
    )(ids_p, mask_p, tok_emb, pos_emb, wA, wf2, wm1, wD, bias_slab)

    # glue slices: drop batch padding, split the lane-dense logits slab
    z = z_out[:B]
    logits_main = logits_out[:B, 0:2]
    logits_model = logits_out[:B, 2:2 + n_models]
    logits_prompt = logits_out[:B, 2 + n_models:2 + n_models + n_prompts]
    return {'z': z, 'logits': logits_main,
            'logits_model': logits_model, 'logits_prompt': logits_prompt}


# ---------------------------------------------------------------------------
# Deterministic parameter construction (weights pre-transposed to [in, out];
# matmul weights in bf16 slabs grouped by input dim, biases/LN in one f32 slab)
# ---------------------------------------------------------------------------
def _linear(key, fan_in, fan_out):
    kw, kb = jax.random.split(key)
    w = jax.random.normal(kw, (fan_in, fan_out), jnp.float32) * 0.02
    b = jax.random.normal(kb, (1, fan_out), jnp.float32) * 0.02
    return w, b


def build_params(key, vocab, seq, hidden, ffn, n_models, n_prompts):
    assert 2 + n_models + n_prompts <= LOGITS_PAD
    ks = jax.random.split(key, 16)
    tok_emb = jax.random.normal(ks[0], (vocab, hidden), jnp.float32) * 0.02
    pos_emb = jax.random.normal(ks[1], (seq, hidden), jnp.float32) * 0.02

    # synthetic encoder layer (stands in for the pretrained HF encoder)
    wq, bq = _linear(ks[2], hidden, hidden)
    wk, bk = _linear(ks[3], hidden, hidden)
    wv, bv = _linear(ks[4], hidden, hidden)
    w_qkv = jnp.concatenate([wq, wk, wv], axis=1)            # [H, 3H]
    b_qkv = jnp.concatenate([bq, bk, bv], axis=1)            # [1, 3H]
    wo, bo = _linear(ks[5], hidden, hidden)
    wf1, bf1 = _linear(ks[6], hidden, ffn)
    wf2, bf2 = _linear(ks[7], ffn, hidden)
    ln1g = jnp.ones((1, hidden), jnp.float32); ln1b = jnp.zeros((1, hidden), jnp.float32)
    ln2g = jnp.ones((1, hidden), jnp.float32); ln2b = jnp.zeros((1, hidden), jnp.float32)

    # heads
    wp1, bp1 = _linear(ks[8], hidden, D_P1)
    wp2, bp2 = _linear(ks[9], D_P1, D_Z)
    lng = jnp.ones((1, D_Z), jnp.float32); lnb = jnp.zeros((1, D_Z), jnp.float32)
    wm1, bm1 = _linear(ks[10], D_Z, D_M1)
    wm2, bm2 = _linear(ks[11], D_M1, D_Z)
    wm3, bm3 = _linear(ks[12], D_Z, 2)
    wmod, bmod = _linear(ks[13], D_Z, n_models)
    wpr, bpr = _linear(ks[14], D_Z, n_prompts)

    # lane-dense final-head weight:
    #   rows 0:256   <- wm3        (input = m, head_main final Linear)
    #   rows 256:512 <- wmod | wpr (input = z / pseudo_z; GRL = identity fwd)
    n_logits = 2 + n_models + n_prompts
    w_big = jnp.zeros((2 * D_Z, LOGITS_PAD), jnp.float32)
    w_big = w_big.at[0:D_Z, 0:2].set(wm3)
    w_big = w_big.at[D_Z:2 * D_Z, 2:2 + n_models].set(wmod)
    w_big = w_big.at[D_Z:2 * D_Z, 2 + n_models:n_logits].set(wpr)
    b_big = jnp.zeros((1, LOGITS_PAD), jnp.float32)
    b_big = b_big.at[:, 0:2].set(bm3)
    b_big = b_big.at[:, 2:2 + n_models].set(bmod)
    b_big = b_big.at[:, 2 + n_models:n_logits].set(bpr)

    bf = lambda w: w.astype(jnp.bfloat16)

    # few big operand slabs instead of 26 small DMAs
    wA = jnp.concatenate([bf(w_qkv), bf(wo), bf(wf1), bf(wp1)], axis=1)  # [H, 3H+H+FFN+512]
    wD = jnp.concatenate([bf(wp2), bf(wm2), bf(w_big)], axis=1)          # [512, 640]
    bias_arrays = {'b_qkv': b_qkv, 'bo': bo, 'ln1g': ln1g, 'ln1b': ln1b,
                   'bf1': bf1, 'bf2': bf2, 'ln2g': ln2g, 'ln2b': ln2b,
                   'bp1': bp1, 'bp2': bp2, 'lng': lng, 'lnb': lnb,
                   'bm1': bm1, 'bm2': bm2, 'b_big': b_big}
    bias_slab = jnp.concatenate(
        [bias_arrays[name] for name, _ in _bias_parts(hidden, ffn)], axis=1)

    return (bf(tok_emb), pos_emb, wA, bf(wf2), bf(wm1), wD, bias_slab)


if __name__ == "__main__":
    B, S, H, FFN = 2, 8, 128, 256
    VOCAB = 64
    N_MODELS, N_PROMPTS = 4, 6

    key = jax.random.PRNGKey(0)
    k_ids, k_params = jax.random.split(key)

    input_ids = jax.random.randint(k_ids, (B, S), 0, VOCAB, dtype=jnp.int32)
    attention_mask = jnp.ones((B, S), jnp.float32).at[1, 6:].set(0.0)

    params = build_params(k_params, VOCAB, S, H, FFN, N_MODELS, N_PROMPTS)

    out = model_forward(input_ids, attention_mask, params, N_MODELS, N_PROMPTS)
    jax.block_until_ready(out)

    assert out['z'].shape == (B, 256)
    assert out['logits'].shape == (B, 2)
    assert out['logits_model'].shape == (B, N_MODELS)
    assert out['logits_prompt'].shape == (B, N_PROMPTS)
    assert all(bool(jnp.all(jnp.isfinite(v))) for v in out.values())
    print("KERNEL_OK")
</pallas_src>

<mosaic_0001>
module attributes {stable_mosaic.version = 11 : i64} {
  func.func @kernel(%arg0: i32, %arg1: memref<16x8x1xi32, #tpu.memory_space<vmem>>, %arg2: memref<16x8xf32, #tpu.memory_space<vmem>>, %arg3: memref<64x128xbf16, #tpu.memory_space<vmem>>, %arg4: memref<8x128xf32, #tpu.memory_space<vmem>>, %arg5: memref<128x1280xbf16, #tpu.memory_space<vmem>>, %arg6: memref<256x128xbf16, #tpu.memory_space<vmem>>, %arg7: memref<256x512xbf16, #tpu.memory_space<vmem>>, %arg8: memref<512x640xbf16, #tpu.memory_space<vmem>>, %arg9: memref<1x3584xf32, #tpu.memory_space<vmem>>, %arg10: memref<16x256xf32, #tpu.memory_space<vmem>>, %arg11: memref<16x128xf32, #tpu.memory_space<vmem>>) attributes {dimension_semantics = [#tpu.dimension_semantics<parallel>], iteration_bounds = array<i64: 1>, scalar_prefetch = 0 : i64, scratch_operands = 0 : i64, tpu.core_type = #tpu.core_type<tc>, window_params = [{transform_indices = @transform_0, window_bounds = array<i64: 16, 8, 1>}, {transform_indices = @transform_1, window_bounds = array<i64: 16, 8>}, {pipeline_mode = #tpu.pipeline_mode<synchronous>, transform_indices = @transform_2, window_bounds = array<i64: 64, 128>}, {pipeline_mode = #tpu.pipeline_mode<synchronous>, transform_indices = @transform_3, window_bounds = array<i64: 8, 128>}, {pipeline_mode = #tpu.pipeline_mode<synchronous>, transform_indices = @transform_4, window_bounds = array<i64: 128, 1280>}, {pipeline_mode = #tpu.pipeline_mode<synchronous>, transform_indices = @transform_5, window_bounds = array<i64: 256, 128>}, {pipeline_mode = #tpu.pipeline_mode<synchronous>, transform_indices = @transform_6, window_bounds = array<i64: 256, 512>}, {pipeline_mode = #tpu.pipeline_mode<synchronous>, transform_indices = @transform_7, window_bounds = array<i64: 512, 640>}, {pipeline_mode = #tpu.pipeline_mode<synchronous>, transform_indices = @transform_8, window_bounds = array<i64: 1, 3584>}, {transform_indices = @transform_9, window_bounds = array<i64: 16, 256>}, {transform_indices = @transform_10, window_bounds = array<i64: 16, 128>}]} {
    %c0 = arith.constant 0 : index
    %c0_0 = arith.constant 0 : index
    %c0_1 = arith.constant 0 : index
    %0 = vector.load %arg1[%c0, %c0_0, %c0_1] : memref<16x8x1xi32, #tpu.memory_space<vmem>>, vector<16x8x1xi32>
    %1 = tpu.iota {dimensions = array<i32: 2>} : vector<16x8x64xi32>
    %2 = vector.broadcast %0 : vector<16x8x1xi32> to vector<16x8x64xi32>
    %3 = arith.cmpi eq, %2, %1 : vector<16x8x64xi32>
    %4 = arith.extui %3 : vector<16x8x64xi1> to vector<16x8x64xi32>
    %5 = arith.sitofp %4 : vector<16x8x64xi32> to vector<16x8x64xf32>
    %6 = arith.truncf %5 : vector<16x8x64xf32> to vector<16x8x64xbf16>
    %7 = vector.shape_cast %6 : vector<16x8x64xbf16> to vector<128x64xbf16>
    %c0_2 = arith.constant 0 : index
    %c0_3 = arith.constant 0 : index
    %8 = vector.load %arg3[%c0_2, %c0_3] : memref<64x128xbf16, #tpu.memory_space<vmem>>, vector<64x128xbf16>
    %cst = arith.constant dense<0.000000e+00> : vector<128x128xf32>
    %9 = tpu.matmul %7, %8, %cst {dimension_numbers = #tpu.dot_dimension_numbers<[1], [0], [0], [1], [0, 0, 1, 1], [], []>} : vector<128x64xbf16>, vector<64x128xbf16>, vector<128x128xf32> -> vector<128x128xf32>
    %10 = vector.shape_cast %9 : vector<128x128xf32> to vector<16x8x128xf32>
    %c0_4 = arith.constant 0 : index
    %c0_5 = arith.constant 0 : index
    %11 = vector.load %arg4[%c0_4, %c0_5] : memref<8x128xf32, #tpu.memory_space<vmem>>, vector<8x128xf32>
    %12 = vector.shape_cast %11 : vector<8x128xf32> to vector<1x8x128xf32>
    %13 = vector.broadcast %12 : vector<1x8x128xf32> to vector<16x8x128xf32>
    %14 = arith.addf %10, %13 : vector<16x8x128xf32>
    %15 = vector.shape_cast %14 : vector<16x8x128xf32> to vector<128x128xf32>
    %16 = arith.truncf %15 : vector<128x128xf32> to vector<128x128xbf16>
    %c0_6 = arith.constant 0 : index
    %c0_7 = arith.constant 0 : index
    %17 = vector.load %arg5[%c0_6, %c0_7] : memref<128x1280xbf16, #tpu.memory_space<vmem>>, vector<128x384xbf16>
    %cst_8 = arith.constant dense<0.000000e+00> : vector<128x384xf32>
    %18 = tpu.matmul %16, %17, %cst_8 {dimension_numbers = #tpu.dot_dimension_numbers<[1], [0], [0], [1], [0, 0, 1, 1], [], []>} : vector<128x128xbf16>, vector<128x384xbf16>, vector<128x384xf32> -> vector<128x384xf32>
    %c0_9 = arith.constant 0 : index
    %c0_10 = arith.constant 0 : index
    %19 = vector.load %arg9[%c0_9, %c0_10] : memref<1x3584xf32, #tpu.memory_space<vmem>>, vector<1x384xf32>
    %20 = vector.broadcast %19 : vector<1x384xf32> to vector<128x384xf32>
    %21 = arith.addf %18, %20 : vector<128x384xf32>
    %22 = arith.truncf %21 : vector<128x384xf32> to vector<128x384xbf16>
    %23 = vector.extract_strided_slice %22 {offsets = [0, 0], sizes = [128, 128], strides = [1, 1]} : vector<128x384xbf16> to vector<128x128xbf16>
    %24 = vector.shape_cast %23 : vector<128x128xbf16> to vector<16x8x128xbf16>
    %25 = vector.extract_strided_slice %22 {offsets = [0, 128], sizes = [128, 128], strides = [1, 1]} : vector<128x384xbf16> to vector<128x128xbf16>
    %26 = vector.shape_cast %25 : vector<128x128xbf16> to vector<16x8x128xbf16>
    %27 = vector.extract_strided_slice %22 {offsets = [0, 256], sizes = [128, 128], strides = [1, 1]} : vector<128x384xbf16> to vector<128x128xbf16>
    %28 = vector.shape_cast %27 : vector<128x128xbf16> to vector<16x8x128xbf16>
    %c0_11 = arith.constant 0 : index
    %c0_12 = arith.constant 0 : index
    %29 = vector.load %arg2[%c0_11, %c0_12] : memref<16x8xf32, #tpu.memory_space<vmem>>, vector<16x8xf32>
    "tpu.trace_start"() <{level = 10 : i32, message = "bqd,bkd->bqk"}> : () -> ()
    %cst_13 = arith.constant dense<0.000000e+00> : vector<16x8x8xf32>
    %30 = tpu.matmul %24, %26, %cst_13 {dimension_numbers = #tpu.dot_dimension_numbers<[2], [2], [1], [1], [0, 0, 0, 1, 1, 1], [0], [0]>} : vector<16x8x128xbf16>, vector<16x8x128xbf16>, vector<16x8x8xf32> -> vector<16x8x8xf32>
    "tpu.trace_stop"() : () -> ()
    %cst_14 = arith.constant 0.0883883461 : f32
    %31 = vector.broadcast %cst_14 : f32 to vector<16x8x8xf32>
    %32 = arith.mulf %30, %31 : vector<16x8x8xf32>
    %cst_15 = arith.constant 1.000000e+00 : f32
    %33 = vector.broadcast %cst_15 : f32 to vector<16x8xf32>
    %34 = arith.subf %33, %29 : vector<16x8xf32>
    %35 = vector.shape_cast %34 : vector<16x8xf32> to vector<16x1x8xf32>
    %cst_16 = arith.constant -1.000000e+09 : f32
    %36 = vector.broadcast %cst_16 : f32 to vector<16x1x8xf32>
    %37 = arith.mulf %35, %36 : vector<16x1x8xf32>
    %38 = vector.broadcast %37 : vector<16x1x8xf32> to vector<16x8x8xf32>
    %39 = arith.addf %32, %38 : vector<16x8x8xf32>
    %cst_17 = arith.constant dense<0xFF800000> : vector<16x8xf32>
    %40 = vector.multi_reduction <maximumf>, %39, %cst_17 [2] : vector<16x8x8xf32> to vector<16x8xf32>
    %41 = vector.shape_cast %40 : vector<16x8xf32> to vector<16x8x1xf32>
    %42 = vector.broadcast %41 : vector<16x8x1xf32> to vector<16x8x8xf32>
    %43 = arith.subf %39, %42 : vector<16x8x8xf32>
    %44 = math.exp %43 : vector<16x8x8xf32>
    %cst_18 = arith.constant dense<0.000000e+00> : vector<16x8xf32>
    %45 = vector.multi_reduction <add>, %44, %cst_18 [2] : vector<16x8x8xf32> to vector<16x8xf32>
    %46 = vector.shape_cast %45 : vector<16x8xf32> to vector<16x8x1xf32>
    %47 = tpu.reciprocal %46 {approx = true} : vector<16x8x1xf32> -> vector<16x8x1xf32>
    %48 = vector.broadcast %47 : vector<16x8x1xf32> to vector<16x8x8xf32>
    %49 = arith.mulf %44, %48 : vector<16x8x8xf32>
    %50 = arith.truncf %49 : vector<16x8x8xf32> to vector<16x8x8xbf16>
    "tpu.trace_start"() <{level = 10 : i32, message = "bqk,bkd->bqd"}> : () -> ()
    %cst_19 = arith.constant dense<0.000000e+00> : vector<16x8x128xf32>
    %51 = tpu.matmul %50, %28, %cst_19 {dimension_numbers = #tpu.dot_dimension_numbers<[2], [1], [1], [2], [0, 0, 0, 1, 1, 2], [0], [0]>} : vector<16x8x8xbf16>, vector<16x8x128xbf16>, vector<16x8x128xf32> -> vector<16x8x128xf32>
    "tpu.trace_stop"() : () -> ()
    %52 = vector.shape_cast %51 : vector<16x8x128xf32> to vector<128x128xf32>
    %53 = arith.truncf %52 : vector<128x128xf32> to vector<128x128xbf16>
    %c0_20 = arith.constant 0 : index
    %c384 = arith.constant 384 : index
    %54 = vector.load %arg5[%c0_20, %c384] : memref<128x1280xbf16, #tpu.memory_space<vmem>>, vector<128x128xbf16>
    %cst_21 = arith.constant dense<0.000000e+00> : vector<128x128xf32>
    %55 = tpu.matmul %53, %54, %cst_21 {dimension_numbers = #tpu.dot_dimension_numbers<[1], [0], [0], [1], [0, 0, 1, 1], [], []>} : vector<128x128xbf16>, vector<128x128xbf16>, vector<128x128xf32> -> vector<128x128xf32>
    %c0_22 = arith.constant 0 : index
    %c384_23 = arith.constant 384 : index
    %56 = vector.load %arg9[%c0_22, %c384_23] : memref<1x3584xf32, #tpu.memory_space<vmem>>, vector<1x128xf32>
    %57 = vector.broadcast %56 : vector<1x128xf32> to vector<128x128xf32>
    %58 = arith.addf %55, %57 : vector<128x128xf32>
    %59 = arith.addf %15, %58 : vector<128x128xf32>
    %c0_24 = arith.constant 0 : index
    %c512 = arith.constant 512 : index
    %60 = vector.load %arg9[%c0_24, %c512] : memref<1x3584xf32, #tpu.memory_space<vmem>>, vector<1x128xf32>
    %c0_25 = arith.constant 0 : index
    %c640 = arith.constant 640 : index
    %61 = vector.load %arg9[%c0_25, %c640] : memref<1x3584xf32, #tpu.memory_space<vmem>>, vector<1x128xf32>
    %cst_26 = arith.constant dense<0.000000e+00> : vector<128xf32>
    %62 = vector.multi_reduction <add>, %59, %cst_26 [1] : vector<128x128xf32> to vector<128xf32>
    %63 = vector.shape_cast %62 : vector<128xf32> to vector<128x1xf32>
    %cst_27 = arith.constant 1.280000e+02 : f32
    %64 = vector.broadcast %cst_27 : f32 to vector<128x1xf32>
    %65 = arith.divf %63, %64 : vector<128x1xf32>
    %66 = vector.broadcast %65 : vector<128x1xf32> to vector<128x128xf32>
    %67 = arith.subf %59, %66 : vector<128x128xf32>
    %68 = arith.mulf %67, %67 : vector<128x128xf32>
    %cst_28 = arith.constant dense<0.000000e+00> : vector<128xf32>
    %69 = vector.multi_reduction <add>, %68, %cst_28 [1] : vector<128x128xf32> to vector<128xf32>
    %70 = vector.shape_cast %69 : vector<128xf32> to vector<128x1xf32>
    %cst_29 = arith.constant 1.280000e+02 : f32
    %71 = vector.broadcast %cst_29 : f32 to vector<128x1xf32>
    %72 = arith.divf %70, %71 : vector<128x1xf32>
    %cst_30 = arith.constant 9.99999974E-6 : f32
    %73 = vector.broadcast %cst_30 : f32 to vector<128x1xf32>
    %74 = arith.addf %72, %73 : vector<128x1xf32>
    %75 = math.rsqrt %74 : vector<128x1xf32>
    %76 = vector.broadcast %75 : vector<128x1xf32> to vector<128x128xf32>
    %77 = arith.mulf %67, %76 : vector<128x128xf32>
    %78 = vector.broadcast %60 : vector<1x128xf32> to vector<128x128xf32>
    %79 = arith.mulf %77, %78 : vector<128x128xf32>
    %80 = vector.broadcast %61 : vector<1x128xf32> to vector<128x128xf32>
    %81 = arith.addf %79, %80 : vector<128x128xf32>
    %82 = arith.truncf %81 : vector<128x128xf32> to vector<128x128xbf16>
    %c0_31 = arith.constant 0 : index
    %c512_32 = arith.constant 512 : index
    %83 = vector.load %arg5[%c0_31, %c512_32] : memref<128x1280xbf16, #tpu.memory_space<vmem>>, vector<128x256xbf16>
    %cst_33 = arith.constant dense<0.000000e+00> : vector<128x256xf32>
    %84 = tpu.matmul %82, %83, %cst_33 {dimension_numbers = #tpu.dot_dimension_numbers<[1], [0], [0], [1], [0, 0, 1, 1], [], []>} : vector<128x128xbf16>, vector<128x256xbf16>, vector<128x256xf32> -> vector<128x256xf32>
    %c0_34 = arith.constant 0 : index
    %c768 = arith.constant 768 : index
    %85 = vector.load %arg9[%c0_34, %c768] : memref<1x3584xf32, #tpu.memory_space<vmem>>, vector<1x256xf32>
    %86 = vector.broadcast %85 : vector<1x256xf32> to vector<128x256xf32>
    %87 = arith.addf %84, %86 : vector<128x256xf32>
    %cst_35 = arith.constant 0.000000e+00 : f32
    %88 = vector.broadcast %cst_35 : f32 to vector<128x256xf32>
    %89 = arith.maximumf %87, %88 : vector<128x256xf32>
    %90 = arith.truncf %89 : vector<128x256xf32> to vector<128x256xbf16>
    %c0_36 = arith.constant 0 : index
    %c0_37 = arith.constant 0 : index
    %91 = vector.load %arg6[%c0_36, %c0_37] : memref<256x128xbf16, #tpu.memory_space<vmem>>, vector<256x128xbf16>
    %cst_38 = arith.constant dense<0.000000e+00> : vector<128x128xf32>
    %92 = tpu.matmul %90, %91, %cst_38 {dimension_numbers = #tpu.dot_dimension_numbers<[1], [0], [0], [1], [0, 0, 1, 1], [], []>} : vector<128x256xbf16>, vector<256x128xbf16>, vector<128x128xf32> -> vector<128x128xf32>
    %c0_39 = arith.constant 0 : index
    %c1024 = arith.constant 1024 : index
    %93 = vector.load %arg9[%c0_39, %c1024] : memref<1x3584xf32, #tpu.memory_space<vmem>>, vector<1x128xf32>
    %94 = vector.broadcast %93 : vector<1x128xf32> to vector<128x128xf32>
    %95 = arith.addf %92, %94 : vector<128x128xf32>
    %96 = arith.addf %81, %95 : vector<128x128xf32>
    %c0_40 = arith.constant 0 : index
    %c1152 = arith.constant 1152 : index
    %97 = vector.load %arg9[%c0_40, %c1152] : memref<1x3584xf32, #tpu.memory_space<vmem>>, vector<1x128xf32>
    %c0_41 = arith.constant 0 : index
    %c1280 = arith.constant 1280 : index
    %98 = vector.load %arg9[%c0_41, %c1280] : memref<1x3584xf32, #tpu.memory_space<vmem>>, vector<1x128xf32>
    %cst_42 = arith.constant dense<0.000000e+00> : vector<128xf32>
    %99 = vector.multi_reduction <add>, %96, %cst_42 [1] : vector<128x128xf32> to vector<128xf32>
    %100 = vector.shape_cast %99 : vector<128xf32> to vector<128x1xf32>
    %cst_43 = arith.constant 1.280000e+02 : f32
    %101 = vector.broadcast %cst_43 : f32 to vector<128x1xf32>
    %102 = arith.divf %100, %101 : vector<128x1xf32>
    %103 = vector.broadcast %102 : vector<128x1xf32> to vector<128x128xf32>
    %104 = arith.subf %96, %103 : vector<128x128xf32>
    %105 = arith.mulf %104, %104 : vector<128x128xf32>
    %cst_44 = arith.constant dense<0.000000e+00> : vector<128xf32>
    %106 = vector.multi_reduction <add>, %105, %cst_44 [1] : vector<128x128xf32> to vector<128xf32>
    %107 = vector.shape_cast %106 : vector<128xf32> to vector<128x1xf32>
    %cst_45 = arith.constant 1.280000e+02 : f32
    %108 = vector.broadcast %cst_45 : f32 to vector<128x1xf32>
    %109 = arith.divf %107, %108 : vector<128x1xf32>
    %cst_46 = arith.constant 9.99999974E-6 : f32
    %110 = vector.broadcast %cst_46 : f32 to vector<128x1xf32>
    %111 = arith.addf %109, %110 : vector<128x1xf32>
    %112 = math.rsqrt %111 : vector<128x1xf32>
    %113 = vector.broadcast %112 : vector<128x1xf32> to vector<128x128xf32>
    %114 = arith.mulf %104, %113 : vector<128x128xf32>
    %115 = vector.broadcast %97 : vector<1x128xf32> to vector<128x128xf32>
    %116 = arith.mulf %114, %115 : vector<128x128xf32>
    %117 = vector.broadcast %98 : vector<1x128xf32> to vector<128x128xf32>
    %118 = arith.addf %116, %117 : vector<128x128xf32>
    %119 = vector.shape_cast %118 : vector<128x128xf32> to vector<16x8x128xf32>
    %120 = vector.extract_strided_slice %119 {offsets = [0, 0, 0], sizes = [16, 1, 128], strides = [1, 1, 1]} : vector<16x8x128xf32> to vector<16x1x128xf32>
    %121 = vector.shape_cast %120 : vector<16x1x128xf32> to vector<16x128xf32>
    %122 = arith.truncf %121 : vector<16x128xf32> to vector<16x128xbf16>
    %c0_47 = arith.constant 0 : index
    %c768_48 = arith.constant 768 : index
    %123 = vector.load %arg5[%c0_47, %c768_48] : memref<128x1280xbf16, #tpu.memory_space<vmem>>, vector<128x512xbf16>
    %cst_49 = arith.constant dense<0.000000e+00> : vector<16x512xf32>
    %124 = tpu.matmul %122, %123, %cst_49 {dimension_numbers = #tpu.dot_dimension_numbers<[1], [0], [0], [1], [0, 0, 1, 1], [], []>} : vector<16x128xbf16>, vector<128x512xbf16>, vector<16x512xf32> -> vector<16x512xf32>
    %c0_50 = arith.constant 0 : index
    %c1408 = arith.constant 1408 : index
    %125 = vector.load %arg9[%c0_50, %c1408] : memref<1x3584xf32, #tpu.memory_space<vmem>>, vector<1x512xf32>
    %126 = vector.broadcast %125 : vector<1x512xf32> to vector<16x512xf32>
    %127 = arith.addf %124, %126 : vector<16x512xf32>
    %cst_51 = arith.constant 0.000000e+00 : f32
    %128 = vector.broadcast %cst_51 : f32 to vector<16x512xf32>
    %129 = arith.maximumf %127, %128 : vector<16x512xf32>
    %130 = arith.truncf %129 : vector<16x512xf32> to vector<16x512xbf16>
    %c0_52 = arith.constant 0 : index
    %c0_53 = arith.constant 0 : index
    %131 = vector.load %arg8[%c0_52, %c0_53] : memref<512x640xbf16, #tpu.memory_space<vmem>>, vector<512x256xbf16>
    %cst_54 = arith.constant dense<0.000000e+00> : vector<16x256xf32>
    %132 = tpu.matmul %130, %131, %cst_54 {dimension_numbers = #tpu.dot_dimension_numbers<[1], [0], [0], [1], [0, 0, 1, 1], [], []>} : vector<16x512xbf16>, vector<512x256xbf16>, vector<16x256xf32> -> vector<16x256xf32>
    %c0_55 = arith.constant 0 : index
    %c1920 = arith.constant 1920 : index
    %133 = vector.load %arg9[%c0_55, %c1920] : memref<1x3584xf32, #tpu.memory_space<vmem>>, vector<1x256xf32>
    %134 = vector.broadcast %133 : vector<1x256xf32> to vector<16x256xf32>
    %135 = arith.addf %132, %134 : vector<16x256xf32>
    %c0_56 = arith.constant 0 : index
    %c2176 = arith.constant 2176 : index
    %136 = vector.load %arg9[%c0_56, %c2176] : memref<1x3584xf32, #tpu.memory_space<vmem>>, vector<1x256xf32>
    %c0_57 = arith.constant 0 : index
    %c2432 = arith.constant 2432 : index
    %137 = vector.load %arg9[%c0_57, %c2432] : memref<1x3584xf32, #tpu.memory_space<vmem>>, vector<1x256xf32>
    %cst_58 = arith.constant dense<0.000000e+00> : vector<16xf32>
    %138 = vector.multi_reduction <add>, %135, %cst_58 [1] : vector<16x256xf32> to vector<16xf32>
    %139 = vector.shape_cast %138 : vector<16xf32> to vector<16x1xf32>
    %cst_59 = arith.constant 2.560000e+02 : f32
    %140 = vector.broadcast %cst_59 : f32 to vector<16x1xf32>
    %141 = arith.divf %139, %140 : vector<16x1xf32>
    %142 = vector.broadcast %141 : vector<16x1xf32> to vector<16x256xf32>
    %143 = arith.subf %135, %142 : vector<16x256xf32>
    %144 = arith.mulf %143, %143 : vector<16x256xf32>
    %cst_60 = arith.constant dense<0.000000e+00> : vector<16xf32>
    %145 = vector.multi_reduction <add>, %144, %cst_60 [1] : vector<16x256xf32> to vector<16xf32>
    %146 = vector.shape_cast %145 : vector<16xf32> to vector<16x1xf32>
    %cst_61 = arith.constant 2.560000e+02 : f32
    %147 = vector.broadcast %cst_61 : f32 to vector<16x1xf32>
    %148 = arith.divf %146, %147 : vector<16x1xf32>
    %cst_62 = arith.constant 9.99999974E-6 : f32
    %149 = vector.broadcast %cst_62 : f32 to vector<16x1xf32>
    %150 = arith.addf %148, %149 : vector<16x1xf32>
    %151 = math.rsqrt %150 : vector<16x1xf32>
    %152 = vector.broadcast %151 : vector<16x1xf32> to vector<16x256xf32>
    %153 = arith.mulf %143, %152 : vector<16x256xf32>
    %154 = vector.broadcast %136 : vector<1x256xf32> to vector<16x256xf32>
    %155 = arith.mulf %153, %154 : vector<16x256xf32>
    %156 = vector.broadcast %137 : vector<1x256xf32> to vector<16x256xf32>
    %157 = arith.addf %155, %156 : vector<16x256xf32>
    %c0_63 = arith.constant 0 : index
    %c0_64 = arith.constant 0 : index
    %158 = vector.load %arg10[%c0_63, %c0_64] : memref<16x256xf32, #tpu.memory_space<vmem>>, vector<16x256xf32>
    tpu.vector_store %arg10[%c0_63, %c0_64], %157 {strides = array<i32>} : memref<16x256xf32, #tpu.memory_space<vmem>>, vector<16x256xf32>,
    %159 = arith.truncf %157 : vector<16x256xf32> to vector<16x256xbf16>
    %c0_65 = arith.constant 0 : index
    %c0_66 = arith.constant 0 : index
    %160 = vector.load %arg7[%c0_65, %c0_66] : memref<256x512xbf16, #tpu.memory_space<vmem>>, vector<256x512xbf16>
    %cst_67 = arith.constant dense<0.000000e+00> : vector<16x512xf32>
    %161 = tpu.matmul %159, %160, %cst_67 {dimension_numbers = #tpu.dot_dimension_numbers<[1], [0], [0], [1], [0, 0, 1, 1], [], []>} : vector<16x256xbf16>, vector<256x512xbf16>, vector<16x512xf32> -> vector<16x512xf32>
    %c0_68 = arith.constant 0 : index
    %c2688 = arith.constant 2688 : index
    %162 = vector.load %arg9[%c0_68, %c2688] : memref<1x3584xf32, #tpu.memory_space<vmem>>, vector<1x512xf32>
    %163 = vector.broadcast %162 : vector<1x512xf32> to vector<16x512xf32>
    %164 = arith.addf %161, %163 : vector<16x512xf32>
    %cst_69 = arith.constant 0.000000e+00 : f32
    %165 = vector.broadcast %cst_69 : f32 to vector<16x512xf32>
    %166 = arith.maximumf %164, %165 : vector<16x512xf32>
    %167 = arith.truncf %166 : vector<16x512xf32> to vector<16x512xbf16>
    %c0_70 = arith.constant 0 : index
    %c256 = arith.constant 256 : index
    %168 = vector.load %arg8[%c0_70, %c256] : memref<512x640xbf16, #tpu.memory_space<vmem>>, vector<512x256xbf16>
    %cst_71 = arith.constant dense<0.000000e+00> : vector<16x256xf32>
    %169 = tpu.matmul %167, %168, %cst_71 {dimension_numbers = #tpu.dot_dimension_numbers<[1], [0], [0], [1], [0, 0, 1, 1], [], []>} : vector<16x512xbf16>, vector<512x256xbf16>, vector<16x256xf32> -> vector<16x256xf32>
    %c0_72 = arith.constant 0 : index
    %c3200 = arith.constant 3200 : index
    %170 = vector.load %arg9[%c0_72, %c3200] : memref<1x3584xf32, #tpu.memory_space<vmem>>, vector<1x256xf32>
    %171 = vector.broadcast %170 : vector<1x256xf32> to vector<16x256xf32>
    %172 = arith.addf %169, %171 : vector<16x256xf32>
    %cst_73 = arith.constant 0.000000e+00 : f32
    %173 = vector.broadcast %cst_73 : f32 to vector<16x256xf32>
    %174 = arith.maximumf %172, %173 : vector<16x256xf32>
    %c0_74 = arith.constant 0 : index
    %c512_75 = arith.constant 512 : index
    %175 = vector.load %arg8[%c0_74, %c512_75] : memref<512x640xbf16, #tpu.memory_space<vmem>>, vector<512x128xbf16>
    %176 = arith.truncf %174 : vector<16x256xf32> to vector<16x256xbf16>
    %177 = vector.extract_strided_slice %175 {offsets = [0, 0], sizes = [256, 128], strides = [1, 1]} : vector<512x128xbf16> to vector<256x128xbf16>
    %cst_76 = arith.constant dense<0.000000e+00> : vector<16x128xf32>
    %178 = tpu.matmul %176, %177, %cst_76 {dimension_numbers = #tpu.dot_dimension_numbers<[1], [0], [0], [1], [0, 0, 1, 1], [], []>} : vector<16x256xbf16>, vector<256x128xbf16>, vector<16x128xf32> -> vector<16x128xf32>
    %179 = vector.extract_strided_slice %175 {offsets = [256, 0], sizes = [256, 128], strides = [1, 1]} : vector<512x128xbf16> to vector<256x128xbf16>
    %cst_77 = arith.constant dense<0.000000e+00> : vector<16x128xf32>
    %180 = tpu.matmul %159, %179, %cst_77 {dimension_numbers = #tpu.dot_dimension_numbers<[1], [0], [0], [1], [0, 0, 1, 1], [], []>} : vector<16x256xbf16>, vector<256x128xbf16>, vector<16x128xf32> -> vector<16x128xf32>
    %181 = arith.addf %178, %180 : vector<16x128xf32>
    %c0_78 = arith.constant 0 : index
    %c3456 = arith.constant 3456 : index
    %182 = vector.load %arg9[%c0_78, %c3456] : memref<1x3584xf32, #tpu.memory_space<vmem>>, vector<1x128xf32>
    %183 = vector.broadcast %182 : vector<1x128xf32> to vector<16x128xf32>
    %184 = arith.addf %181, %183 : vector<16x128xf32>
    %c0_79 = arith.constant 0 : index
    %c0_80 = arith.constant 0 : index
    %185 = vector.load %arg11[%c0_79, %c0_80] : memref<16x128xf32, #tpu.memory_space<vmem>>, vector<16x128xf32>
    tpu.vector_store %arg11[%c0_79, %c0_80], %184 {strides = array<i32>} : memref<16x128xf32, #tpu.memory_space<vmem>>, vector<16x128xf32>,
    return
  }
  func.func @transform_0(%arg0: i32) -> (i32, i32, i32) {
    %c0_i32 = arith.constant 0 : i32
    %c0_i32_0 = arith.constant 0 : i32
    %c0_i32_1 = arith.constant 0 : i32
    return %arg0, %c0_i32, %c0_i32_0 : i32, i32, i32
  }
  func.func @transform_1(%arg0: i32) -> (i32, i32) {
    %c0_i32 = arith.constant 0 : i32
    %c0_i32_0 = arith.constant 0 : i32
    return %arg0, %c0_i32 : i32, i32
  }
  func.func @transform_2(%arg0: i32) -> (i32, i32) {
    %c0_i32 = arith.constant 0 : i32
    %c0_i32_0 = arith.constant 0 : i32
    %c0_i32_1 = arith.constant 0 : i32
    return %c0_i32, %c0_i32_0 : i32, i32
  }
  func.func @transform_3(%arg0: i32) -> (i32, i32) {
    %c0_i32 = arith.constant 0 : i32
    %c0_i32_0 = arith.constant 0 : i32
    %c0_i32_1 = arith.constant 0 : i32
    return %c0_i32, %c0_i32_0 : i32, i32
  }
  func.func @transform_4(%arg0: i32) -> (i32, i32) {
    %c0_i32 = arith.constant 0 : i32
    %c0_i32_0 = arith.constant 0 : i32
    %c0_i32_1 = arith.constant 0 : i32
    return %c0_i32, %c0_i32_0 : i32, i32
  }
  func.func @transform_5(%arg0: i32) -> (i32, i32) {
    %c0_i32 = arith.constant 0 : i32
    %c0_i32_0 = arith.constant 0 : i32
    %c0_i32_1 = arith.constant 0 : i32
    return %c0_i32, %c0_i32_0 : i32, i32
  }
  func.func @transform_6(%arg0: i32) -> (i32, i32) {
    %c0_i32 = arith.constant 0 : i32
    %c0_i32_0 = arith.constant 0 : i32
    %c0_i32_1 = arith.constant 0 : i32
    return %c0_i32, %c0_i32_0 : i32, i32
  }
  func.func @transform_7(%arg0: i32) -> (i32, i32) {
    %c0_i32 = arith.constant 0 : i32
    %c0_i32_0 = arith.constant 0 : i32
    %c0_i32_1 = arith.constant 0 : i32
    return %c0_i32, %c0_i32_0 : i32, i32
  }
  func.func @transform_8(%arg0: i32) -> (i32, i32) {
    %c0_i32 = arith.constant 0 : i32
    %c0_i32_0 = arith.constant 0 : i32
    %c0_i32_1 = arith.constant 0 : i32
    return %c0_i32, %c0_i32_0 : i32, i32
  }
  func.func @transform_9(%arg0: i32) -> (i32, i32) {
    %c0_i32 = arith.constant 0 : i32
    %c0_i32_0 = arith.constant 0 : i32
    return %arg0, %c0_i32 : i32, i32
  }
  func.func @transform_10(%arg0: i32) -> (i32, i32) {
    %c0_i32 = arith.constant 0 : i32
    %c0_i32_0 = arith.constant 0 : i32
    return %arg0, %c0_i32 : i32, i32
  }
}

</mosaic_0001>

<llo_original>
// kernel: tpu_custom_call.1
$region0: #{tpu_custom_call.1}
  #allocation0 [shape = 'u32[]', space=smem, size = 0x4, offset = 0x4, fixed_abs, tag = 'smem constant byte address 0x4 - core index']
  #allocation1 [shape = 'u32[144,128]{1,0:T(1,128)}', space=vmem, size = 0x12000, scoped, tag = 'internal scratch']
  %s0 = inlined_call_operand.vmem [shape: s32[16,8,1], index: 0, kind: input, shape index: {}]
  %s1 = inlined_call_operand.vmem [shape: f32[16,8], index: 1, kind: input, shape index: {}]
  %s2 = inlined_call_operand.vmem [shape: bf16[64,128], index: 2, kind: input, shape index: {}]
  %s3 = inlined_call_operand.hbm [shape: f32[8,128], index: 3, kind: input, shape index: {}]
  %s4 = inlined_call_operand.hbm [shape: bf16[128,1280], index: 4, kind: input, shape index: {}]
  %s5 = inlined_call_operand.vmem [shape: bf16[256,128], index: 5, kind: input, shape index: {}]
  %s6 = inlined_call_operand.hbm [shape: bf16[256,512], index: 6, kind: input, shape index: {}]
  %s7 = inlined_call_operand.hbm [shape: bf16[512,640], index: 7, kind: input, shape index: {}]
  %s8 = inlined_call_operand.vmem [shape: f32[1,3584], index: 8, kind: input, shape index: {}]
  %s9 = inlined_call_operand.hbm [shape: f32[16,256], index: 9, kind: output, shape index: {0}]
  %s10 = inlined_call_operand.hbm [shape: f32[16,128], index: 10, kind: output, shape index: {1}]
  %11 = xla_tuple %s9, %s10
  %s12 = sld [smem:[#allocation0]]
  $region70: #{tpu_custom_call.1} parent=0
    _
  %s14 = ssub.s32 1, %s12
  %s15 = scalar_select 0, %s14, %s12
  $region1: #{tpu_custom_call.1} parent=0
    #allocation2 [shape = 'u8[4096]{0}', space=vmem, size = 0x1000, scoped, tag = 'input window, operand 3, single buffered']
    #allocation3 [shape = 's32[1]{0}', space=sflag, size = 0x4, scoped, tag = 'scoped memory for tpu_custom_call.1']
    #allocation4 [shape = 's32[1]{0}', space=sflag, size = 0x4, scoped, tag = 'scoped memory for tpu_custom_call.1']
    #allocation5 [shape = 'u8[327680]{0}', space=vmem, size = 0x50000, scoped, tag = 'input window, operand 4, single buffered']
    #allocation6 [shape = 's32[1]{0}', space=sflag, size = 0x4, scoped, tag = 'scoped memory for tpu_custom_call.1']
    #allocation7 [shape = 'u8[262144]{0}', space=vmem, size = 0x40000, scoped, tag = 'input window, operand 6, single buffered']
    #allocation8 [shape = 'u8[655360]{0}', space=vmem, size = 0xa0000, scoped, tag = 'input window, operand 7, single buffered']
    #allocation9 [shape = 's32[1]{0}', space=sflag, size = 0x4, scoped, tag = 'scoped memory for tpu_custom_call.1']
    #allocation10 [shape = 'u8[16384]{0}', space=vmem, size = 0x4000, scoped, tag = 'output window, operand 0, single buffered']
    #allocation11 [shape = 'u8[8192]{0}', space=vmem, size = 0x2000, scoped, tag = 'output window, operand 1, single buffered']
    #allocation12 [shape = 's32[1]{0}', space=sflag, size = 0x4, scoped, tag = 'scoped memory for tpu_custom_call.1']
    %16 = vsyncpa [#allocation3], 0
    %17 = vsyncpa [#allocation6], 0
    %18 = vsyncpa [#allocation9], 0
    %19 = vsyncpa [#allocation4], 0
    %20 = vsyncpa [#allocation12], 0
    // Predicated region
    $region2: #{tpu_custom_call.1} parent=1 // pred_check
      _
    $region3: #{tpu_custom_call.1} parent=1 // pred_check_branch
      %22 = sbr.rel (0) target = $region5
    $region4: #{tpu_custom_call.1} parent=1 // pred_region
      _
    $region5: #{tpu_custom_call.1} parent=1 // pred_fallthru
      _
    // Predicated region
    $region6: #{tpu_custom_call.1} parent=1 // pred_check
      _
    $region7: #{tpu_custom_call.1} parent=1 // pred_check_branch
      %24 = sbr.rel (0) target = $region9
    $region8: #{tpu_custom_call.1} parent=1 // pred_region
      _
    $region9: #{tpu_custom_call.1} parent=1 // pred_fallthru
      _
    // Predicated region
    $region10: #{tpu_custom_call.1} parent=1 // pred_check
      _
    $region11: #{tpu_custom_call.1} parent=1 // pred_check_branch
      %26 = sbr.rel (0) target = $region13
    $region12: #{tpu_custom_call.1} parent=1 // pred_region
      _
    $region13: #{tpu_custom_call.1} parent=1 // pred_fallthru
      _
    // Predicated region
    $region14: #{tpu_custom_call.1} parent=1 // pred_check
      _
    $region15: #{tpu_custom_call.1} parent=1 // pred_check_branch
      %28 = sbr.rel (0) target = $region17
    $region16: #{tpu_custom_call.1} parent=1 // pred_region
      %s30 = ssub.s32 128, 128
      %31 = vsyncadd [#allocation3], %s30
      %s33 = sshll.u32 [#allocation2], 4
      %s34 = int_to_ptr.vmem [resolvable:$true] %s33
      %36 = dma.hbm_to_vmem [thread:$0]  %s3, 128, %s34, [#allocation3]
    $region17: #{tpu_custom_call.1} parent=1 // pred_fallthru
      _
    // Predicated region
    $region18: #{tpu_custom_call.1} parent=1 // pred_check
      _
    $region19: #{tpu_custom_call.1} parent=1 // pred_check_branch
      %38 = sbr.rel (0) target = $region21
    $region20: #{tpu_custom_call.1} parent=1 // pred_region
      %s40 = ssub.s32 10240, 10240
      %41 = vsyncadd [#allocation6], %s40
      %s42 = sshll.u32 [#allocation5], 4
      %s43 = int_to_ptr.vmem [resolvable:$true] %s42
      %48 = dma.hbm_to_vmem [thread:$0]  %s4, 10240, %s43, [#allocation6], 640, 640, 40
    $region21: #{tpu_custom_call.1} parent=1 // pred_fallthru
      _
    // Predicated region
    $region22: #{tpu_custom_call.1} parent=1 // pred_check
      _
    $region23: #{tpu_custom_call.1} parent=1 // pred_check_branch
      %50 = sbr.rel (0) target = $region25
    $region24: #{tpu_custom_call.1} parent=1 // pred_region
      _
    $region25: #{tpu_custom_call.1} parent=1 // pred_fallthru
      _
    // Predicated region
    $region26: #{tpu_custom_call.1} parent=1 // pred_check
      _
    $region27: #{tpu_custom_call.1} parent=1 // pred_check_branch
      %52 = sbr.rel (0) target = $region29
    $region28: #{tpu_custom_call.1} parent=1 // pred_region
      %s54 = ssub.s32 8192, 8192
      %55 = vsyncadd [#allocation6], %s54
      %s56 = sshll.u32 [#allocation7], 4
      %s57 = int_to_ptr.vmem [resolvable:$true] %s56
      %62 = dma.hbm_to_vmem [thread:$0]  %s6, 8192, %s57, [#allocation6], 256, 256, 16
    $region29: #{tpu_custom_call.1} parent=1 // pred_fallthru
      _
    // Predicated region
    $region30: #{tpu_custom_call.1} parent=1 // pred_check
      _
    $region31: #{tpu_custom_call.1} parent=1 // pred_check_branch
      %64 = sbr.rel (0) target = $region33
    $region32: #{tpu_custom_call.1} parent=1 // pred_region
      %s66 = ssub.s32 20480, 20480
      %67 = vsyncadd [#allocation9], %s66
      %s68 = sshll.u32 [#allocation8], 4
      %s69 = int_to_ptr.vmem [resolvable:$true] %s68
      %74 = dma.hbm_to_vmem [thread:$0]  %s7, 20480, %s69, [#allocation9], 320, 320, 20
    $region33: #{tpu_custom_call.1} parent=1 // pred_fallthru
      _
    // Predicated region
    $region34: #{tpu_custom_call.1} parent=1 // pred_check
      _
    $region35: #{tpu_custom_call.1} parent=1 // pred_check_branch
      %76 = sbr.rel (0) target = $region37
    $region36: #{tpu_custom_call.1} parent=1 // pred_region
      _
    $region37: #{tpu_custom_call.1} parent=1 // pred_fallthru
      _
    // Predicated region
    $region38: #{tpu_custom_call.1} parent=1 // pred_check
      _
    $region39: #{tpu_custom_call.1} parent=1 // pred_check_branch
      %78 = sbr.rel (0) target = $region41
    $region40: #{tpu_custom_call.1} parent=1 // pred_region
      %79 = dma.done [#allocation3], 128
    $region41: #{tpu_custom_call.1} parent=1 // pred_fallthru
      _
    // Predicated region
    $region42: #{tpu_custom_call.1} parent=1 // pred_check
      _
    $region43: #{tpu_custom_call.1} parent=1 // pred_check_branch
      %81 = sbr.rel (0) target = $region45
    $region44: #{tpu_custom_call.1} parent=1 // pred_region
      %82 = dma.done [#allocation6], 10240
    $region45: #{tpu_custom_call.1} parent=1 // pred_fallthru
      _
    // Predicated region
    $region46: #{tpu_custom_call.1} parent=1 // pred_check
      _
    $region47: #{tpu_custom_call.1} parent=1 // pred_check_branch
      %84 = sbr.rel (0) target = $region49
    $region48: #{tpu_custom_call.1} parent=1 // pred_region
      %85 = dma.done [#allocation6], 8192
    $region49: #{tpu_custom_call.1} parent=1 // pred_fallthru
      _
    // Predicated region
    $region50: #{tpu_custom_call.1} parent=1 // pred_check
      _
    $region51: #{tpu_custom_call.1} parent=1 // pred_check_branch
      %87 = sbr.rel (0) target = $region53
    $region52: #{tpu_custom_call.1} parent=1 // pred_region
      %88 = dma.done [#allocation9], 20480
    $region53: #{tpu_custom_call.1} parent=1 // pred_fallthru
      _
    %v90 = vld [vmem:[%s0] sm:$0xff]
    %v91 = vld [vmem:[%s0 + $0x8] sm:$0xff]
    %v92 = vld [vmem:[%s0 + $0x10] sm:$0xff]
    %v93 = vld [vmem:[%s0 + $0x18] sm:$0xff]
    %v94 = vld [vmem:[%s0 + $0x20] sm:$0xff]
    %v95 = vld [vmem:[%s0 + $0x28] sm:$0xff]
    %v96 = vld [vmem:[%s0 + $0x30] sm:$0xff]
    %v97 = vld [vmem:[%s0 + $0x38] sm:$0xff]
    %v98 = vld [vmem:[%s0 + $0x40] sm:$0xff]
    %v99 = vld [vmem:[%s0 + $0x48] sm:$0xff]
    %v100 = vld [vmem:[%s0 + $0x50] sm:$0xff]
    %v101 = vld [vmem:[%s0 + $0x58] sm:$0xff]
    %v102 = vld [vmem:[%s0 + $0x60] sm:$0xff]
    %v103 = vld [vmem:[%s0 + $0x68] sm:$0xff]
    %v104 = vld [vmem:[%s0 + $0x70] sm:$0xff]
    %v105 = vld [vmem:[%s0 + $0x78] sm:$0xff]
    %v106 = vlaneseq
    %v107 = vand.u32 %v106, 127
    %108 = vset.pattern.permute.xlu0 0
    %109 = vperm.xlu0 %108, %v90
    %v110 = vpop.permute.xlu0 %109
    %111 = vset.pattern.permute.xlu0 0
    %112 = vperm.xlu0 %111, %v91
    %v113 = vpop.permute.xlu0 %112
    %114 = vset.pattern.permute.xlu0 0
    %115 = vperm.xlu0 %114, %v92
    %v116 = vpop.permute.xlu0 %115
    %117 = vset.pattern.permute.xlu0 0
    %118 = vperm.xlu0 %117, %v93
    %v119 = vpop.permute.xlu0 %118
    %120 = vset.pattern.permute.xlu0 0
    %121 = vperm.xlu0 %120, %v94
    %v122 = vpop.permute.xlu0 %121
    %123 = vset.pattern.permute.xlu0 0
    %124 = vperm.xlu0 %123, %v95
    %v125 = vpop.permute.xlu0 %124
    %126 = vset.pattern.permute.xlu0 0
    %127 = vperm.xlu0 %126, %v96
    %v128 = vpop.permute.xlu0 %127
    %129 = vset.pattern.permute.xlu0 0
    %130 = vperm.xlu0 %129, %v97
    %v131 = vpop.permute.xlu0 %130
    %132 = vset.pattern.permute.xlu0 0
    %133 = vperm.xlu0 %132, %v98
    %v134 = vpop.permute.xlu0 %133
    %135 = vset.pattern.permute.xlu0 0
    %136 = vperm.xlu0 %135, %v99
    %v137 = vpop.permute.xlu0 %136
    %138 = vset.pattern.permute.xlu0 0
    %139 = vperm.xlu0 %138, %v100
    %v140 = vpop.permute.xlu0 %139
    %141 = vset.pattern.permute.xlu0 0
    %142 = vperm.xlu0 %141, %v101
    %v143 = vpop.permute.xlu0 %142
    %144 = vset.pattern.permute.xlu0 0
    %145 = vperm.xlu0 %144, %v102
    %v146 = vpop.permute.xlu0 %145
    %147 = vset.pattern.permute.xlu0 0
    %148 = vperm.xlu0 %147, %v103
    %v149 = vpop.permute.xlu0 %148
    %150 = vset.pattern.permute.xlu0 0
    %151 = vperm.xlu0 %150, %v104
    %v152 = vpop.permute.xlu0 %151
    %153 = vset.pattern.permute.xlu0 0
    %154 = vperm.xlu0 %153, %v105
    %v155 = vpop.permute.xlu0 %154
    %vm156 = vcmp.eq.s32.totalorder %v110, %v107
    %vm157 = vcmp.eq.s32.totalorder %v113, %v107
    %vm158 = vcmp.eq.s32.totalorder %v116, %v107
    %vm159 = vcmp.eq.s32.totalorder %v119, %v107
    %vm160 = vcmp.eq.s32.totalorder %v122, %v107
    %vm161 = vcmp.eq.s32.totalorder %v125, %v107
    %vm162 = vcmp.eq.s32.totalorder %v128, %v107
    %vm163 = vcmp.eq.s32.totalorder %v131, %v107
    %vm164 = vcmp.eq.s32.totalorder %v134, %v107
    %vm165 = vcmp.eq.s32.totalorder %v137, %v107
    %vm166 = vcmp.eq.s32.totalorder %v140, %v107
    %vm167 = vcmp.eq.s32.totalorder %v143, %v107
    %vm168 = vcmp.eq.s32.totalorder %v146, %v107
    %vm169 = vcmp.eq.s32.totalorder %v149, %v107
    %vm170 = vcmp.eq.s32.totalorder %v152, %v107
    %vm171 = vcmp.eq.s32.totalorder %v155, %v107
    %v172 = vsel %vm156, 1, 0
    %v173 = vsel %vm157, 1, 0
    %v174 = vsel %vm158, 1, 0
    %v175 = vsel %vm159, 1, 0
    %v176 = vsel %vm160, 1, 0
    %v177 = vsel %vm161, 1, 0
    %v178 = vsel %vm162, 1, 0
    %v179 = vsel %vm163, 1, 0
    %v180 = vsel %vm164, 1, 0
    %v181 = vsel %vm165, 1, 0
    %v182 = vsel %vm166, 1, 0
    %v183 = vsel %vm167, 1, 0
    %v184 = vsel %vm168, 1, 0
    %v185 = vsel %vm169, 1, 0
    %v186 = vsel %vm170, 1, 0
    %v187 = vsel %vm171, 1, 0
    %v188 = vcvt.s32.f32 %v172
    %v189 = vcvt.s32.f32 %v173
    %v190 = vcvt.s32.f32 %v174
    %v191 = vcvt.s32.f32 %v175
    %v192 = vcvt.s32.f32 %v176
    %v193 = vcvt.s32.f32 %v177
    %v194 = vcvt.s32.f32 %v178
    %v195 = vcvt.s32.f32 %v179
    %v196 = vcvt.s32.f32 %v180
    %v197 = vcvt.s32.f32 %v181
    %v198 = vcvt.s32.f32 %v182
    %v199 = vcvt.s32.f32 %v183
    %v200 = vcvt.s32.f32 %v184
    %v201 = vcvt.s32.f32 %v185
    %v202 = vcvt.s32.f32 %v186
    %v203 = vcvt.s32.f32 %v187
    %v204 = vpack.c.bf16 %v188, %v188
    %v205 = vpack.c.bf16 %v189, %v189
    %v206 = vpack.c.bf16 %v190, %v190
    %v207 = vpack.c.bf16 %v191, %v191
    %v208 = vpack.c.bf16 %v192, %v192
    %v209 = vpack.c.bf16 %v193, %v193
    %v210 = vpack.c.bf16 %v194, %v194
    %v211 = vpack.c.bf16 %v195, %v195
    %v212 = vpack.c.bf16 %v196, %v196
    %v213 = vpack.c.bf16 %v197, %v197
    %v214 = vpack.c.bf16 %v198, %v198
    %v215 = vpack.c.bf16 %v199, %v199
    %v216 = vpack.c.bf16 %v200, %v200
    %v217 = vpack.c.bf16 %v201, %v201
    %v218 = vpack.c.bf16 %v202, %v202
    %v219 = vpack.c.bf16 %v203, %v203
    %v220 = vld [vmem:[%s2] sm:$0xf]
    %v221 = vld [vmem:[%s2 + $0x4] sm:$0xf]
    %v222 = vld [vmem:[%s2 + $0x8] sm:$0xf]
    %v223 = vld [vmem:[%s2 + $0xc] sm:$0xf]
    %v224 = vld [vmem:[%s2 + $0x10] sm:$0xf]
    %v225 = vld [vmem:[%s2 + $0x14] sm:$0xf]
    %v226 = vld [vmem:[%s2 + $0x18] sm:$0xf]
    %v227 = vld [vmem:[%s2 + $0x1c] sm:$0xf]
    %v244 = vunpack.c.l.b16 %v204
    %v245 = vunpack.c.l.b16 %v205
    %v246 = vunpack.c.l.b16 %v206
    %v247 = vunpack.c.l.b16 %v207
    %v248 = vunpack.c.l.b16 %v208
    %v249 = vunpack.c.l.b16 %v209
    %v250 = vunpack.c.l.b16 %v210
    %v251 = vunpack.c.l.b16 %v211
    %v252 = vunpack.c.l.b16 %v212
    %v253 = vunpack.c.l.b16 %v213
    %v254 = vunpack.c.l.b16 %v214
    %v255 = vunpack.c.l.b16 %v215
    %v256 = vunpack.c.l.b16 %v216
    %v257 = vunpack.c.l.b16 %v217
    %v258 = vunpack.c.l.b16 %v218
    %v259 = vunpack.c.l.b16 %v219
    %v260 = vpack.c.b16 %v245, %v244
    %v261 = vpack.c.b16 %v247, %v246
    %v262 = vpack.c.b16 %v249, %v248
    %v263 = vpack.c.b16 %v251, %v250
    %v264 = vpack.c.b16 %v253, %v252
    %v265 = vpack.c.b16 %v255, %v254
    %v266 = vpack.c.b16 %v257, %v256
    %v267 = vpack.c.b16 %v259, %v258
    %v276 = vunpack.c.l.b16 %v220
    %v277 = vunpack.c.l.b16 %v221
    %v278 = vunpack.c.l.b16 %v222
    %v279 = vunpack.c.l.b16 %v223
    %v280 = vunpack.c.l.b16 %v224
    %v281 = vunpack.c.l.b16 %v225
    %v282 = vunpack.c.l.b16 %v226
    %v283 = vunpack.c.l.b16 %v227
    %v284 = vpack.c.b16 %v277, %v276
    %v285 = vpack.c.b16 %v279, %v278
    %v286 = vpack.c.b16 %v281, %v280
    %v287 = vpack.c.b16 %v283, %v282
    %vm292 = vcmask 523264
    %v294 = vsel %vm292, %v260, 0
    %v297 = vsel %vm292, %v261, 0
    %v300 = vsel %vm292, %v262, 0
    %v303 = vsel %vm292, %v263, 0
    %v306 = vsel %vm292, %v264, 0
    %v309 = vsel %vm292, %v265, 0
    %v312 = vsel %vm292, %v266, 0
    %v315 = vsel %vm292, %v267, 0
    %317 = vmatprep.subr.bf16.mxu0 0
    %318 = vmatpush1.bf16.msra.mxu0 %v284
    %319 = vmatprep.subr.bf16.mxu0 0
    %320 = vmatpush1.bf16.msra.mxu0 %v285
    %321 = vmatprep.subr.bf16.mxu0 0
    %322 = vmatpush1.bf16.msra.mxu0 %v286
    %323 = vmatprep.subr.bf16.mxu0 0
    %324 = vmatpush1.bf16.msra.mxu0 %v287
    %325 = vmatprep.subr.bf16.mxu0 0
    %326 = vmatpush1.bf16.msra.mxu0 0
    %327 = vmatprep.subr.bf16.mxu0 0
    %328 = vmatpush1.bf16.msra.mxu0 0
    %329 = vmatprep.subr.bf16.mxu0 0
    %330 = vmatpush1.bf16.msra.mxu0 0
    %331 = vmatprep.subr.bf16.mxu0 0
    %332 = vmatpush1.bf16.msra.mxu0 0
    %333 = vmatprep.subr.bf16.mxu0 0
    %334 = vmatpush1.bf16.msra.mxu0 0
    %335 = vmatprep.subr.bf16.mxu0 0
    %336 = vmatpush1.bf16.msra.mxu0 0
    %337 = vmatprep.subr.bf16.mxu0 0
    %338 = vmatpush1.bf16.msra.mxu0 0
    %339 = vmatprep.subr.bf16.mxu0 0
    %340 = vmatpush1.bf16.msra.mxu0 0
    %341 = vmatprep.subr.bf16.mxu0 0
    %342 = vmatpush1.bf16.msra.mxu0 0
    %343 = vmatprep.subr.bf16.mxu0 0
    %344 = vmatpush1.bf16.msra.mxu0 0
    %345 = vmatprep.subr.bf16.mxu0 0
    %346 = vmatpush1.bf16.msra.mxu0 0
    %347 = vmatprep.subr.bf16.mxu0 0
    %348 = vmatpush1.bf16.msra.mxu0 0
    %349 = vmatprep.mubr.bf16.mxu0 0
    %350 = vmatmul.mubr.bf16.gmra.mrb[0].mxu0 %v294
    %v351 = vpop.f32.mrb[0].mxu0
    %v352 = vadd.f32 0.0, %v351
    %v353 = vpop.f32.mrb[0].mxu0
    %v354 = vpop.f32.mrb[0].mxu0
    %v355 = vadd.f32 0.0, %v354
    %v356 = vpop.f32.mrb[0].mxu0
    %357 = vmatprep.mubr.bf16.mxu0 0
    %358 = vmatmul.mubr.bf16.gmra.mrb[0].mxu0 %v297
    %v359 = vpop.f32.mrb[0].mxu0
    %v360 = vadd.f32 0.0, %v359
    %v361 = vpop.f32.mrb[0].mxu0
    %v362 = vpop.f32.mrb[0].mxu0
    %v363 = vadd.f32 0.0, %v362
    %v364 = vpop.f32.mrb[0].mxu0
    %365 = vmatprep.mubr.bf16.mxu0 0
    %366 = vmatmul.mubr.bf16.gmra.mrb[0].mxu0 %v300
    %v367 = vpop.f32.mrb[0].mxu0
    %v368 = vadd.f32 0.0, %v367
    %v369 = vpop.f32.mrb[0].mxu0
    %v370 = vpop.f32.mrb[0].mxu0
    %v371 = vadd.f32 0.0, %v370
    %v372 = vpop.f32.mrb[0].mxu0
    %373 = vmatprep.mubr.bf16.mxu0 0
    %374 = vmatmul.mubr.bf16.gmra.mrb[0].mxu0 %v303
    %v375 = vpop.f32.mrb[0].mxu0
    %v376 = vadd.f32 0.0, %v375
    %v377 = vpop.f32.mrb[0].mxu0
    %v378 = vpop.f32.mrb[0].mxu0
    %v379 = vadd.f32 0.0, %v378
    %v380 = vpop.f32.mrb[0].mxu0
    %381 = vmatprep.mubr.bf16.mxu0 0
    %382 = vmatmul.mubr.bf16.gmra.mrb[0].mxu0 %v306
    %v383 = vpop.f32.mrb[0].mxu0
    %v384 = vadd.f32 0.0, %v383
    %v385 = vpop.f32.mrb[0].mxu0
    %v386 = vpop.f32.mrb[0].mxu0
    %v387 = vadd.f32 0.0, %v386
    %v388 = vpop.f32.mrb[0].mxu0
    %389 = vmatprep.mubr.bf16.mxu0 0
    %390 = vmatmul.mubr.bf16.gmra.mrb[0].mxu0 %v309
    %v391 = vpop.f32.mrb[0].mxu0
    %v392 = vadd.f32 0.0, %v391
    %v393 = vpop.f32.mrb[0].mxu0
    %v394 = vpop.f32.mrb[0].mxu0
    %v395 = vadd.f32 0.0, %v394
    %v396 = vpop.f32.mrb[0].mxu0
    %397 = vmatprep.mubr.bf16.mxu0 0
    %398 = vmatmul.mubr.bf16.gmra.mrb[0].mxu0 %v312
    %v399 = vpop.f32.mrb[0].mxu0
    %v400 = vadd.f32 0.0, %v399
    %v401 = vpop.f32.mrb[0].mxu0
    %v402 = vpop.f32.mrb[0].mxu0
    %v403 = vadd.f32 0.0, %v402
    %v404 = vpop.f32.mrb[0].mxu0
    %405 = vmatprep.mubr.bf16.mxu0 0
    %406 = vmatmul.mubr.bf16.gmra.mrb[0].mxu0 %v315
    %v407 = vpop.f32.mrb[0].mxu0
    %v408 = vadd.f32 0.0, %v407
    %v409 = vpop.f32.mrb[0].mxu0
    %v410 = vpop.f32.mrb[0].mxu0
    %v411 = vadd.f32 0.0, %v410
    %v412 = vpop.f32.mrb[0].mxu0
    %413 = vdwg.mxu0
    %v414 = vld [vmem:[#allocation2] sm:$0xff]
    %v415 = vadd.f32 %v352, %v414
    %v416 = vadd.f32 %v355, %v414
    %v417 = vadd.f32 %v360, %v414
    %v418 = vadd.f32 %v363, %v414
    %v419 = vadd.f32 %v368, %v414
    %v420 = vadd.f32 %v371, %v414
    %v421 = vadd.f32 %v376, %v414
    %v422 = vadd.f32 %v379, %v414
    %v423 = vadd.f32 %v384, %v414
    %v424 = vadd.f32 %v387, %v414
    %v425 = vadd.f32 %v392, %v414
    %v426 = vadd.f32 %v395, %v414
    %v427 = vadd.f32 %v400, %v414
    %v428 = vadd.f32 %v403, %v414
    %v429 = vadd.f32 %v408, %v414
    %v430 = vadd.f32 %v411, %v414
    %v431 = vpack.c.bf16 %v416, %v415
    %v432 = vpack.c.bf16 %v418, %v417
    %v433 = vpack.c.bf16 %v420, %v419
    %v434 = vpack.c.bf16 %v422, %v421
    %v435 = vpack.c.bf16 %v424, %v423
    %v436 = vpack.c.bf16 %v426, %v425
    %v437 = vpack.c.bf16 %v428, %v427
    %v438 = vpack.c.bf16 %v430, %v429
    %v439 = vld [vmem:[#allocation5] sm:$0xff]
    %v440 = vld [vmem:[#allocation5 + $0x8] sm:$0xf]
    %v441 = vld [vmem:[#allocation5 + $0x28] sm:$0xff]
    %v442 = vld [vmem:[#allocation5 + $0x30] sm:$0xf]
    %v443 = vld [vmem:[#allocation5 + $0x50] sm:$0xff]
    %v444 = vld [vmem:[#allocation5 + $0x58] sm:$0xf]
    %v445 = vld [vmem:[#allocation5 + $0x78] sm:$0xff]
    %v446 = vld [vmem:[#allocation5 + $0x80] sm:$0xf]
    %v447 = vld [vmem:[#allocation5 + $0xa0] sm:$0xff]
    %v448 = vld [vmem:[#allocation5 + $0xa8] sm:$0xf]
    %v449 = vld [vmem:[#allocation5 + $0xc8] sm:$0xff]
    %v450 = vld [vmem:[#allocation5 + $0xd0] sm:$0xf]
    %v451 = vld [vmem:[#allocation5 + $0xf0] sm:$0xff]
    %v452 = vld [vmem:[#allocation5 + $0xf8] sm:$0xf]
    %v453 = vld [vmem:[#allocation5 + $0x118] sm:$0xff]
    %v454 = vld [vmem:[#allocation5 + $0x120] sm:$0xf]
    %v455 = vld [vmem:[#allocation5 + $0x140] sm:$0xff]
    %v456 = vld [vmem:[#allocation5 + $0x148] sm:$0xf]
    %v457 = vld [vmem:[#allocation5 + $0x168] sm:$0xff]
    %v458 = vld [vmem:[#allocation5 + $0x170] sm:$0xf]
    %v459 = vld [vmem:[#allocation5 + $0x190] sm:$0xff]
    %v460 = vld [vmem:[#allocation5 + $0x198] sm:$0xf]
    %v461 = vld [vmem:[#allocation5 + $0x1b8] sm:$0xff]
    %v462 = vld [vmem:[#allocation5 + $0x1c0] sm:$0xf]
    %v463 = vld [vmem:[#allocation5 + $0x1e0] sm:$0xff]
    %v464 = vld [vmem:[#allocation5 + $0x1e8] sm:$0xf]
    %v465 = vld [vmem:[#allocation5 + $0x208] sm:$0xff]
    %v466 = vld [vmem:[#allocation5 + $0x210] sm:$0xf]
    %v467 = vld [vmem:[#allocation5 + $0x230] sm:$0xff]
    %v468 = vld [vmem:[#allocation5 + $0x238] sm:$0xf]
    %v469 = vld [vmem:[#allocation5 + $0x258] sm:$0xff]
    %v470 = vld [vmem:[#allocation5 + $0x260] sm:$0xf]
    %v471 = vld [vmem:[%s8] sm:$0x7]
    %v473 = vlaneseq
    %v474 = vshrl.u32 %v473, 7
    %v475 = vsub.s32 0, %v474
    %v476 = vrot.slane %v471, %v475
    %v477 = vlaneseq
    %v478 = vshrl.u32 %v477, 7
    %v479 = vsub.s32 1, %v478
    %v480 = vrot.slane %v471, %v479
    %v481 = vlaneseq
    %v482 = vshrl.u32 %v481, 7
    %v483 = vsub.s32 2, %v482
    %v484 = vrot.slane %v471, %v483
    %v520 = vunpack.c.l.b16 %v439
    %v521 = vunpack.c.h.b16 %v439
    %v522 = vunpack.c.l.b16 %v440
    %v523 = vunpack.c.l.b16 %v441
    %v524 = vunpack.c.h.b16 %v441
    %v525 = vunpack.c.l.b16 %v442
    %v526 = vunpack.c.l.b16 %v443
    %v527 = vunpack.c.h.b16 %v443
    %v528 = vunpack.c.l.b16 %v444
    %v529 = vunpack.c.l.b16 %v445
    %v530 = vunpack.c.h.b16 %v445
    %v531 = vunpack.c.l.b16 %v446
    %v532 = vunpack.c.l.b16 %v447
    %v533 = vunpack.c.h.b16 %v447
    %v534 = vunpack.c.l.b16 %v448
    %v535 = vunpack.c.l.b16 %v449
    %v536 = vunpack.c.h.b16 %v449
    %v537 = vunpack.c.l.b16 %v450
    %v538 = vunpack.c.l.b16 %v451
    %v539 = vunpack.c.h.b16 %v451
    %v540 = vunpack.c.l.b16 %v452
    %v541 = vunpack.c.l.b16 %v453
    %v542 = vunpack.c.h.b16 %v453
    %v543 = vunpack.c.l.b16 %v454
    %v544 = vunpack.c.l.b16 %v455
    %v545 = vunpack.c.h.b16 %v455
    %v546 = vunpack.c.l.b16 %v456
    %v547 = vunpack.c.l.b16 %v457
    %v548 = vunpack.c.h.b16 %v457
    %v549 = vunpack.c.l.b16 %v458
    %v550 = vunpack.c.l.b16 %v459
    %v551 = vunpack.c.h.b16 %v459
    %v552 = vunpack.c.l.b16 %v460
    %v553 = vunpack.c.l.b16 %v461
    %v554 = vunpack.c.h.b16 %v461
    %v555 = vunpack.c.l.b16 %v462
    %v556 = vunpack.c.l.b16 %v463
    %v557 = vunpack.c.h.b16 %v463
    %v558 = vunpack.c.l.b16 %v464
    %v559 = vunpack.c.l.b16 %v465
    %v560 = vunpack.c.h.b16 %v465
    %v561 = vunpack.c.l.b16 %v466
    %v562 = vunpack.c.l.b16 %v467
    %v563 = vunpack.c.h.b16 %v467
    %v564 = vunpack.c.l.b16 %v468
    %v565 = vunpack.c.l.b16 %v469
    %v566 = vunpack.c.h.b16 %v469
    %v567 = vunpack.c.l.b16 %v470
    %v568 = vpack.c.b16 %v523, %v520
    %v569 = vpack.c.b16 %v524, %v521
    %v570 = vpack.c.b16 %v525, %v522
    %v571 = vpack.c.b16 %v529, %v526
    %v572 = vpack.c.b16 %v530, %v527
    %v573 = vpack.c.b16 %v531, %v528
    %v574 = vpack.c.b16 %v535, %v532
    %v575 = vpack.c.b16 %v536, %v533
    %v576 = vpack.c.b16 %v537, %v534
    %v577 = vpack.c.b16 %v541, %v538
    %v578 = vpack.c.b16 %v542, %v539
    %v579 = vpack.c.b16 %v543, %v540
    %v580 = vpack.c.b16 %v547, %v544
    %v581 = vpack.c.b16 %v548, %v545
    %v582 = vpack.c.b16 %v549, %v546
    %v583 = vpack.c.b16 %v553, %v550
    %v584 = vpack.c.b16 %v554, %v551
    %v585 = vpack.c.b16 %v555, %v552
    %v586 = vpack.c.b16 %v559, %v556
    %v587 = vpack.c.b16 %v560, %v557
    %v588 = vpack.c.b16 %v561, %v558
    %v589 = vpack.c.b16 %v565, %v562
    %v590 = vpack.c.b16 %v566, %v563
    %v591 = vpack.c.b16 %v567, %v564
    %616 = vmatprep.subr.bf16.mxu0 %v569
    %617 = vmatpush1.bf16.msra.mxu0 %v568
    %618 = vmatprep.subr.bf16.mxu0 %v572
    %619 = vmatpush1.bf16.msra.mxu0 %v571
    %620 = vmatprep.subr.bf16.mxu0 %v575
    %621 = vmatpush1.bf16.msra.mxu0 %v574
    %622 = vmatprep.subr.bf16.mxu0 %v578
    %623 = vmatpush1.bf16.msra.mxu0 %v577
    %624 = vmatprep.subr.bf16.mxu0 %v581
    %625 = vmatpush1.bf16.msra.mxu0 %v580
    %626 = vmatprep.subr.bf16.mxu0 %v584
    %627 = vmatpush1.bf16.msra.mxu0 %v583
    %628 = vmatprep.subr.bf16.mxu0 %v587
    %629 = vmatpush1.bf16.msra.mxu0 %v586
    %630 = vmatprep.subr.bf16.mxu0 %v590
    %631 = vmatpush1.bf16.msra.mxu0 %v589
    %632 = vmatprep.subr.bf16.mxu0 0
    %633 = vmatpush1.bf16.msra.mxu0 0
    %634 = vmatprep.subr.bf16.mxu0 0
    %635 = vmatpush1.bf16.msra.mxu0 0
    %636 = vmatprep.subr.bf16.mxu0 0
    %637 = vmatpush1.bf16.msra.mxu0 0
    %638 = vmatprep.subr.bf16.mxu0 0
    %639 = vmatpush1.bf16.msra.mxu0 0
    %640 = vmatprep.subr.bf16.mxu0 0
    %641 = vmatpush1.bf16.msra.mxu0 0
    %642 = vmatprep.subr.bf16.mxu0 0
    %643 = vmatpush1.bf16.msra.mxu0 0
    %644 = vmatprep.subr.bf16.mxu0 0
    %645 = vmatpush1.bf16.msra.mxu0 0
    %646 = vmatprep.subr.bf16.mxu0 0
    %647 = vmatpush1.bf16.msra.mxu0 0
    %648 = vmatprep.mubr.bf16.mxu0 0
    %649 = vmatmul.mubr.bf16.gmra.mrb[0].mxu0 %v431
    %v650 = vpop.f32.mrb[0].mxu0
    %v651 = vadd.f32 %v476, %v650
    %v652 = vpop.f32.mrb[0].mxu0
    %v653 = vadd.f32 %v480, %v652
    %v654 = vpop.f32.mrb[0].mxu0
    %v655 = vadd.f32 %v476, %v654
    %v656 = vpop.f32.mrb[0].mxu0
    %v657 = vadd.f32 %v480, %v656
    %658 = vmatprep.mubr.bf16.mxu0 0
    %659 = vmatmul.mubr.bf16.gmra.mrb[0].mxu0 %v432
    %v660 = vpop.f32.mrb[0].mxu0
    %v661 = vadd.f32 %v476, %v660
    %v662 = vpop.f32.mrb[0].mxu0
    %v663 = vadd.f32 %v480, %v662
    %v664 = vpop.f32.mrb[0].mxu0
    %v665 = vadd.f32 %v476, %v664
    %v666 = vpop.f32.mrb[0].mxu0
    %v667 = vadd.f32 %v480, %v666
    %668 = vmatprep.mubr.bf16.mxu0 0
    %669 = vmatmul.mubr.bf16.gmra.mrb[0].mxu0 %v433
    %v670 = vpop.f32.mrb[0].mxu0
    %v671 = vadd.f32 %v476, %v670
    %v672 = vpop.f32.mrb[0].mxu0
    %v673 = vadd.f32 %v480, %v672
    %v674 = vpop.f32.mrb[0].mxu0
    %v675 = vadd.f32 %v476, %v674
    %v676 = vpop.f32.mrb[0].mxu0
    %v677 = vadd.f32 %v480, %v676
    %678 = vmatprep.mubr.bf16.mxu0 0
    %679 = vmatmul.mubr.bf16.gmra.mrb[0].mxu0 %v434
    %v680 = vpop.f32.mrb[0].mxu0
    %v681 = vadd.f32 %v476, %v680
    %v682 = vpop.f32.mrb[0].mxu0
    %v683 = vadd.f32 %v480, %v682
    %v684 = vpop.f32.mrb[0].mxu0
    %v685 = vadd.f32 %v476, %v684
    %v686 = vpop.f32.mrb[0].mxu0
    %v687 = vadd.f32 %v480, %v686
    %688 = vmatprep.mubr.bf16.mxu0 0
    %689 = vmatmul.mubr.bf16.gmra.mrb[0].mxu0 %v435
    %v690 = vpop.f32.mrb[0].mxu0
    %v691 = vadd.f32 %v476, %v690
    %v692 = vpop.f32.mrb[0].mxu0
    %v693 = vadd.f32 %v480, %v692
    %v694 = vpop.f32.mrb[0].mxu0
    %v695 = vadd.f32 %v476, %v694
    %v696 = vpop.f32.mrb[0].mxu0
    %v697 = vadd.f32 %v480, %v696
    %698 = vmatprep.mubr.bf16.mxu0 0
    %699 = vmatmul.mubr.bf16.gmra.mrb[0].mxu0 %v436
    %v700 = vpop.f32.mrb[0].mxu0
    %v701 = vadd.f32 %v476, %v700
    %v702 = vpop.f32.mrb[0].mxu0
    %v703 = vadd.f32 %v480, %v702
    %v704 = vpop.f32.mrb[0].mxu0
    %v705 = vadd.f32 %v476, %v704
    %v706 = vpop.f32.mrb[0].mxu0
    %v707 = vadd.f32 %v480, %v706
    %708 = vmatprep.mubr.bf16.mxu0 0
    %709 = vmatmul.mubr.bf16.gmra.mrb[0].mxu0 %v437
    %v710 = vpop.f32.mrb[0].mxu0
    %v711 = vadd.f32 %v476, %v710
    %v712 = vpop.f32.mrb[0].mxu0
    %v713 = vadd.f32 %v480, %v712
    %v714 = vpop.f32.mrb[0].mxu0
    %v715 = vadd.f32 %v476, %v714
    %v716 = vpop.f32.mrb[0].mxu0
    %v717 = vadd.f32 %v480, %v716
    %718 = vmatprep.mubr.bf16.mxu0 0
    %719 = vmatmul.mubr.bf16.gmra.mrb[0].mxu0 %v438
    %v720 = vpop.f32.mrb[0].mxu0
    %v721 = vadd.f32 %v476, %v720
    %v722 = vpop.f32.mrb[0].mxu0
    %v723 = vadd.f32 %v480, %v722
    %v724 = vpop.f32.mrb[0].mxu0
    %v725 = vadd.f32 %v476, %v724
    %v726 = vpop.f32.mrb[0].mxu0
    %v727 = vadd.f32 %v480, %v726
    %728 = vdwg.mxu0
    %729 = vmatprep.subr.bf16.mxu0 0
    %730 = vmatpush1.bf16.msra.mxu0 %v570
    %731 = vmatprep.subr.bf16.mxu0 0
    %732 = vmatpush1.bf16.msra.mxu0 %v573
    %733 = vmatprep.subr.bf16.mxu0 0
    %734 = vmatpush1.bf16.msra.mxu0 %v576
    %735 = vmatprep.subr.bf16.mxu0 0
    %736 = vmatpush1.bf16.msra.mxu0 %v579
    %737 = vmatprep.subr.bf16.mxu0 0
    %738 = vmatpush1.bf16.msra.mxu0 %v582
    %739 = vmatprep.subr.bf16.mxu0 0
    %740 = vmatpush1.bf16.msra.mxu0 %v585
    %741 = vmatprep.subr.bf16.mxu0 0
    %742 = vmatpush1.bf16.msra.mxu0 %v588
    %743 = vmatprep.subr.bf16.mxu0 0
    %744 = vmatpush1.bf16.msra.mxu0 %v591
    %745 = vmatprep.subr.bf16.mxu0 0
    %746 = vmatpush1.bf16.msra.mxu0 0
    %747 = vmatprep.subr.bf16.mxu0 0
    %748 = vmatpush1.bf16.msra.mxu0 0
    %749 = vmatprep.subr.bf16.mxu0 0
    %750 = vmatpush1.bf16.msra.mxu0 0
    %751 = vmatprep.subr.bf16.mxu0 0
    %752 = vmatpush1.bf16.msra.mxu0 0
    %753 = vmatprep.subr.bf16.mxu0 0
    %754 = vmatpush1.bf16.msra.mxu0 0
    %755 = vmatprep.subr.bf16.mxu0 0
    %756 = vmatpush1.bf16.msra.mxu0 0
    %757 = vmatprep.subr.bf16.mxu0 0
    %758 = vmatpush1.bf16.msra.mxu0 0
    %759 = vmatprep.subr.bf16.mxu0 0
    %760 = vmatpush1.bf16.msra.mxu0 0
    %761 = vmatprep.mubr.bf16.mxu0 0
    %762 = vmatmul.mubr.bf16.gmra.mrb[0].mxu0 %v431
    %v763 = vpop.f32.mrb[0].mxu0
    %v764 = vadd.f32 %v484, %v763
    %v765 = vpop.f32.mrb[0].mxu0
    %v766 = vpop.f32.mrb[0].mxu0
    %v767 = vadd.f32 %v484, %v766
    %v768 = vpop.f32.mrb[0].mxu0
    %769 = vmatprep.mubr.bf16.mxu0 0
    %770 = vmatmul.mubr.bf16.gmra.mrb[0].mxu0 %v432
    %v771 = vpop.f32.mrb[0].mxu0
    %v772 = vadd.f32 %v484, %v771
    %v773 = vpop.f32.mrb[0].mxu0
    %v774 = vpop.f32.mrb[0].mxu0
    %v775 = vadd.f32 %v484, %v774
    %v776 = vpop.f32.mrb[0].mxu0
    %777 = vmatprep.mubr.bf16.mxu0 0
    %778 = vmatmul.mubr.bf16.gmra.mrb[0].mxu0 %v433
    %v779 = vpop.f32.mrb[0].mxu0
    %v780 = vadd.f32 %v484, %v779
    %v781 = vpop.f32.mrb[0].mxu0
    %v782 = vpop.f32.mrb[0].mxu0
    %v783 = vadd.f32 %v484, %v782
    %v784 = vpop.f32.mrb[0].mxu0
    %785 = vmatprep.mubr.bf16.mxu0 0
    %786 = vmatmul.mubr.bf16.gmra.mrb[0].mxu0 %v434
    %v787 = vpop.f32.mrb[0].mxu0
    %v788 = vadd.f32 %v484, %v787
    %v789 = vpop.f32.mrb[0].mxu0
    %v790 = vpop.f32.mrb[0].mxu0
    %v791 = vadd.f32 %v484, %v790
    %v792 = vpop.f32.mrb[0].mxu0
    %793 = vmatprep.mubr.bf16.mxu0 0
    %794 = vmatmul.mubr.bf16.gmra.mrb[0].mxu0 %v435
    %v795 = vpop.f32.mrb[0].mxu0
    %v796 = vadd.f32 %v484, %v795
    %v797 = vpop.f32.mrb[0].mxu0
    %v798 = vpop.f32.mrb[0].mxu0
    %v799 = vadd.f32 %v484, %v798
    %v800 = vpop.f32.mrb[0].mxu0
    %801 = vmatprep.mubr.bf16.mxu0 0
    %802 = vmatmul.mubr.bf16.gmra.mrb[0].mxu0 %v436
    %v803 = vpop.f32.mrb[0].mxu0
    %v804 = vadd.f32 %v484, %v803
    %v805 = vpop.f32.mrb[0].mxu0
    %v806 = vpop.f32.mrb[0].mxu0
    %v807 = vadd.f32 %v484, %v806
    %v808 = vpop.f32.mrb[0].mxu0
    %809 = vmatprep.mubr.bf16.mxu0 0
    %810 = vmatmul.mubr.bf16.gmra.mrb[0].mxu0 %v437
    %v811 = vpop.f32.mrb[0].mxu0
    %v812 = vadd.f32 %v484, %v811
    %v813 = vpop.f32.mrb[0].mxu0
    %v814 = vpop.f32.mrb[0].mxu0
    %v815 = vadd.f32 %v484, %v814
    %v816 = vpop.f32.mrb[0].mxu0
    %817 = vmatprep.mubr.bf16.mxu0 0
    %818 = vmatmul.mubr.bf16.gmra.mrb[0].mxu0 %v438
    %v819 = vpop.f32.mrb[0].mxu0
    %v820 = vadd.f32 %v484, %v819
    %v821 = vpop.f32.mrb[0].mxu0
    %v822 = vpop.f32.mrb[0].mxu0
    %v823 = vadd.f32 %v484, %v822
    %v824 = vpop.f32.mrb[0].mxu0
    %825 = vdwg.mxu0
    %v826 = vpack.c.bf16 %v655, %v651
    %v827 = vpack.c.bf16 %v657, %v653
    %v828 = vpack.c.bf16 %v767, %v764
    %v829 = vpack.c.bf16 %v665, %v661
    %v830 = vpack.c.bf16 %v667, %v663
    %v831 = vpack.c.bf16 %v775, %v772
    %v832 = vpack.c.bf16 %v675, %v671
    %v833 = vpack.c.bf16 %v677, %v673
    %v834 = vpack.c.bf16 %v783, %v780
    %v835 = vpack.c.bf16 %v685, %v681
    %v836 = vpack.c.bf16 %v687, %v683
    %v837 = vpack.c.bf16 %v791, %v788
    %v838 = vpack.c.bf16 %v695, %v691
    %v839 = vpack.c.bf16 %v697, %v693
    %v840 = vpack.c.bf16 %v799, %v796
    %v841 = vpack.c.bf16 %v705, %v701
    %v842 = vpack.c.bf16 %v707, %v703
    %v843 = vpack.c.bf16 %v807, %v804
    %v844 = vpack.c.bf16 %v715, %v711
    %v845 = vpack.c.bf16 %v717, %v713
    %v846 = vpack.c.bf16 %v815, %v812
    %v847 = vpack.c.bf16 %v725, %v721
    %v848 = vpack.c.bf16 %v727, %v723
    %v849 = vpack.c.bf16 %v823, %v820
    %v858 = vunpack.c.l.b16 %v826
    %v859 = vunpack.c.h.b16 %v826
    %v860 = vunpack.c.l.b16 %v829
    %v861 = vunpack.c.h.b16 %v829
    %v862 = vunpack.c.l.b16 %v832
    %v863 = vunpack.c.h.b16 %v832
    %v864 = vunpack.c.l.b16 %v835
    %v865 = vunpack.c.h.b16 %v835
    %v866 = vunpack.c.l.b16 %v838
    %v867 = vunpack.c.h.b16 %v838
    %v868 = vunpack.c.l.b16 %v841
    %v869 = vunpack.c.h.b16 %v841
    %v870 = vunpack.c.l.b16 %v844
    %v871 = vunpack.c.h.b16 %v844
    %v872 = vunpack.c.l.b16 %v847
    %v873 = vunpack.c.h.b16 %v847
    %v874 = vpack.c.b16 %v858, %v858
    %v875 = vpack.c.b16 %v859, %v859
    %v876 = vpack.c.b16 %v860, %v860
    %v877 = vpack.c.b16 %v861, %v861
    %v878 = vpack.c.b16 %v862, %v862
    %v879 = vpack.c.b16 %v863, %v863
    %v880 = vpack.c.b16 %v864, %v864
    %v881 = vpack.c.b16 %v865, %v865
    %v882 = vpack.c.b16 %v866, %v866
    %v883 = vpack.c.b16 %v867, %v867
    %v884 = vpack.c.b16 %v868, %v868
    %v885 = vpack.c.b16 %v869, %v869
    %v886 = vpack.c.b16 %v870, %v870
    %v887 = vpack.c.b16 %v871, %v871
    %v888 = vpack.c.b16 %v872, %v872
    %v889 = vpack.c.b16 %v873, %v873
    %v914 = vunpack.c.l.b16 %v827
    %v915 = vunpack.c.h.b16 %v827
    %v916 = vunpack.c.l.b16 %v830
    %v917 = vunpack.c.h.b16 %v830
    %v918 = vunpack.c.l.b16 %v833
    %v919 = vunpack.c.h.b16 %v833
    %v920 = vunpack.c.l.b16 %v836
    %v921 = vunpack.c.h.b16 %v836
    %v922 = vunpack.c.l.b16 %v839
    %v923 = vunpack.c.h.b16 %v839
    %v924 = vunpack.c.l.b16 %v842
    %v925 = vunpack.c.h.b16 %v842
    %v926 = vunpack.c.l.b16 %v845
    %v927 = vunpack.c.h.b16 %v845
    %v928 = vunpack.c.l.b16 %v848
    %v929 = vunpack.c.h.b16 %v848
    %v930 = vpack.c.b16 %v914, %v914
    %v931 = vpack.c.b16 %v915, %v915
    %v932 = vpack.c.b16 %v916, %v916
    %v933 = vpack.c.b16 %v917, %v917
    %v934 = vpack.c.b16 %v918, %v918
    %v935 = vpack.c.b16 %v919, %v919
    %v936 = vpack.c.b16 %v920, %v920
    %v937 = vpack.c.b16 %v921, %v921
    %v938 = vpack.c.b16 %v922, %v922
    %v939 = vpack.c.b16 %v923, %v923
    %v940 = vpack.c.b16 %v924, %v924
    %v941 = vpack.c.b16 %v925, %v925
    %v942 = vpack.c.b16 %v926, %v926
    %v943 = vpack.c.b16 %v927, %v927
    %v944 = vpack.c.b16 %v928, %v928
    %v945 = vpack.c.b16 %v929, %v929
    %v970 = vunpack.c.l.b16 %v828
    %v971 = vunpack.c.h.b16 %v828
    %v972 = vunpack.c.l.b16 %v831
    %v973 = vunpack.c.h.b16 %v831
    %v974 = vunpack.c.l.b16 %v834
    %v975 = vunpack.c.h.b16 %v834
    %v976 = vunpack.c.l.b16 %v837
    %v977 = vunpack.c.h.b16 %v837
    %v978 = vunpack.c.l.b16 %v840
    %v979 = vunpack.c.h.b16 %v840
    %v980 = vunpack.c.l.b16 %v843
    %v981 = vunpack.c.h.b16 %v843
    %v982 = vunpack.c.l.b16 %v846
    %v983 = vunpack.c.h.b16 %v846
    %v984 = vunpack.c.l.b16 %v849
    %v985 = vunpack.c.h.b16 %v849
    %v986 = vpack.c.b16 %v970, %v970
    %v987 = vpack.c.b16 %v971, %v971
    %v988 = vpack.c.b16 %v972, %v972
    %v989 = vpack.c.b16 %v973, %v973
    %v990 = vpack.c.b16 %v974, %v974
    %v991 = vpack.c.b16 %v975, %v975
    %v992 = vpack.c.b16 %v976, %v976
    %v993 = vpack.c.b16 %v977, %v977
    %v994 = vpack.c.b16 %v978, %v978
    %v995 = vpack.c.b16 %v979, %v979
    %v996 = vpack.c.b16 %v980, %v980
    %v997 = vpack.c.b16 %v981, %v981
    %v998 = vpack.c.b16 %v982, %v982
    %v999 = vpack.c.b16 %v983, %v983
    %v1000 = vpack.c.b16 %v984, %v984
    %v1001 = vpack.c.b16 %v985, %v985
    %v1002 = vld [vmem:[%s1] sm:$0xff]
    %v1003 = vld [vmem:[%s1 + $0x8] sm:$0xff]
    %1004 = vmatprep.subr.bf16.mxu0 0
    %1005 = vmatpush1.bf16.xpose.msra.mxu0 %v930
    %1006 = vmatprep.subr.bf16.mxu0 0
    %1007 = vmatpush1.bf16.xpose.msra.mxu0 0
    %1008 = vmatprep.subr.bf16.mxu0 0
    %1009 = vmatpush1.bf16.xpose.msra.mxu0 0
    %1010 = vmatprep.subr.bf16.mxu0 0
    %1011 = vmatpush1.bf16.xpose.msra.mxu0 0
    %1012 = vmatprep.subr.bf16.mxu0 0
    %1013 = vmatpush1.bf16.xpose.msra.mxu0 0
    %1014 = vmatprep.subr.bf16.mxu0 0
    %1015 = vmatpush1.bf16.xpose.msra.mxu0 0
    %1016 = vmatprep.subr.bf16.mxu0 0
    %1017 = vmatpush1.bf16.xpose.msra.mxu0 0
    %1018 = vmatprep.subr.bf16.mxu0 0
    %1019 = vmatpush1.bf16.xpose.msra.mxu0 0
    %1020 = vmatprep.subr.bf16.mxu0 0
    %1021 = vmatpush1.bf16.xpose.msra.mxu0 0
    %1022 = vmatprep.subr.bf16.mxu0 0
    %1023 = vmatpush1.bf16.xpose.msra.mxu0 0
    %1024 = vmatprep.subr.bf16.mxu0 0
    %1025 = vmatpush1.bf16.xpose.msra.mxu0 0
    %1026 = vmatprep.subr.bf16.mxu0 0
    %1027 = vmatpush1.bf16.xpose.msra.mxu0 0
    %1028 = vmatprep.subr.bf16.mxu0 0
    %1029 = vmatpush1.bf16.xpose.msra.mxu0 0
    %1030 = vmatprep.subr.bf16.mxu0 0
    %1031 = vmatpush1.bf16.xpose.msra.mxu0 0
    %1032 = vmatprep.subr.bf16.mxu0 0
    %1033 = vmatpush1.bf16.xpose.msra.mxu0 0
    %1034 = vmatprep.subr.bf16.mxu0 0
    %1035 = vmatpush1.bf16.xpose.msra.mxu0 0
    %1036 = vmatprep.mubr.bf16.mxu0 0
    %1037 = vmatmul.mubr.bf16.gmra.mrb[0].mxu0 %v874
    %v1038 = vpop.f32.mrb[0].mxu0
    %v1039 = vadd.f32 0.0, %v1038
    %v1040 = vpop.f32.mrb[0].mxu0
    %v1041 = vpop.f32.mrb[0].mxu0
    %v1042 = vpop.f32.mrb[0].mxu0
    %1043 = vdwg.mxu0
    %1044 = vmatprep.subr.bf16.mxu0 0
    %1045 = vmatpush1.bf16.xpose.msra.mxu0 %v931
    %1046 = vmatprep.subr.bf16.mxu0 0
    %1047 = vmatpush1.bf16.xpose.msra.mxu0 0
    %1048 = vmatprep.subr.bf16.mxu0 0
    %1049 = vmatpush1.bf16.xpose.msra.mxu0 0
    %1050 = vmatprep.subr.bf16.mxu0 0
    %1051 = vmatpush1.bf16.xpose.msra.mxu0 0
    %1052 = vmatprep.subr.bf16.mxu0 0
    %1053 = vmatpush1.bf16.xpose.msra.mxu0 0
    %1054 = vmatprep.subr.bf16.mxu0 0
    %1055 = vmatpush1.bf16.xpose.msra.mxu0 0
    %1056 = vmatprep.subr.bf16.mxu0 0
    %1057 = vmatpush1.bf16.xpose.msra.mxu0 0
    %1058 = vmatprep.subr.bf16.mxu0 0
    %1059 = vmatpush1.bf16.xpose.msra.mxu0 0
    %1060 = vmatprep.subr.bf16.mxu0 0
    %1061 = vmatpush1.bf16.xpose.msra.mxu0 0
    %1062 = vmatprep.subr.bf16.mxu0 0
    %1063 = vmatpush1.bf16.xpose.msra.mxu0 0
    %1064 = vmatprep.subr.bf16.mxu0 0
    %1065 = vmatpush1.bf16.xpose.msra.mxu0 0
    %1066 = vmatprep.subr.bf16.mxu0 0
    %1067 = vmatpush1.bf16.xpose.msra.mxu0 0
    %1068 = vmatprep.subr.bf16.mxu0 0
    %1069 = vmatpush1.bf16.xpose.msra.mxu0 0
    %1070 = vmatprep.subr.bf16.mxu0 0
    %1071 = vmatpush1.bf16.xpose.msra.mxu0 0
    %1072 = vmatprep.subr.bf16.mxu0 0
    %1073 = vmatpush1.bf16.xpose.msra.mxu0 0
    %1074 = vmatprep.subr.bf16.mxu0 0
    %1075 = vmatpush1.bf16.xpose.msra.mxu0 0
    %1076 = vmatprep.mubr.bf16.mxu0 0
    %1077 = vmatmul.mubr.bf16.gmra.mrb[0].mxu0 %v875
    %v1078 = vpop.f32.mrb[0].mxu0
    %v1079 = vadd.f32 0.0, %v1078
    %v1080 = vpop.f32.mrb[0].mxu0
    %v1081 = vpop.f32.mrb[0].mxu0
    %v1082 = vpop.f32.mrb[0].mxu0
    %1083 = vdwg.mxu0
    %1084 = vmatprep.subr.bf16.mxu0 0
    %1085 = vmatpush1.bf16.xpose.msra.mxu0 %v932
    %1086 = vmatprep.subr.bf16.mxu0 0
    %1087 = vmatpush1.bf16.xpose.msra.mxu0 0
    %1088 = vmatprep.subr.bf16.mxu0 0
    %1089 = vmatpush1.bf16.xpose.msra.mxu0 0
    %1090 = vmatprep.subr.bf16.mxu0 0
    %1091 = vmatpush1.bf16.xpose.msra.mxu0 0
    %1092 = vmatprep.subr.bf16.mxu0 0
    %1093 = vmatpush1.bf16.xpose.msra.mxu0 0
    %1094 = vmatprep.subr.bf16.mxu0 0
    %1095 = vmatpush1.bf16.xpose.msra.mxu0 0
    %1096 = vmatprep.subr.bf16.mxu0 0
    %1097 = vmatpush1.bf16.xpose.msra.mxu0 0
    %1098 = vmatprep.subr.bf16.mxu0 0
    %1099 = vmatpush1.bf16.xpose.msra.mxu0 0
    %1100 = vmatprep.subr.bf16.mxu0 0
    %1101 = vmatpush1.bf16.xpose.msra.mxu0 0
    %1102 = vmatprep.subr.bf16.mxu0 0
    %1103 = vmatpush1.bf16.xpose.msra.mxu0 0
    %1104 = vmatprep.subr.bf16.mxu0 0
    %1105 = vmatpush1.bf16.xpose.msra.mxu0 0
    %1106 = vmatprep.subr.bf16.mxu0 0
    %1107 = vmatpush1.bf16.xpose.msra.mxu0 0
    %1108 = vmatprep.subr.bf16.mxu0 0
    %1109 = vmatpush1.bf16.xpose.msra.mxu0 0
    %1110 = vmatprep.subr.bf16.mxu0 0
    %1111 = vmatpush1.bf16.xpose.msra.mxu0 0
    %1112 = vmatprep.subr.bf16.mxu0 0
    %1113 = vmatpush1.bf16.xpose.msra.mxu0 0
    %1114 = vmatprep.subr.bf16.mxu0 0
    %1115 = vmatpush1.bf16.xpose.msra.mxu0 0
    %1116 = vmatprep.mubr.bf16.mxu0 0
    %1117 = vmatmul.mubr.bf16.gmra.mrb[0].mxu0 %v876
    %v1118 = vpop.f32.mrb[0].mxu0
    %v1119 = vadd.f32 0.0, %v1118
    %v1120 = vpop.f32.mrb[0].mxu0
    %v1121 = vpop.f32.mrb[0].mxu0
    %v1122 = vpop.f32.mrb[0].mxu0
    %1123 = vdwg.mxu0
    %1124 = vmatprep.subr.bf16.mxu0 0
    %1125 = vmatpush1.bf16.xpose.msra.mxu0 %v933
    %1126 = vmatprep.subr.bf16.mxu0 0
    %1127 = vmatpush1.bf16.xpose.msra.mxu0 0
    %1128 = vmatprep.subr.bf16.mxu0 0
    %1129 = vmatpush1.bf16.xpose.msra.mxu0 0
    %1130 = vmatprep.subr.bf16.mxu0 0
    %1131 = vmatpush1.bf16.xpose.msra.mxu0 0
    %1132 = vmatprep.subr.bf16.mxu0 0
    %1133 = vmatpush1.bf16.xpose.msra.mxu0 0
    %1134 = vmatprep.subr.bf16.mxu0 0
    %1135 = vmatpush1.bf16.xpose.msra.mxu0 0
    %1136 = vmatprep.subr.bf16.mxu0 0
    %1137 = vmatpush1.bf16.xpose.msra.mxu0 0
    %1138 = vmatprep.subr.bf16.mxu0 0
    %1139 = vmatpush1.bf16.xpose.msra.mxu0 0
    %1140 = vmatprep.subr.bf16.mxu0 0
    %1141 = vmatpush1.bf16.xpose.msra.mxu0 0
    %1142 = vmatprep.subr.bf16.mxu0 0
    %1143 = vmatpush1.bf16.xpose.msra.mxu0 0
    %1144 = vmatprep.subr.bf16.mxu0 0
    %1145 = vmatpush1.bf16.xpose.msra.mxu0 0
    %1146 = vmatprep.subr.bf16.mxu0 0
    %1147 = vmatpush1.bf16.xpose.msra.mxu0 0
    %1148 = vmatprep.subr.bf16.mxu0 0
    %1149 = vmatpush1.bf16.xpose.msra.mxu0 0
    %1150 = vmatprep.subr.bf16.mxu0 0
    %1151 = vmatpush1.bf16.xpose.msra.mxu0 0
    %1152 = vmatprep.subr.bf16.mxu0 0
    %1153 = vmatpush1.bf16.xpose.msra.mxu0 0
    %1154 = vmatprep.subr.bf16.mxu0 0
    %1155 = vmatpush1.bf16.xpose.msra.mxu0 0
    %1156 = vmatprep.mubr.bf16.mxu0 0
    %1157 = vmatmul.mubr.bf16.gmra.mrb[0].mxu0 %v877
    %v1158 = vpop.f32.mrb[0].mxu0
    %v1159 = vadd.f32 0.0, %v1158
    %v1160 = vpop.f32.mrb[0].mxu0
    %v1161 = vpop.f32.mrb[0].mxu0
    %v1162 = vpop.f32.mrb[0].mxu0
    %1163 = vdwg.mxu0
    %1164 = vmatprep.subr.bf16.mxu0 0
    %1165 = vmatpush1.bf16.xpose.msra.mxu0 %v934
    %1166 = vmatprep.subr.bf16.mxu0 0
    %1167 = vmatpush1.bf16.xpose.msra.mxu0 0
    %1168 = vmatprep.subr.bf16.mxu0 0
    %1169 = vmatpush1.bf16.xpose.msra.mxu0 0
    %1170 = vmatprep.subr.bf16.mxu0 0
    %1171 = vmatpush1.bf16.xpose.msra.mxu0 0
    %1172 = vmatprep.subr.bf16.mxu0 0
    %1173 = vmatpush1.bf16.xpose.msra.mxu0 0
    %1174 = vmatprep.subr.bf16.mxu0 0
    %1175 = vmatpush1.bf16.xpose.msra.mxu0 0
    %1176 = vmatprep.subr.bf16.mxu0 0
    %1177 = vmatpush1.bf16.xpose.msra.mxu0 0
    %1178 = vmatprep.subr.bf16.mxu0 0
    %1179 = vmatpush1.bf16.xpose.msra.mxu0 0
    %1180 = vmatprep.subr.bf16.mxu0 0
    %1181 = vmatpush1.bf16.xpose.msra.mxu0 0
    %1182 = vmatprep.subr.bf16.mxu0 0
    %1183 = vmatpush1.bf16.xpose.msra.mxu0 0
    %1184 = vmatprep.subr.bf16.mxu0 0
    %1185 = vmatpush1.bf16.xpose.msra.mxu0 0
    %1186 = vmatprep.subr.bf16.mxu0 0
    %1187 = vmatpush1.bf16.xpose.msra.mxu0 0
    %1188 = vmatprep.subr.bf16.mxu0 0
    %1189 = vmatpush1.bf16.xpose.msra.mxu0 0
    %1190 = vmatprep.subr.bf16.mxu0 0
    %1191 = vmatpush1.bf16.xpose.msra.mxu0 0
    %1192 = vmatprep.subr.bf16.mxu0 0
    %1193 = vmatpush1.bf16.xpose.msra.mxu0 0
    %1194 = vmatprep.subr.bf16.mxu0 0
    %1195 = vmatpush1.bf16.xpose.msra.mxu0 0
    %1196 = vmatprep.mubr.bf16.mxu0 0
    %1197 = vmatmul.mubr.bf16.gmra.mrb[0].mxu0 %v878
    %v1198 = vpop.f32.mrb[0].mxu0
    %v1199 = vadd.f32 0.0, %v1198
    %v1200 = vpop.f32.mrb[0].mxu0
    %v1201 = vpop.f32.mrb[0].mxu0
    %v1202 = vpop.f32.mrb[0].mxu0
    %1203 = vdwg.mxu0
    %1204 = vmatprep.subr.bf16.mxu0 0
    %1205 = vmatpush1.bf16.xpose.msra.mxu0 %v935
    %1206 = vmatprep.subr.bf16.mxu0 0
    %1207 = vmatpush1.bf16.xpose.msra.mxu0 0
    %1208 = vmatprep.subr.bf16.mxu0 0
    %1209 = vmatpush1.bf16.xpose.msra.mxu0 0
    %1210 = vmatprep.subr.bf16.mxu0 0
    %1211 = vmatpush1.bf16.xpose.msra.mxu0 0
    %1212 = vmatprep.subr.bf16.mxu0 0
    %1213 = vmatpush1.bf16.xpose.msra.mxu0 0
    %1214 = vmatprep.subr.bf16.mxu0 0
    %1215 = vmatpush1.bf16.xpose.msra.mxu0 0
    %1216 = vmatprep.subr.bf16.mxu0 0
    %1217 = vmatpush1.bf16.xpose.msra.mxu0 0
    %1218 = vmatprep.subr.bf16.mxu0 0
    %1219 = vmatpush1.bf16.xpose.msra.mxu0 0
    %1220 = vmatprep.subr.bf16.mxu0 0
    %1221 = vmatpush1.bf16.xpose.msra.mxu0 0
    %1222 = vmatprep.subr.bf16.mxu0 0
    %1223 = vmatpush1.bf16.xpose.msra.mxu0 0
    %1224 = vmatprep.subr.bf16.mxu0 0
    %1225 = vmatpush1.bf16.xpose.msra.mxu0 0
    %1226 = vmatprep.subr.bf16.mxu0 0
    %1227 = vmatpush1.bf16.xpose.msra.mxu0 0
    %1228 = vmatprep.subr.bf16.mxu0 0
    %1229 = vmatpush1.bf16.xpose.msra.mxu0 0
    %1230 = vmatprep.subr.bf16.mxu0 0
    %1231 = vmatpush1.bf16.xpose.msra.mxu0 0
    %1232 = vmatprep.subr.bf16.mxu0 0
    %1233 = vmatpush1.bf16.xpose.msra.mxu0 0
    %1234 = vmatprep.subr.bf16.mxu0 0
    %1235 = vmatpush1.bf16.xpose.msra.mxu0 0
    %1236 = vmatprep.mubr.bf16.mxu0 0
    %1237 = vmatmul.mubr.bf16.gmra.mrb[0].mxu0 %v879
    %v1238 = vpop.f32.mrb[0].mxu0
    %v1239 = vadd.f32 0.0, %v1238
    %v1240 = vpop.f32.mrb[0].mxu0
    %v1241 = vpop.f32.mrb[0].mxu0
    %v1242 = vpop.f32.mrb[0].mxu0
    %1243 = vdwg.mxu0
    %1244 = vmatprep.subr.bf16.mxu0 0
    %1245 = vmatpush1.bf16.xpose.msra.mxu0 %v936
    %1246 = vmatprep.subr.bf16.mxu0 0
    %1247 = vmatpush1.bf16.xpose.msra.mxu0 0
    %1248 = vmatprep.subr.bf16.mxu0 0
    %1249 = vmatpush1.bf16.xpose.msra.mxu0 0
    %1250 = vmatprep.subr.bf16.mxu0 0
    %1251 = vmatpush1.bf16.xpose.msra.mxu0 0
    %1252 = vmatprep.subr.bf16.mxu0 0
    %1253 = vmatpush1.bf16.xpose.msra.mxu0 0
    %1254 = vmatprep.subr.bf16.mxu0 0
    %1255 = vmatpush1.bf16.xpose.msra.mxu0 0
    %1256 = vmatprep.subr.bf16.mxu0 0
    %1257 = vmatpush1.bf16.xpose.msra.mxu0 0
    %1258 = vmatprep.subr.bf16.mxu0 0
    %1259 = vmatpush1.bf16.xpose.msra.mxu0 0
    %1260 = vmatprep.subr.bf16.mxu0 0
    %1261 = vmatpush1.bf16.xpose.msra.mxu0 0
    %1262 = vmatprep.subr.bf16.mxu0 0
    %1263 = vmatpush1.bf16.xpose.msra.mxu0 0
    %1264 = vmatprep.subr.bf16.mxu0 0
    %1265 = vmatpush1.bf16.xpose.msra.mxu0 0
    %1266 = vmatprep.subr.bf16.mxu0 0
    %1267 = vmatpush1.bf16.xpose.msra.mxu0 0
    %1268 = vmatprep.subr.bf16.mxu0 0
    %1269 = vmatpush1.bf16.xpose.msra.mxu0 0
    %1270 = vmatprep.subr.bf16.mxu0 0
    %1271 = vmatpush1.bf16.xpose.msra.mxu0 0
    %1272 = vmatprep.subr.bf16.mxu0 0
    %1273 = vmatpush1.bf16.xpose.msra.mxu0 0
    %1274 = vmatprep.subr.bf16.mxu0 0
    %1275 = vmatpush1.bf16.xpose.msra.mxu0 0
    %1276 = vmatprep.mubr.bf16.mxu0 0
    %1277 = vmatmul.mubr.bf16.gmra.mrb[0].mxu0 %v880
    %v1278 = vpop.f32.mrb[0].mxu0
    %v1279 = vadd.f32 0.0, %v1278
    %v1280 = vpop.f32.mrb[0].mxu0
    %v1281 = vpop.f32.mrb[0].mxu0
    %v1282 = vpop.f32.mrb[0].mxu0
    %1283 = vdwg.mxu0
    %1284 = vmatprep.subr.bf16.mxu0 0
    %1285 = vmatpush1.bf16.xpose.msra.mxu0 %v937
    %1286 = vmatprep.subr.bf16.mxu0 0
    %1287 = vmatpush1.bf16.xpose.msra.mxu0 0
    %1288 = vmatprep.subr.bf16.mxu0 0
    %1289 = vmatpush1.bf16.xpose.msra.mxu0 0
    %1290 = vmatprep.subr.bf16.mxu0 0
    %1291 = vmatpush1.bf16.xpose.msra.mxu0 0
    %1292 = vmatprep.subr.bf16.mxu0 0
    %1293 = vmatpush1.bf16.xpose.msra.mxu0 0
    %1294 = vmatprep.subr.bf16.mxu0 0
    %1295 = vmatpush1.bf16.xpose.msra.mxu0 0
    %1296 = vmatprep.subr.bf16.mxu0 0
    %1297 = vmatpush1.bf16.xpose.msra.mxu0 0
    %1298 = vmatprep.subr.bf16.mxu0 0
    %1299 = vmatpush1.bf16.xpose.msra.mxu0 0
    %1300 = vmatprep.subr.bf16.mxu0 0
    %1301 = vmatpush1.bf16.xpose.msra.mxu0 0
    %1302 = vmatprep.subr.bf16.mxu0 0
    %1303 = vmatpush1.bf16.xpose.msra.mxu0 0
    %1304 = vmatprep.subr.bf16.mxu0 0
    %1305 = vmatpush1.bf16.xpose.msra.mxu0 0
    %1306 = vmatprep.subr.bf16.mxu0 0
    %1307 = vmatpush1.bf16.xpose.msra.mxu0 0
    %1308 = vmatprep.subr.bf16.mxu0 0
    %1309 = vmatpush1.bf16.xpose.msra.mxu0 0
    %1310 = vmatprep.subr.bf16.mxu0 0
    %1311 = vmatpush1.bf16.xpose.msra.mxu0 0
    %1312 = vmatprep.subr.bf16.mxu0 0
    %1313 = vmatpush1.bf16.xpose.msra.mxu0 0
    %1314 = vmatprep.subr.bf16.mxu0 0
    %1315 = vmatpush1.bf16.xpose.msra.mxu0 0
    %1316 = vmatprep.mubr.bf16.mxu0 0
    %1317 = vmatmul.mubr.bf16.gmra.mrb[0].mxu0 %v881
    %v1318 = vpop.f32.mrb[0].mxu0
    %v1319 = vadd.f32 0.0, %v1318
    %v1320 = vpop.f32.mrb[0].mxu0
    %v1321 = vpop.f32.mrb[0].mxu0
    %v1322 = vpop.f32.mrb[0].mxu0
    %1323 = vdwg.mxu0
    %1324 = vmatprep.subr.bf16.mxu0 0
    %1325 = vmatpush1.bf16.xpose.msra.mxu0 %v938
    %1326 = vmatprep.subr.bf16.mxu0 0
    %1327 = vmatpush1.bf16.xpose.msra.mxu0 0
    %1328 = vmatprep.subr.bf16.mxu0 0
    %1329 = vmatpush1.bf16.xpose.msra.mxu0 0
    %1330 = vmatprep.subr.bf16.mxu0 0
    %1331 = vmatpush1.bf16.xpose.msra.mxu0 0
    %1332 = vmatprep.subr.bf16.mxu0 0
    %1333 = vmatpush1.bf16.xpose.msra.mxu0 0
    %1334 = vmatprep.subr.bf16.mxu0 0
    %1335 = vmatpush1.bf16.xpose.msra.mxu0 0
    %1336 = vmatprep.subr.bf16.mxu0 0
    %1337 = vmatpush1.bf16.xpose.msra.mxu0 0
    %1338 = vmatprep.subr.bf16.mxu0 0
    %1339 = vmatpush1.bf16.xpose.msra.mxu0 0
    %1340 = vmatprep.subr.bf16.mxu0 0
    %1341 = vmatpush1.bf16.xpose.msra.mxu0 0
    %1342 = vmatprep.subr.bf16.mxu0 0
    %1343 = vmatpush1.bf16.xpose.msra.mxu0 0
    %1344 = vmatprep.subr.bf16.mxu0 0
    %1345 = vmatpush1.bf16.xpose.msra.mxu0 0
    %1346 = vmatprep.subr.bf16.mxu0 0
    %1347 = vmatpush1.bf16.xpose.msra.mxu0 0
    %1348 = vmatprep.subr.bf16.mxu0 0
    %1349 = vmatpush1.bf16.xpose.msra.mxu0 0
    %1350 = vmatprep.subr.bf16.mxu0 0
    %1351 = vmatpush1.bf16.xpose.msra.mxu0 0
    %1352 = vmatprep.subr.bf16.mxu0 0
    %1353 = vmatpush1.bf16.xpose.msra.mxu0 0
    %1354 = vmatprep.subr.bf16.mxu0 0
    %1355 = vmatpush1.bf16.xpose.msra.mxu0 0
    %1356 = vmatprep.mubr.bf16.mxu0 0
    %1357 = vmatmul.mubr.bf16.gmra.mrb[0].mxu0 %v882
    %v1358 = vpop.f32.mrb[0].mxu0
    %v1359 = vadd.f32 0.0, %v1358
    %v1360 = vpop.f32.mrb[0].mxu0
    %v1361 = vpop.f32.mrb[0].mxu0
    %v1362 = vpop.f32.mrb[0].mxu0
    %1363 = vdwg.mxu0
    %1364 = vmatprep.subr.bf16.mxu0 0
    %1365 = vmatpush1.bf16.xpose.msra.mxu0 %v939
    %1366 = vmatprep.subr.bf16.mxu0 0
    %1367 = vmatpush1.bf16.xpose.msra.mxu0 0
    %1368 = vmatprep.subr.bf16.mxu0 0
    %1369 = vmatpush1.bf16.xpose.msra.mxu0 0
    %1370 = vmatprep.subr.bf16.mxu0 0
    %1371 = vmatpush1.bf16.xpose.msra.mxu0 0
    %1372 = vmatprep.subr.bf16.mxu0 0
    %1373 = vmatpush1.bf16.xpose.msra.mxu0 0
    %1374 = vmatprep.subr.bf16.mxu0 0
    %1375 = vmatpush1.bf16.xpose.msra.mxu0 0
    %1376 = vmatprep.subr.bf16.mxu0 0
    %1377 = vmatpush1.bf16.xpose.msra.mxu0 0
    %1378 = vmatprep.subr.bf16.mxu0 0
    %1379 = vmatpush1.bf16.xpose.msra.mxu0 0
    %1380 = vmatprep.subr.bf16.mxu0 0
    %1381 = vmatpush1.bf16.xpose.msra.mxu0 0
    %1382 = vmatprep.subr.bf16.mxu0 0
    %1383 = vmatpush1.bf16.xpose.msra.mxu0 0
    %1384 = vmatprep.subr.bf16.mxu0 0
    %1385 = vmatpush1.bf16.xpose.msra.mxu0 0
    %1386 = vmatprep.subr.bf16.mxu0 0
    %1387 = vmatpush1.bf16.xpose.msra.mxu0 0
    %1388 = vmatprep.subr.bf16.mxu0 0
    %1389 = vmatpush1.bf16.xpose.msra.mxu0 0
    %1390 = vmatprep.subr.bf16.mxu0 0
    %1391 = vmatpush1.bf16.xpose.msra.mxu0 0
    %1392 = vmatprep.subr.bf16.mxu0 0
    %1393 = vmatpush1.bf16.xpose.msra.mxu0 0
    %1394 = vmatprep.subr.bf16.mxu0 0
    %1395 = vmatpush1.bf16.xpose.msra.mxu0 0
    %1396 = vmatprep.mubr.bf16.mxu0 0
    %1397 = vmatmul.mubr.bf16.gmra.mrb[0].mxu0 %v883
    %v1398 = vpop.f32.mrb[0].mxu0
    %v1399 = vadd.f32 0.0, %v1398
    %v1400 = vpop.f32.mrb[0].mxu0
    %v1401 = vpop.f32.mrb[0].mxu0
    %v1402 = vpop.f32.mrb[0].mxu0
    %1403 = vdwg.mxu0
    %1404 = vmatprep.subr.bf16.mxu0 0
    %1405 = vmatpush1.bf16.xpose.msra.mxu0 %v940
    %1406 = vmatprep.subr.bf16.mxu0 0
    %1407 = vmatpush1.bf16.xpose.msra.mxu0 0
    %1408 = vmatprep.subr.bf16.mxu0 0
    %1409 = vmatpush1.bf16.xpose.msra.mxu0 0
    %1410 = vmatprep.subr.bf16.mxu0 0
    %1411 = vmatpush1.bf16.xpose.msra.mxu0 0
    %1412 = vmatprep.subr.bf16.mxu0 0
    %1413 = vmatpush1.bf16.xpose.msra.mxu0 0
    %1414 = vmatprep.subr.bf16.mxu0 0
    %1415 = vmatpush1.bf16.xpose.msra.mxu0 0
    %1416 = vmatprep.subr.bf16.mxu0 0
    %1417 = vmatpush1.bf16.xpose.msra.mxu0 0
    %1418 = vmatprep.subr.bf16.mxu0 0
    %1419 = vmatpush1.bf16.xpose.msra.mxu0 0
    %1420 = vmatprep.subr.bf16.mxu0 0
    %1421 = vmatpush1.bf16.xpose.msra.mxu0 0
    %1422 = vmatprep.subr.bf16.mxu0 0
    %1423 = vmatpush1.bf16.xpose.msra.mxu0 0
    %1424 = vmatprep.subr.bf16.mxu0 0
    %1425 = vmatpush1.bf16.xpose.msra.mxu0 0
    %1426 = vmatprep.subr.bf16.mxu0 0
    %1427 = vmatpush1.bf16.xpose.msra.mxu0 0
    %1428 = vmatprep.subr.bf16.mxu0 0
    %1429 = vmatpush1.bf16.xpose.msra.mxu0 0
    %1430 = vmatprep.subr.bf16.mxu0 0
    %1431 = vmatpush1.bf16.xpose.msra.mxu0 0
    %1432 = vmatprep.subr.bf16.mxu0 0
    %1433 = vmatpush1.bf16.xpose.msra.mxu0 0
    %1434 = vmatprep.subr.bf16.mxu0 0
    %1435 = vmatpush1.bf16.xpose.msra.mxu0 0
    %1436 = vmatprep.mubr.bf16.mxu0 0
    %1437 = vmatmul.mubr.bf16.gmra.mrb[0].mxu0 %v884
    %v1438 = vpop.f32.mrb[0].mxu0
    %v1439 = vadd.f32 0.0, %v1438
    %v1440 = vpop.f32.mrb[0].mxu0
    %v1441 = vpop.f32.mrb[0].mxu0
    %v1442 = vpop.f32.mrb[0].mxu0
    %1443 = vdwg.mxu0
    %1444 = vmatprep.subr.bf16.mxu0 0
    %1445 = vmatpush1.bf16.xpose.msra.mxu0 %v941
    %1446 = vmatprep.subr.bf16.mxu0 0
    %1447 = vmatpush1.bf16.xpose.msra.mxu0 0
    %1448 = vmatprep.subr.bf16.mxu0 0
    %1449 = vmatpush1.bf16.xpose.msra.mxu0 0
    %1450 = vmatprep.subr.bf16.mxu0 0
    %1451 = vmatpush1.bf16.xpose.msra.mxu0 0
    %1452 = vmatprep.subr.bf16.mxu0 0
    %1453 = vmatpush1.bf16.xpose.msra.mxu0 0
    %1454 = vmatprep.subr.bf16.mxu0 0
    %1455 = vmatpush1.bf16.xpose.msra.mxu0 0
    %1456 = vmatprep.subr.bf16.mxu0 0
    %1457 = vmatpush1.bf16.xpose.msra.mxu0 0
    %1458 = vmatprep.subr.bf16.mxu0 0
    %1459 = vmatpush1.bf16.xpose.msra.mxu0 0
    %1460 = vmatprep.subr.bf16.mxu0 0
    %1461 = vmatpush1.bf16.xpose.msra.mxu0 0
    %1462 = vmatprep.subr.bf16.mxu0 0
    %1463 = vmatpush1.bf16.xpose.msra.mxu0 0
    %1464 = vmatprep.subr.bf16.mxu0 0
    %1465 = vmatpush1.bf16.xpose.msra.mxu0 0
    %1466 = vmatprep.subr.bf16.mxu0 0
    %1467 = vmatpush1.bf16.xpose.msra.mxu0 0
    %1468 = vmatprep.subr.bf16.mxu0 0
    %1469 = vmatpush1.bf16.xpose.msra.mxu0 0
    %1470 = vmatprep.subr.bf16.mxu0 0
    %1471 = vmatpush1.bf16.xpose.msra.mxu0 0
    %1472 = vmatprep.subr.bf16.mxu0 0
    %1473 = vmatpush1.bf16.xpose.msra.mxu0 0
    %1474 = vmatprep.subr.bf16.mxu0 0
    %1475 = vmatpush1.bf16.xpose.msra.mxu0 0
    %1476 = vmatprep.mubr.bf16.mxu0 0
    %1477 = vmatmul.mubr.bf16.gmra.mrb[0].mxu0 %v885
    %v1478 = vpop.f32.mrb[0].mxu0
    %v1479 = vadd.f32 0.0, %v1478
    %v1480 = vpop.f32.mrb[0].mxu0
    %v1481 = vpop.f32.mrb[0].mxu0
    %v1482 = vpop.f32.mrb[0].mxu0
    %1483 = vdwg.mxu0
    %1484 = vmatprep.subr.bf16.mxu0 0
    %1485 = vmatpush1.bf16.xpose.msra.mxu0 %v942
    %1486 = vmatprep.subr.bf16.mxu0 0
    %1487 = vmatpush1.bf16.xpose.msra.mxu0 0
    %1488 = vmatprep.subr.bf16.mxu0 0
    %1489 = vmatpush1.bf16.xpose.msra.mxu0 0
    %1490 = vmatprep.subr.bf16.mxu0 0
    %1491 = vmatpush1.bf16.xpose.msra.mxu0 0
    %1492 = vmatprep.subr.bf16.mxu0 0
    %1493 = vmatpush1.bf16.xpose.msra.mxu0 0
    %1494 = vmatprep.subr.bf16.mxu0 0
    %1495 = vmatpush1.bf16.xpose.msra.mxu0 0
    %1496 = vmatprep.subr.bf16.mxu0 0
    %1497 = vmatpush1.bf16.xpose.msra.mxu0 0
    %1498 = vmatprep.subr.bf16.mxu0 0
    %1499 = vmatpush1.bf16.xpose.msra.mxu0 0
    %1500 = vmatprep.subr.bf16.mxu0 0
    %1501 = vmatpush1.bf16.xpose.msra.mxu0 0
    %1502 = vmatprep.subr.bf16.mxu0 0
    %1503 = vmatpush1.bf16.xpose.msra.mxu0 0
    %1504 = vmatprep.subr.bf16.mxu0 0
    %1505 = vmatpush1.bf16.xpose.msra.mxu0 0
    %1506 = vmatprep.subr.bf16.mxu0 0
    %1507 = vmatpush1.bf16.xpose.msra.mxu0 0
    %1508 = vmatprep.subr.bf16.mxu0 0
    %1509 = vmatpush1.bf16.xpose.msra.mxu0 0
    %1510 = vmatprep.subr.bf16.mxu0 0
    %1511 = vmatpush1.bf16.xpose.msra.mxu0 0
    %1512 = vmatprep.subr.bf16.mxu0 0
    %1513 = vmatpush1.bf16.xpose.msra.mxu0 0
    %1514 = vmatprep.subr.bf16.mxu0 0
    %1515 = vmatpush1.bf16.xpose.msra.mxu0 0
    %1516 = vmatprep.mubr.bf16.mxu0 0
    %1517 = vmatmul.mubr.bf16.gmra.mrb[0].mxu0 %v886
    %v1518 = vpop.f32.mrb[0].mxu0
    %v1519 = vadd.f32 0.0, %v1518
    %v1520 = vpop.f32.mrb[0].mxu0
    %v1521 = vpop.f32.mrb[0].mxu0
    %v1522 = vpop.f32.mrb[0].mxu0
    %1523 = vdwg.mxu0
    %1524 = vmatprep.subr.bf16.mxu0 0
    %1525 = vmatpush1.bf16.xpose.msra.mxu0 %v943
    %1526 = vmatprep.subr.bf16.mxu0 0
    %1527 = vmatpush1.bf16.xpose.msra.mxu0 0
    %1528 = vmatprep.subr.bf16.mxu0 0
    %1529 = vmatpush1.bf16.xpose.msra.mxu0 0
    %1530 = vmatprep.subr.bf16.mxu0 0
    %1531 = vmatpush1.bf16.xpose.msra.mxu0 0
    %1532 = vmatprep.subr.bf16.mxu0 0
    %1533 = vmatpush1.bf16.xpose.msra.mxu0 0
    %1534 = vmatprep.subr.bf16.mxu0 0
    %1535 = vmatpush1.bf16.xpose.msra.mxu0 0
    %1536 = vmatprep.subr.bf16.mxu0 0
    %1537 = vmatpush1.bf16.xpose.msra.mxu0 0
    %1538 = vmatprep.subr.bf16.mxu0 0
    %1539 = vmatpush1.bf16.xpose.msra.mxu0 0
    %1540 = vmatprep.subr.bf16.mxu0 0
    %1541 = vmatpush1.bf16.xpose.msra.mxu0 0
    %1542 = vmatprep.subr.bf16.mxu0 0
    %1543 = vmatpush1.bf16.xpose.msra.mxu0 0
    %1544 = vmatprep.subr.bf16.mxu0 0
    %1545 = vmatpush1.bf16.xpose.msra.mxu0 0
    %1546 = vmatprep.subr.bf16.mxu0 0
    %1547 = vmatpush1.bf16.xpose.msra.mxu0 0
    %1548 = vmatprep.subr.bf16.mxu0 0
    %1549 = vmatpush1.bf16.xpose.msra.mxu0 0
    %1550 = vmatprep.subr.bf16.mxu0 0
    %1551 = vmatpush1.bf16.xpose.msra.mxu0 0
    %1552 = vmatprep.subr.bf16.mxu0 0
    %1553 = vmatpush1.bf16.xpose.msra.mxu0 0
    %1554 = vmatprep.subr.bf16.mxu0 0
    %1555 = vmatpush1.bf16.xpose.msra.mxu0 0
    %1556 = vmatprep.mubr.bf16.mxu0 0
    %1557 = vmatmul.mubr.bf16.gmra.mrb[0].mxu0 %v887
    %v1558 = vpop.f32.mrb[0].mxu0
    %v1559 = vadd.f32 0.0, %v1558
    %v1560 = vpop.f32.mrb[0].mxu0
    %v1561 = vpop.f32.mrb[0].mxu0
    %v1562 = vpop.f32.mrb[0].mxu0
    %1563 = vdwg.mxu0
    %1564 = vmatprep.subr.bf16.mxu0 0
    %1565 = vmatpush1.bf16.xpose.msra.mxu0 %v944
    %1566 = vmatprep.subr.bf16.mxu0 0
    %1567 = vmatpush1.bf16.xpose.msra.mxu0 0
    %1568 = vmatprep.subr.bf16.mxu0 0
    %1569 = vmatpush1.bf16.xpose.msra.mxu0 0
    %1570 = vmatprep.subr.bf16.mxu0 0
    %1571 = vmatpush1.bf16.xpose.msra.mxu0 0
    %1572 = vmatprep.subr.bf16.mxu0 0
    %1573 = vmatpush1.bf16.xpose.msra.mxu0 0
    %1574 = vmatprep.subr.bf16.mxu0 0
    %1575 = vmatpush1.bf16.xpose.msra.mxu0 0
    %1576 = vmatprep.subr.bf16.mxu0 0
    %1577 = vmatpush1.bf16.xpose.msra.mxu0 0
    %1578 = vmatprep.subr.bf16.mxu0 0
    %1579 = vmatpush1.bf16.xpose.msra.mxu0 0
    %1580 = vmatprep.subr.bf16.mxu0 0
    %1581 = vmatpush1.bf16.xpose.msra.mxu0 0
    %1582 = vmatprep.subr.bf16.mxu0 0
    %1583 = vmatpush1.bf16.xpose.msra.mxu0 0
    %1584 = vmatprep.subr.bf16.mxu0 0
    %1585 = vmatpush1.bf16.xpose.msra.mxu0 0
    %1586 = vmatprep.subr.bf16.mxu0 0
    %1587 = vmatpush1.bf16.xpose.msra.mxu0 0
    %1588 = vmatprep.subr.bf16.mxu0 0
    %1589 = vmatpush1.bf16.xpose.msra.mxu0 0
    %1590 = vmatprep.subr.bf16.mxu0 0
    %1591 = vmatpush1.bf16.xpose.msra.mxu0 0
    %1592 = vmatprep.subr.bf16.mxu0 0
    %1593 = vmatpush1.bf16.xpose.msra.mxu0 0
    %1594 = vmatprep.subr.bf16.mxu0 0
    %1595 = vmatpush1.bf16.xpose.msra.mxu0 0
    %1596 = vmatprep.mubr.bf16.mxu0 0
    %1597 = vmatmul.mubr.bf16.gmra.mrb[0].mxu0 %v888
    %v1598 = vpop.f32.mrb[0].mxu0
    %v1599 = vadd.f32 0.0, %v1598
    %v1600 = vpop.f32.mrb[0].mxu0
    %v1601 = vpop.f32.mrb[0].mxu0
    %v1602 = vpop.f32.mrb[0].mxu0
    %1603 = vdwg.mxu0
    %1604 = vmatprep.subr.bf16.mxu0 0
    %1605 = vmatpush1.bf16.xpose.msra.mxu0 %v945
    %1606 = vmatprep.subr.bf16.mxu0 0
    %1607 = vmatpush1.bf16.xpose.msra.mxu0 0
    %1608 = vmatprep.subr.bf16.mxu0 0
    %1609 = vmatpush1.bf16.xpose.msra.mxu0 0
    %1610 = vmatprep.subr.bf16.mxu0 0
    %1611 = vmatpush1.bf16.xpose.msra.mxu0 0
    %1612 = vmatprep.subr.bf16.mxu0 0
    %1613 = vmatpush1.bf16.xpose.msra.mxu0 0
    %1614 = vmatprep.subr.bf16.mxu0 0
    %1615 = vmatpush1.bf16.xpose.msra.mxu0 0
    %1616 = vmatprep.subr.bf16.mxu0 0
    %1617 = vmatpush1.bf16.xpose.msra.mxu0 0
    %1618 = vmatprep.subr.bf16.mxu0 0
    %1619 = vmatpush1.bf16.xpose.msra.mxu0 0
    %1620 = vmatprep.subr.bf16.mxu0 0
    %1621 = vmatpush1.bf16.xpose.msra.mxu0 0
    %1622 = vmatprep.subr.bf16.mxu0 0
    %1623 = vmatpush1.bf16.xpose.msra.mxu0 0
    %1624 = vmatprep.subr.bf16.mxu0 0
    %1625 = vmatpush1.bf16.xpose.msra.mxu0 0
    %1626 = vmatprep.subr.bf16.mxu0 0
    %1627 = vmatpush1.bf16.xpose.msra.mxu0 0
    %1628 = vmatprep.subr.bf16.mxu0 0
    %1629 = vmatpush1.bf16.xpose.msra.mxu0 0
    %1630 = vmatprep.subr.bf16.mxu0 0
    %1631 = vmatpush1.bf16.xpose.msra.mxu0 0
    %1632 = vmatprep.subr.bf16.mxu0 0
    %1633 = vmatpush1.bf16.xpose.msra.mxu0 0
    %1634 = vmatprep.subr.bf16.mxu0 0
    %1635 = vmatpush1.bf16.xpose.msra.mxu0 0
    %1636 = vmatprep.mubr.bf16.mxu0 0
    %1637 = vmatmul.mubr.bf16.gmra.mrb[0].mxu0 %v889
    %v1638 = vpop.f32.mrb[0].mxu0
    %v1639 = vadd.f32 0.0, %v1638
    %v1640 = vpop.f32.mrb[0].mxu0
    %v1641 = vpop.f32.mrb[0].mxu0
    %v1642 = vpop.f32.mrb[0].mxu0
    %1643 = vdwg.mxu0
    %v1644 = vmul.f32 %v1039, 0.088388346
    %v1645 = vmul.f32 %v1079, 0.088388346
    %v1646 = vmul.f32 %v1119, 0.088388346
    %v1647 = vmul.f32 %v1159, 0.088388346
    %v1648 = vmul.f32 %v1199, 0.088388346
    %v1649 = vmul.f32 %v1239, 0.088388346
    %v1650 = vmul.f32 %v1279, 0.088388346
    %v1651 = vmul.f32 %v1319, 0.088388346
    %v1652 = vmul.f32 %v1359, 0.088388346
    %v1653 = vmul.f32 %v1399, 0.088388346
    %v1654 = vmul.f32 %v1439, 0.088388346
    %v1655 = vmul.f32 %v1479, 0.088388346
    %v1656 = vmul.f32 %v1519, 0.088388346
    %v1657 = vmul.f32 %v1559, 0.088388346
    %v1658 = vmul.f32 %v1599, 0.088388346
    %v1659 = vmul.f32 %v1639, 0.088388346
    %v1660 = vsub.f32 1.0, %v1002
    %v1661 = vsub.f32 1.0, %v1003
    %v1664 = vcombine.high %v1660, %v1660
    %v1666 = vunpack.c.l.s4 1966171168
    %v1667 = vunpack.c.0.s8 %v1666
    %v1668 = vlaneseq
    %v1669 = vshrl.u32 %v1668, 7
    %v1670 = vsub.s32 %v1667, %v1669
    %v1671 = vrot.slane %v1660, %v1670
    %v1673 = vunpack.c.l.s4 1966171168
    %v1674 = vunpack.c.0.s8 %v1673
    %v1675 = vlaneseq
    %v1676 = vshrl.u32 %v1675, 7
    %v1677 = vsub.s32 %v1674, %v1676
    %v1678 = vrot.slane %v1664, %v1677
    %v1679 = vcombine.high %v1671, %v1671
    %v1680 = vcombine.high %v1678, %v1678
    %v1682 = vunpack.c.l.s4 1966171168
    %v1683 = vunpack.c.0.s8 %v1682
    %v1684 = vlaneseq
    %v1685 = vshrl.u32 %v1684, 7
    %v1686 = vsub.s32 %v1683, %v1685
    %v1687 = vrot.slane %v1671, %v1686
    %v1689 = vunpack.c.l.s4 1966171168
    %v1690 = vunpack.c.0.s8 %v1689
    %v1691 = vlaneseq
    %v1692 = vshrl.u32 %v1691, 7
    %v1693 = vsub.s32 %v1690, %v1692
    %v1694 = vrot.slane %v1678, %v1693
    %v1696 = vunpack.c.l.s4 1966171168
    %v1697 = vunpack.c.0.s8 %v1696
    %v1698 = vlaneseq
    %v1699 = vshrl.u32 %v1698, 7
    %v1700 = vsub.s32 %v1697, %v1699
    %v1701 = vrot.slane %v1679, %v1700
    %v1703 = vunpack.c.l.s4 1966171168
    %v1704 = vunpack.c.0.s8 %v1703
    %v1705 = vlaneseq
    %v1706 = vshrl.u32 %v1705, 7
    %v1707 = vsub.s32 %v1704, %v1706
    %v1708 = vrot.slane %v1680, %v1707
    %v1709 = vcombine.high %v1687, %v1687
    %v1710 = vcombine.high %v1694, %v1694
    %v1711 = vcombine.high %v1701, %v1701
    %v1712 = vcombine.high %v1708, %v1708
    %v1713 = vcombine.high %v1661, %v1661
    %v1715 = vunpack.c.l.s4 1966171168
    %v1716 = vunpack.c.0.s8 %v1715
    %v1717 = vlaneseq
    %v1718 = vshrl.u32 %v1717, 7
    %v1719 = vsub.s32 %v1716, %v1718
    %v1720 = vrot.slane %v1661, %v1719
    %v1722 = vunpack.c.l.s4 1966171168
    %v1723 = vunpack.c.0.s8 %v1722
    %v1724 = vlaneseq
    %v1725 = vshrl.u32 %v1724, 7
    %v1726 = vsub.s32 %v1723, %v1725
    %v1727 = vrot.slane %v1713, %v1726
    %v1728 = vcombine.high %v1720, %v1720
    %v1729 = vcombine.high %v1727, %v1727
    %v1731 = vunpack.c.l.s4 1966171168
    %v1732 = vunpack.c.0.s8 %v1731
    %v1733 = vlaneseq
    %v1734 = vshrl.u32 %v1733, 7
    %v1735 = vsub.s32 %v1732, %v1734
    %v1736 = vrot.slane %v1720, %v1735
    %v1738 = vunpack.c.l.s4 1966171168
    %v1739 = vunpack.c.0.s8 %v1738
    %v1740 = vlaneseq
    %v1741 = vshrl.u32 %v1740, 7
    %v1742 = vsub.s32 %v1739, %v1741
    %v1743 = vrot.slane %v1727, %v1742
    %v1745 = vunpack.c.l.s4 1966171168
    %v1746 = vunpack.c.0.s8 %v1745
    %v1747 = vlaneseq
    %v1748 = vshrl.u32 %v1747, 7
    %v1749 = vsub.s32 %v1746, %v1748
    %v1750 = vrot.slane %v1728, %v1749
    %v1752 = vunpack.c.l.s4 1966171168
    %v1753 = vunpack.c.0.s8 %v1752
    %v1754 = vlaneseq
    %v1755 = vshrl.u32 %v1754, 7
    %v1756 = vsub.s32 %v1753, %v1755
    %v1757 = vrot.slane %v1729, %v1756
    %v1758 = vcombine.high %v1736, %v1736
    %v1759 = vcombine.high %v1743, %v1743
    %v1760 = vcombine.high %v1750, %v1750
    %v1761 = vcombine.high %v1757, %v1757
    %v1778 = vmul.f32 %v1687, -1e+09
    %v1779 = vmul.f32 %v1701, -1e+09
    %v1780 = vmul.f32 %v1709, -1e+09
    %v1781 = vmul.f32 %v1711, -1e+09
    %v1782 = vmul.f32 %v1694, -1e+09
    %v1783 = vmul.f32 %v1708, -1e+09
    %v1784 = vmul.f32 %v1710, -1e+09
    %v1785 = vmul.f32 %v1712, -1e+09
    %v1786 = vmul.f32 %v1736, -1e+09
    %v1787 = vmul.f32 %v1750, -1e+09
    %v1788 = vmul.f32 %v1758, -1e+09
    %v1789 = vmul.f32 %v1760, -1e+09
    %v1790 = vmul.f32 %v1743, -1e+09
    %v1791 = vmul.f32 %v1757, -1e+09
    %v1792 = vmul.f32 %v1759, -1e+09
    %v1793 = vmul.f32 %v1761, -1e+09
    %v1810 = vlaneseq
    %v1811 = vshrl.u32 %v1810, 7
    %v1812 = vsub.s32 0, %v1811
    %v1813 = vrot.slane %v1778, %v1812
    %v1814 = vlaneseq
    %v1815 = vshrl.u32 %v1814, 7
    %v1816 = vsub.s32 0, %v1815
    %v1817 = vrot.slane %v1779, %v1816
    %v1818 = vlaneseq
    %v1819 = vshrl.u32 %v1818, 7
    %v1820 = vsub.s32 0, %v1819
    %v1821 = vrot.slane %v1780, %v1820
    %v1822 = vlaneseq
    %v1823 = vshrl.u32 %v1822, 7
    %v1824 = vsub.s32 0, %v1823
    %v1825 = vrot.slane %v1781, %v1824
    %v1826 = vlaneseq
    %v1827 = vshrl.u32 %v1826, 7
    %v1828 = vsub.s32 0, %v1827
    %v1829 = vrot.slane %v1782, %v1828
    %v1830 = vlaneseq
    %v1831 = vshrl.u32 %v1830, 7
    %v1832 = vsub.s32 0, %v1831
    %v1833 = vrot.slane %v1783, %v1832
    %v1834 = vlaneseq
    %v1835 = vshrl.u32 %v1834, 7
    %v1836 = vsub.s32 0, %v1835
    %v1837 = vrot.slane %v1784, %v1836
    %v1838 = vlaneseq
    %v1839 = vshrl.u32 %v1838, 7
    %v1840 = vsub.s32 0, %v1839
    %v1841 = vrot.slane %v1785, %v1840
    %v1842 = vlaneseq
    %v1843 = vshrl.u32 %v1842, 7
    %v1844 = vsub.s32 0, %v1843
    %v1845 = vrot.slane %v1786, %v1844
    %v1846 = vlaneseq
    %v1847 = vshrl.u32 %v1846, 7
    %v1848 = vsub.s32 0, %v1847
    %v1849 = vrot.slane %v1787, %v1848
    %v1850 = vlaneseq
    %v1851 = vshrl.u32 %v1850, 7
    %v1852 = vsub.s32 0, %v1851
    %v1853 = vrot.slane %v1788, %v1852
    %v1854 = vlaneseq
    %v1855 = vshrl.u32 %v1854, 7
    %v1856 = vsub.s32 0, %v1855
    %v1857 = vrot.slane %v1789, %v1856
    %v1858 = vlaneseq
    %v1859 = vshrl.u32 %v1858, 7
    %v1860 = vsub.s32 0, %v1859
    %v1861 = vrot.slane %v1790, %v1860
    %v1862 = vlaneseq
    %v1863 = vshrl.u32 %v1862, 7
    %v1864 = vsub.s32 0, %v1863
    %v1865 = vrot.slane %v1791, %v1864
    %v1866 = vlaneseq
    %v1867 = vshrl.u32 %v1866, 7
    %v1868 = vsub.s32 0, %v1867
    %v1869 = vrot.slane %v1792, %v1868
    %v1870 = vlaneseq
    %v1871 = vshrl.u32 %v1870, 7
    %v1872 = vsub.s32 0, %v1871
    %v1873 = vrot.slane %v1793, %v1872
    %v1890 = vadd.f32 %v1644, %v1813
    %v1891 = vadd.f32 %v1645, %v1817
    %v1892 = vadd.f32 %v1646, %v1821
    %v1893 = vadd.f32 %v1647, %v1825
    %v1894 = vadd.f32 %v1648, %v1829
    %v1895 = vadd.f32 %v1649, %v1833
    %v1896 = vadd.f32 %v1650, %v1837
    %v1897 = vadd.f32 %v1651, %v1841
    %v1898 = vadd.f32 %v1652, %v1845
    %v1899 = vadd.f32 %v1653, %v1849
    %v1900 = vadd.f32 %v1654, %v1853
    %v1901 = vadd.f32 %v1655, %v1857
    %v1902 = vadd.f32 %v1656, %v1861
    %v1903 = vadd.f32 %v1657, %v1865
    %v1904 = vadd.f32 %v1658, %v1869
    %v1905 = vadd.f32 %v1659, %v1873
    %vm1906 = vcmask 64512
    %v1907 = vsel %vm1906, %v1890, -inf
    %1908 = vmax.xlane.f32.xlu0 %v1907
    %v1909 = vpop.xlane.xlu0 %1908
    %v1910 = vsel %vm1906, %v1891, -inf
    %1911 = vmax.xlane.f32.xlu0 %v1910
    %v1912 = vpop.xlane.xlu0 %1911
    %v1913 = vsel %vm1906, %v1892, -inf
    %1914 = vmax.xlane.f32.xlu0 %v1913
    %v1915 = vpop.xlane.xlu0 %1914
    %v1916 = vsel %vm1906, %v1893, -inf
    %1917 = vmax.xlane.f32.xlu0 %v1916
    %v1918 = vpop.xlane.xlu0 %1917
    %v1919 = vsel %vm1906, %v1894, -inf
    %1920 = vmax.xlane.f32.xlu0 %v1919
    %v1921 = vpop.xlane.xlu0 %1920
    %v1922 = vsel %vm1906, %v1895, -inf
    %1923 = vmax.xlane.f32.xlu0 %v1922
    %v1924 = vpop.xlane.xlu0 %1923
    %v1925 = vsel %vm1906, %v1896, -inf
    %1926 = vmax.xlane.f32.xlu0 %v1925
    %v1927 = vpop.xlane.xlu0 %1926
    %v1928 = vsel %vm1906, %v1897, -inf
    %1929 = vmax.xlane.f32.xlu0 %v1928
    %v1930 = vpop.xlane.xlu0 %1929
    %v1931 = vsel %vm1906, %v1898, -inf
    %1932 = vmax.xlane.f32.xlu0 %v1931
    %v1933 = vpop.xlane.xlu0 %1932
    %v1934 = vsel %vm1906, %v1899, -inf
    %1935 = vmax.xlane.f32.xlu0 %v1934
    %v1936 = vpop.xlane.xlu0 %1935
    %v1937 = vsel %vm1906, %v1900, -inf
    %1938 = vmax.xlane.f32.xlu0 %v1937
    %v1939 = vpop.xlane.xlu0 %1938
    %v1940 = vsel %vm1906, %v1901, -inf
    %1941 = vmax.xlane.f32.xlu0 %v1940
    %v1942 = vpop.xlane.xlu0 %1941
    %v1943 = vsel %vm1906, %v1902, -inf
    %1944 = vmax.xlane.f32.xlu0 %v1943
    %v1945 = vpop.xlane.xlu0 %1944
    %v1946 = vsel %vm1906, %v1903, -inf
    %1947 = vmax.xlane.f32.xlu0 %v1946
    %v1948 = vpop.xlane.xlu0 %1947
    %v1949 = vsel %vm1906, %v1904, -inf
    %1950 = vmax.xlane.f32.xlu0 %v1949
    %v1951 = vpop.xlane.xlu0 %1950
    %v1952 = vsel %vm1906, %v1905, -inf
    %1953 = vmax.xlane.f32.xlu0 %v1952
    %v1954 = vpop.xlane.xlu0 %1953
    %v1955 = vsub.f32 %v1890, %v1909
    %v1956 = vsub.f32 %v1891, %v1912
    %v1957 = vsub.f32 %v1892, %v1915
    %v1958 = vsub.f32 %v1893, %v1918
    %v1959 = vsub.f32 %v1894, %v1921
    %v1960 = vsub.f32 %v1895, %v1924
    %v1961 = vsub.f32 %v1896, %v1927
    %v1962 = vsub.f32 %v1897, %v1930
    %v1963 = vsub.f32 %v1898, %v1933
    %v1964 = vsub.f32 %v1899, %v1936
    %v1965 = vsub.f32 %v1900, %v1939
    %v1966 = vsub.f32 %v1901, %v1942
    %v1967 = vsub.f32 %v1902, %v1945
    %v1968 = vsub.f32 %v1903, %v1948
    %v1969 = vsub.f32 %v1904, %v1951
    %v1970 = vsub.f32 %v1905, %v1954
    %v1971 = vmul.f32 %v1955, 1.442695
    %v1972 = vpow.pop %v1971
    %v1973 = vmul.f32 %v1956, 1.442695
    %v1974 = vpow.pop %v1973
    %v1975 = vmul.f32 %v1957, 1.442695
    %v1976 = vpow.pop %v1975
    %v1977 = vmul.f32 %v1958, 1.442695
    %v1978 = vpow.pop %v1977
    %v1979 = vmul.f32 %v1959, 1.442695
    %v1980 = vpow.pop %v1979
    %v1981 = vmul.f32 %v1960, 1.442695
    %v1982 = vpow.pop %v1981
    %v1983 = vmul.f32 %v1961, 1.442695
    %v1984 = vpow.pop %v1983
    %v1985 = vmul.f32 %v1962, 1.442695
    %v1986 = vpow.pop %v1985
    %v1987 = vmul.f32 %v1963, 1.442695
    %v1988 = vpow.pop %v1987
    %v1989 = vmul.f32 %v1964, 1.442695
    %v1990 = vpow.pop %v1989
    %v1991 = vmul.f32 %v1965, 1.442695
    %v1992 = vpow.pop %v1991
    %v1993 = vmul.f32 %v1966, 1.442695
    %v1994 = vpow.pop %v1993
    %v1995 = vmul.f32 %v1967, 1.442695
    %v1996 = vpow.pop %v1995
    %v1997 = vmul.f32 %v1968, 1.442695
    %v1998 = vpow.pop %v1997
    %v1999 = vmul.f32 %v1969, 1.442695
    %v2000 = vpow.pop %v1999
    %v2001 = vmul.f32 %v1970, 1.442695
    %v2002 = vpow.pop %v2001
    %v2003 = vsel %vm1906, %v1972, 0.0
    %2004 = vadd.xlane.f32.xlu0 %v2003
    %v2005 = vpop.xlane.xlu0 %2004
    %v2006 = vsel %vm1906, %v1974, 0.0
    %2007 = vadd.xlane.f32.xlu0 %v2006
    %v2008 = vpop.xlane.xlu0 %2007
    %v2009 = vsel %vm1906, %v1976, 0.0
    %2010 = vadd.xlane.f32.xlu0 %v2009
    %v2011 = vpop.xlane.xlu0 %2010
    %v2012 = vsel %vm1906, %v1978, 0.0
    %2013 = vadd.xlane.f32.xlu0 %v2012
    %v2014 = vpop.xlane.xlu0 %2013
    %v2015 = vsel %vm1906, %v1980, 0.0
    %2016 = vadd.xlane.f32.xlu0 %v2015
    %v2017 = vpop.xlane.xlu0 %2016
    %v2018 = vsel %vm1906, %v1982, 0.0
    %2019 = vadd.xlane.f32.xlu0 %v2018
    %v2020 = vpop.xlane.xlu0 %2019
    %v2021 = vsel %vm1906, %v1984, 0.0
    %2022 = vadd.xlane.f32.xlu0 %v2021
    %v2023 = vpop.xlane.xlu0 %2022
    %v2024 = vsel %vm1906, %v1986, 0.0
    %2025 = vadd.xlane.f32.xlu0 %v2024
    %v2026 = vpop.xlane.xlu0 %2025
    %v2027 = vsel %vm1906, %v1988, 0.0
    %2028 = vadd.xlane.f32.xlu0 %v2027
    %v2029 = vpop.xlane.xlu0 %2028
    %v2030 = vsel %vm1906, %v1990, 0.0
    %2031 = vadd.xlane.f32.xlu0 %v2030
    %v2032 = vpop.xlane.xlu0 %2031
    %v2033 = vsel %vm1906, %v1992, 0.0
    %2034 = vadd.xlane.f32.xlu0 %v2033
    %v2035 = vpop.xlane.xlu0 %2034
    %v2036 = vsel %vm1906, %v1994, 0.0
    %2037 = vadd.xlane.f32.xlu0 %v2036
    %v2038 = vpop.xlane.xlu0 %2037
    %v2039 = vsel %vm1906, %v1996, 0.0
    %2040 = vadd.xlane.f32.xlu0 %v2039
    %v2041 = vpop.xlane.xlu0 %2040
    %v2042 = vsel %vm1906, %v1998, 0.0
    %2043 = vadd.xlane.f32.xlu0 %v2042
    %v2044 = vpop.xlane.xlu0 %2043
    %v2045 = vsel %vm1906, %v2000, 0.0
    %2046 = vadd.xlane.f32.xlu0 %v2045
    %v2047 = vpop.xlane.xlu0 %2046
    %v2048 = vsel %vm1906, %v2002, 0.0
    %2049 = vadd.xlane.f32.xlu0 %v2048
    %v2050 = vpop.xlane.xlu0 %2049
    %v2051 = vrcp.pop %v2005
    %v2052 = vrcp.pop %v2008
    %v2053 = vrcp.pop %v2011
    %v2054 = vrcp.pop %v2014
    %v2055 = vrcp.pop %v2017
    %v2056 = vrcp.pop %v2020
    %v2057 = vrcp.pop %v2023
    %v2058 = vrcp.pop %v2026
    %v2059 = vrcp.pop %v2029
    %v2060 = vrcp.pop %v2032
    %v2061 = vrcp.pop %v2035
    %v2062 = vrcp.pop %v2038
    %v2063 = vrcp.pop %v2041
    %v2064 = vrcp.pop %v2044
    %v2065 = vrcp.pop %v2047
    %v2066 = vrcp.pop %v2050
    %v2067 = vmul.f32 %v1972, %v2051
    %v2068 = vmul.f32 %v1974, %v2052
    %v2069 = vmul.f32 %v1976, %v2053
    %v2070 = vmul.f32 %v1978, %v2054
    %v2071 = vmul.f32 %v1980, %v2055
    %v2072 = vmul.f32 %v1982, %v2056
    %v2073 = vmul.f32 %v1984, %v2057
    %v2074 = vmul.f32 %v1986, %v2058
    %v2075 = vmul.f32 %v1988, %v2059
    %v2076 = vmul.f32 %v1990, %v2060
    %v2077 = vmul.f32 %v1992, %v2061
    %v2078 = vmul.f32 %v1994, %v2062
    %v2079 = vmul.f32 %v1996, %v2063
    %v2080 = vmul.f32 %v1998, %v2064
    %v2081 = vmul.f32 %v2000, %v2065
    %v2082 = vmul.f32 %v2002, %v2066
    %v2083 = vpack.c.bf16 %v2067, %v2067
    %v2084 = vpack.c.bf16 %v2068, %v2068
    %v2085 = vpack.c.bf16 %v2069, %v2069
    %v2086 = vpack.c.bf16 %v2070, %v2070
    %v2087 = vpack.c.bf16 %v2071, %v2071
    %v2088 = vpack.c.bf16 %v2072, %v2072
    %v2089 = vpack.c.bf16 %v2073, %v2073
    %v2090 = vpack.c.bf16 %v2074, %v2074
    %v2091 = vpack.c.bf16 %v2075, %v2075
    %v2092 = vpack.c.bf16 %v2076, %v2076
    %v2093 = vpack.c.bf16 %v2077, %v2077
    %v2094 = vpack.c.bf16 %v2078, %v2078
    %v2095 = vpack.c.bf16 %v2079, %v2079
    %v2096 = vpack.c.bf16 %v2080, %v2080
    %v2097 = vpack.c.bf16 %v2081, %v2081
    %v2098 = vpack.c.bf16 %v2082, %v2082
    %v2100 = vsel %vm1906, %v2083, 0
    %vm2102 = vcmask 1043456
    %v2104 = vsel %vm2102, %v986, 0
    %2106 = vmatprep.subr.bf16.mxu0 0
    %2107 = vmatpush1.bf16.msra.mxu0 %v2104
    %2108 = vmatprep.subr.bf16.mxu0 0
    %2109 = vmatpush1.bf16.msra.mxu0 0
    %2110 = vmatprep.subr.bf16.mxu0 0
    %2111 = vmatpush1.bf16.msra.mxu0 0
    %2112 = vmatprep.subr.bf16.mxu0 0
    %2113 = vmatpush1.bf16.msra.mxu0 0
    %2114 = vmatprep.subr.bf16.mxu0 0
    %2115 = vmatpush1.bf16.msra.mxu0 0
    %2116 = vmatprep.subr.bf16.mxu0 0
    %2117 = vmatpush1.bf16.msra.mxu0 0
    %2118 = vmatprep.subr.bf16.mxu0 0
    %2119 = vmatpush1.bf16.msra.mxu0 0
    %2120 = vmatprep.subr.bf16.mxu0 0
    %2121 = vmatpush1.bf16.msra.mxu0 0
    %2122 = vmatprep.subr.bf16.mxu0 0
    %2123 = vmatpush1.bf16.msra.mxu0 0
    %2124 = vmatprep.subr.bf16.mxu0 0
    %2125 = vmatpush1.bf16.msra.mxu0 0
    %2126 = vmatprep.subr.bf16.mxu0 0
    %2127 = vmatpush1.bf16.msra.mxu0 0
    %2128 = vmatprep.subr.bf16.mxu0 0
    %2129 = vmatpush1.bf16.msra.mxu0 0
    %2130 = vmatprep.subr.bf16.mxu0 0
    %2131 = vmatpush1.bf16.msra.mxu0 0
    %2132 = vmatprep.subr.bf16.mxu0 0
    %2133 = vmatpush1.bf16.msra.mxu0 0
    %2134 = vmatprep.subr.bf16.mxu0 0
    %2135 = vmatpush1.bf16.msra.mxu0 0
    %2136 = vmatprep.subr.bf16.mxu0 0
    %2137 = vmatpush1.bf16.msra.mxu0 0
    %2138 = vmatprep.mubr.bf16.mxu0 0
    %2139 = vmatmul.mubr.bf16.gmra.mrb[0].mxu0 %v2100
    %v2140 = vpop.f32.mrb[0].mxu0
    %v2141 = vadd.f32 0.0, %v2140
    %v2142 = vpop.f32.mrb[0].mxu0
    %v2143 = vpop.f32.mrb[0].mxu0
    %v2144 = vpop.f32.mrb[0].mxu0
    %2145 = vdwg.mxu0
    %v2147 = vsel %vm1906, %v2084, 0
    %v2150 = vsel %vm2102, %v987, 0
    %2152 = vmatprep.subr.bf16.mxu0 0
    %2153 = vmatpush1.bf16.msra.mxu0 %v2150
    %2154 = vmatprep.subr.bf16.mxu0 0
    %2155 = vmatpush1.bf16.msra.mxu0 0
    %2156 = vmatprep.subr.bf16.mxu0 0
    %2157 = vmatpush1.bf16.msra.mxu0 0
    %2158 = vmatprep.subr.bf16.mxu0 0
    %2159 = vmatpush1.bf16.msra.mxu0 0
    %2160 = vmatprep.subr.bf16.mxu0 0
    %2161 = vmatpush1.bf16.msra.mxu0 0
    %2162 = vmatprep.subr.bf16.mxu0 0
    %2163 = vmatpush1.bf16.msra.mxu0 0
    %2164 = vmatprep.subr.bf16.mxu0 0
    %2165 = vmatpush1.bf16.msra.mxu0 0
    %2166 = vmatprep.subr.bf16.mxu0 0
    %2167 = vmatpush1.bf16.msra.mxu0 0
    %2168 = vmatprep.subr.bf16.mxu0 0
    %2169 = vmatpush1.bf16.msra.mxu0 0
    %2170 = vmatprep.subr.bf16.mxu0 0
    %2171 = vmatpush1.bf16.msra.mxu0 0
    %2172 = vmatprep.subr.bf16.mxu0 0
    %2173 = vmatpush1.bf16.msra.mxu0 0
    %2174 = vmatprep.subr.bf16.mxu0 0
    %2175 = vmatpush1.bf16.msra.mxu0 0
    %2176 = vmatprep.subr.bf16.mxu0 0
    %2177 = vmatpush1.bf16.msra.mxu0 0
    %2178 = vmatprep.subr.bf16.mxu0 0
    %2179 = vmatpush1.bf16.msra.mxu0 0
    %2180 = vmatprep.subr.bf16.mxu0 0
    %2181 = vmatpush1.bf16.msra.mxu0 0
    %2182 = vmatprep.subr.bf16.mxu0 0
    %2183 = vmatpush1.bf16.msra.mxu0 0
    %2184 = vmatprep.mubr.bf16.mxu0 0
    %2185 = vmatmul.mubr.bf16.gmra.mrb[0].mxu0 %v2147
    %v2186 = vpop.f32.mrb[0].mxu0
    %v2187 = vadd.f32 0.0, %v2186
    %v2188 = vpop.f32.mrb[0].mxu0
    %v2189 = vpop.f32.mrb[0].mxu0
    %v2190 = vpop.f32.mrb[0].mxu0
    %2191 = vdwg.mxu0
    %v2193 = vsel %vm1906, %v2085, 0
    %v2196 = vsel %vm2102, %v988, 0
    %2198 = vmatprep.subr.bf16.mxu0 0
    %2199 = vmatpush1.bf16.msra.mxu0 %v2196
    %2200 = vmatprep.subr.bf16.mxu0 0
    %2201 = vmatpush1.bf16.msra.mxu0 0
    %2202 = vmatprep.subr.bf16.mxu0 0
    %2203 = vmatpush1.bf16.msra.mxu0 0
    %2204 = vmatprep.subr.bf16.mxu0 0
    %2205 = vmatpush1.bf16.msra.mxu0 0
    %2206 = vmatprep.subr.bf16.mxu0 0
    %2207 = vmatpush1.bf16.msra.mxu0 0
    %2208 = vmatprep.subr.bf16.mxu0 0
    %2209 = vmatpush1.bf16.msra.mxu0 0
    %2210 = vmatprep.subr.bf16.mxu0 0
    %2211 = vmatpush1.bf16.msra.mxu0 0
    %2212 = vmatprep.subr.bf16.mxu0 0
    %2213 = vmatpush1.bf16.msra.mxu0 0
    %2214 = vmatprep.subr.bf16.mxu0 0
    %2215 = vmatpush1.bf16.msra.mxu0 0
    %2216 = vmatprep.subr.bf16.mxu0 0
    %2217 = vmatpush1.bf16.msra.mxu0 0
    %2218 = vmatprep.subr.bf16.mxu0 0
    %2219 = vmatpush1.bf16.msra.mxu0 0
    %2220 = vmatprep.subr.bf16.mxu0 0
    %2221 = vmatpush1.bf16.msra.mxu0 0
    %2222 = vmatprep.subr.bf16.mxu0 0
    %2223 = vmatpush1.bf16.msra.mxu0 0
    %2224 = vmatprep.subr.bf16.mxu0 0
    %2225 = vmatpush1.bf16.msra.mxu0 0
    %2226 = vmatprep.subr.bf16.mxu0 0
    %2227 = vmatpush1.bf16.msra.mxu0 0
    %2228 = vmatprep.subr.bf16.mxu0 0
    %2229 = vmatpush1.bf16.msra.mxu0 0
    %2230 = vmatprep.mubr.bf16.mxu0 0
    %2231 = vmatmul.mubr.bf16.gmra.mrb[0].mxu0 %v2193
    %v2232 = vpop.f32.mrb[0].mxu0
    %v2233 = vadd.f32 0.0, %v2232
    %v2234 = vpop.f32.mrb[0].mxu0
    %v2235 = vpop.f32.mrb[0].mxu0
    %v2236 = vpop.f32.mrb[0].mxu0
    %2237 = vdwg.mxu0
    %v2239 = vsel %vm1906, %v2086, 0
    %v2242 = vsel %vm2102, %v989, 0
    %2244 = vmatprep.subr.bf16.mxu0 0
    %2245 = vmatpush1.bf16.msra.mxu0 %v2242
    %2246 = vmatprep.subr.bf16.mxu0 0
    %2247 = vmatpush1.bf16.msra.mxu0 0
    %2248 = vmatprep.subr.bf16.mxu0 0
    %2249 = vmatpush1.bf16.msra.mxu0 0
    %2250 = vmatprep.subr.bf16.mxu0 0
    %2251 = vmatpush1.bf16.msra.mxu0 0
    %2252 = vmatprep.subr.bf16.mxu0 0
    %2253 = vmatpush1.bf16.msra.mxu0 0
    %2254 = vmatprep.subr.bf16.mxu0 0
    %2255 = vmatpush1.bf16.msra.mxu0 0
    %2256 = vmatprep.subr.bf16.mxu0 0
    %2257 = vmatpush1.bf16.msra.mxu0 0
    %2258 = vmatprep.subr.bf16.mxu0 0
    %2259 = vmatpush1.bf16.msra.mxu0 0
    %2260 = vmatprep.subr.bf16.mxu0 0
    %2261 = vmatpush1.bf16.msra.mxu0 0
    %2262 = vmatprep.subr.bf16.mxu0 0
    %2263 = vmatpush1.bf16.msra.mxu0 0
    %2264 = vmatprep.subr.bf16.mxu0 0
    %2265 = vmatpush1.bf16.msra.mxu0 0
    %2266 = vmatprep.subr.bf16.mxu0 0
    %2267 = vmatpush1.bf16.msra.mxu0 0
    %2268 = vmatprep.subr.bf16.mxu0 0
    %2269 = vmatpush1.bf16.msra.mxu0 0
    %2270 = vmatprep.subr.bf16.mxu0 0
    %2271 = vmatpush1.bf16.msra.mxu0 0
    %2272 = vmatprep.subr.bf16.mxu0 0
    %2273 = vmatpush1.bf16.msra.mxu0 0
    %2274 = vmatprep.subr.bf16.mxu0 0
    %2275 = vmatpush1.bf16.msra.mxu0 0
    %2276 = vmatprep.mubr.bf16.mxu0 0
    %2277 = vmatmul.mubr.bf16.gmra.mrb[0].mxu0 %v2239
    %v2278 = vpop.f32.mrb[0].mxu0
    %v2279 = vadd.f32 0.0, %v2278
    %v2280 = vpop.f32.mrb[0].mxu0
    %v2281 = vpop.f32.mrb[0].mxu0
    %v2282 = vpop.f32.mrb[0].mxu0
    %2283 = vdwg.mxu0
    %v2285 = vsel %vm1906, %v2087, 0
    %v2288 = vsel %vm2102, %v990, 0
    %2290 = vmatprep.subr.bf16.mxu0 0
    %2291 = vmatpush1.bf16.msra.mxu0 %v2288
    %2292 = vmatprep.subr.bf16.mxu0 0
    %2293 = vmatpush1.bf16.msra.mxu0 0
    %2294 = vmatprep.subr.bf16.mxu0 0
    %2295 = vmatpush1.bf16.msra.mxu0 0
    %2296 = vmatprep.subr.bf16.mxu0 0
    %2297 = vmatpush1.bf16.msra.mxu0 0
    %2298 = vmatprep.subr.bf16.mxu0 0
    %2299 = vmatpush1.bf16.msra.mxu0 0
    %2300 = vmatprep.subr.bf16.mxu0 0
    %2301 = vmatpush1.bf16.msra.mxu0 0
    %2302 = vmatprep.subr.bf16.mxu0 0
    %2303 = vmatpush1.bf16.msra.mxu0 0
    %2304 = vmatprep.subr.bf16.mxu0 0
    %2305 = vmatpush1.bf16.msra.mxu0 0
    %2306 = vmatprep.subr.bf16.mxu0 0
    %2307 = vmatpush1.bf16.msra.mxu0 0
    %2308 = vmatprep.subr.bf16.mxu0 0
    %2309 = vmatpush1.bf16.msra.mxu0 0
    %2310 = vmatprep.subr.bf16.mxu0 0
    %2311 = vmatpush1.bf16.msra.mxu0 0
    %2312 = vmatprep.subr.bf16.mxu0 0
    %2313 = vmatpush1.bf16.msra.mxu0 0
    %2314 = vmatprep.subr.bf16.mxu0 0
    %2315 = vmatpush1.bf16.msra.mxu0 0
    %2316 = vmatprep.subr.bf16.mxu0 0
    %2317 = vmatpush1.bf16.msra.mxu0 0
    %2318 = vmatprep.subr.bf16.mxu0 0
    %2319 = vmatpush1.bf16.msra.mxu0 0
    %2320 = vmatprep.subr.bf16.mxu0 0
    %2321 = vmatpush1.bf16.msra.mxu0 0
    %2322 = vmatprep.mubr.bf16.mxu0 0
    %2323 = vmatmul.mubr.bf16.gmra.mrb[0].mxu0 %v2285
    %v2324 = vpop.f32.mrb[0].mxu0
    %v2325 = vadd.f32 0.0, %v2324
    %v2326 = vpop.f32.mrb[0].mxu0
    %v2327 = vpop.f32.mrb[0].mxu0
    %v2328 = vpop.f32.mrb[0].mxu0
    %2329 = vdwg.mxu0
    %v2331 = vsel %vm1906, %v2088, 0
    %v2334 = vsel %vm2102, %v991, 0
    %2336 = vmatprep.subr.bf16.mxu0 0
    %2337 = vmatpush1.bf16.msra.mxu0 %v2334
    %2338 = vmatprep.subr.bf16.mxu0 0
    %2339 = vmatpush1.bf16.msra.mxu0 0
    %2340 = vmatprep.subr.bf16.mxu0 0
    %2341 = vmatpush1.bf16.msra.mxu0 0
    %2342 = vmatprep.subr.bf16.mxu0 0
    %2343 = vmatpush1.bf16.msra.mxu0 0
    %2344 = vmatprep.subr.bf16.mxu0 0
    %2345 = vmatpush1.bf16.msra.mxu0 0
    %2346 = vmatprep.subr.bf16.mxu0 0
    %2347 = vmatpush1.bf16.msra.mxu0 0
    %2348 = vmatprep.subr.bf16.mxu0 0
    %2349 = vmatpush1.bf16.msra.mxu0 0
    %2350 = vmatprep.subr.bf16.mxu0 0
    %2351 = vmatpush1.bf16.msra.mxu0 0
    %2352 = vmatprep.subr.bf16.mxu0 0
    %2353 = vmatpush1.bf16.msra.mxu0 0
    %2354 = vmatprep.subr.bf16.mxu0 0
    %2355 = vmatpush1.bf16.msra.mxu0 0
    %2356 = vmatprep.subr.bf16.mxu0 0
    %2357 = vmatpush1.bf16.msra.mxu0 0
    %2358 = vmatprep.subr.bf16.mxu0 0
    %2359 = vmatpush1.bf16.msra.mxu0 0
    %2360 = vmatprep.subr.bf16.mxu0 0
    %2361 = vmatpush1.bf16.msra.mxu0 0
    %2362 = vmatprep.subr.bf16.mxu0 0
    %2363 = vmatpush1.bf16.msra.mxu0 0
    %2364 = vmatprep.subr.bf16.mxu0 0
    %2365 = vmatpush1.bf16.msra.mxu0 0
    %2366 = vmatprep.subr.bf16.mxu0 0
    %2367 = vmatpush1.bf16.msra.mxu0 0
    %2368 = vmatprep.mubr.bf16.mxu0 0
    %2369 = vmatmul.mubr.bf16.gmra.mrb[0].mxu0 %v2331
    %v2370 = vpop.f32.mrb[0].mxu0
    %v2371 = vadd.f32 0.0, %v2370
    %v2372 = vpop.f32.mrb[0].mxu0
    %v2373 = vpop.f32.mrb[0].mxu0
    %v2374 = vpop.f32.mrb[0].mxu0
    %2375 = vdwg.mxu0
    %v2377 = vsel %vm1906, %v2089, 0
    %v2380 = vsel %vm2102, %v992, 0
    %2382 = vmatprep.subr.bf16.mxu0 0
    %2383 = vmatpush1.bf16.msra.mxu0 %v2380
    %2384 = vmatprep.subr.bf16.mxu0 0
    %2385 = vmatpush1.bf16.msra.mxu0 0
    %2386 = vmatprep.subr.bf16.mxu0 0
    %2387 = vmatpush1.bf16.msra.mxu0 0
    %2388 = vmatprep.subr.bf16.mxu0 0
    %2389 = vmatpush1.bf16.msra.mxu0 0
    %2390 = vmatprep.subr.bf16.mxu0 0
    %2391 = vmatpush1.bf16.msra.mxu0 0
    %2392 = vmatprep.subr.bf16.mxu0 0
    %2393 = vmatpush1.bf16.msra.mxu0 0
    %2394 = vmatprep.subr.bf16.mxu0 0
    %2395 = vmatpush1.bf16.msra.mxu0 0
    %2396 = vmatprep.subr.bf16.mxu0 0
    %2397 = vmatpush1.bf16.msra.mxu0 0
    %2398 = vmatprep.subr.bf16.mxu0 0
    %2399 = vmatpush1.bf16.msra.mxu0 0
    %2400 = vmatprep.subr.bf16.mxu0 0
    %2401 = vmatpush1.bf16.msra.mxu0 0
    %2402 = vmatprep.subr.bf16.mxu0 0
    %2403 = vmatpush1.bf16.msra.mxu0 0
    %2404 = vmatprep.subr.bf16.mxu0 0
    %2405 = vmatpush1.bf16.msra.mxu0 0
    %2406 = vmatprep.subr.bf16.mxu0 0
    %2407 = vmatpush1.bf16.msra.mxu0 0
    %2408 = vmatprep.subr.bf16.mxu0 0
    %2409 = vmatpush1.bf16.msra.mxu0 0
    %2410 = vmatprep.subr.bf16.mxu0 0
    %2411 = vmatpush1.bf16.msra.mxu0 0
    %2412 = vmatprep.subr.bf16.mxu0 0
    %2413 = vmatpush1.bf16.msra.mxu0 0
    %2414 = vmatprep.mubr.bf16.mxu0 0
    %2415 = vmatmul.mubr.bf16.gmra.mrb[0].mxu0 %v2377
    %v2416 = vpop.f32.mrb[0].mxu0
    %v2417 = vadd.f32 0.0, %v2416
    %v2418 = vpop.f32.mrb[0].mxu0
    %v2419 = vpop.f32.mrb[0].mxu0
    %v2420 = vpop.f32.mrb[0].mxu0
    %2421 = vdwg.mxu0
    %v2423 = vsel %vm1906, %v2090, 0
    %v2426 = vsel %vm2102, %v993, 0
    %2428 = vmatprep.subr.bf16.mxu0 0
    %2429 = vmatpush1.bf16.msra.mxu0 %v2426
    %2430 = vmatprep.subr.bf16.mxu0 0
    %2431 = vmatpush1.bf16.msra.mxu0 0
    %2432 = vmatprep.subr.bf16.mxu0 0
    %2433 = vmatpush1.bf16.msra.mxu0 0
    %2434 = vmatprep.subr.bf16.mxu0 0
    %2435 = vmatpush1.bf16.msra.mxu0 0
    %2436 = vmatprep.subr.bf16.mxu0 0
    %2437 = vmatpush1.bf16.msra.mxu0 0
    %2438 = vmatprep.subr.bf16.mxu0 0
    %2439 = vmatpush1.bf16.msra.mxu0 0
    %2440 = vmatprep.subr.bf16.mxu0 0
    %2441 = vmatpush1.bf16.msra.mxu0 0
    %2442 = vmatprep.subr.bf16.mxu0 0
    %2443 = vmatpush1.bf16.msra.mxu0 0
    %2444 = vmatprep.subr.bf16.mxu0 0
    %2445 = vmatpush1.bf16.msra.mxu0 0
    %2446 = vmatprep.subr.bf16.mxu0 0
    %2447 = vmatpush1.bf16.msra.mxu0 0
    %2448 = vmatprep.subr.bf16.mxu0 0
    %2449 = vmatpush1.bf16.msra.mxu0 0
    %2450 = vmatprep.subr.bf16.mxu0 0
    %2451 = vmatpush1.bf16.msra.mxu0 0
    %2452 = vmatprep.subr.bf16.mxu0 0
    %2453 = vmatpush1.bf16.msra.mxu0 0
    %2454 = vmatprep.subr.bf16.mxu0 0
    %2455 = vmatpush1.bf16.msra.mxu0 0
    %2456 = vmatprep.subr.bf16.mxu0 0
    %2457 = vmatpush1.bf16.msra.mxu0 0
    %2458 = vmatprep.subr.bf16.mxu0 0
    %2459 = vmatpush1.bf16.msra.mxu0 0
    %2460 = vmatprep.mubr.bf16.mxu0 0
    %2461 = vmatmul.mubr.bf16.gmra.mrb[0].mxu0 %v2423
    %v2462 = vpop.f32.mrb[0].mxu0
    %v2463 = vadd.f32 0.0, %v2462
    %v2464 = vpop.f32.mrb[0].mxu0
    %v2465 = vpop.f32.mrb[0].mxu0
    %v2466 = vpop.f32.mrb[0].mxu0
    %2467 = vdwg.mxu0
    %v2469 = vsel %vm1906, %v2091, 0
    %v2472 = vsel %vm2102, %v994, 0
    %2474 = vmatprep.subr.bf16.mxu0 0
    %2475 = vmatpush1.bf16.msra.mxu0 %v2472
    %2476 = vmatprep.subr.bf16.mxu0 0
    %2477 = vmatpush1.bf16.msra.mxu0 0
    %2478 = vmatprep.subr.bf16.mxu0 0
    %2479 = vmatpush1.bf16.msra.mxu0 0
    %2480 = vmatprep.subr.bf16.mxu0 0
    %2481 = vmatpush1.bf16.msra.mxu0 0
    %2482 = vmatprep.subr.bf16.mxu0 0
    %2483 = vmatpush1.bf16.msra.mxu0 0
    %2484 = vmatprep.subr.bf16.mxu0 0
    %2485 = vmatpush1.bf16.msra.mxu0 0
    %2486 = vmatprep.subr.bf16.mxu0 0
    %2487 = vmatpush1.bf16.msra.mxu0 0
    %2488 = vmatprep.subr.bf16.mxu0 0
    %2489 = vmatpush1.bf16.msra.mxu0 0
    %2490 = vmatprep.subr.bf16.mxu0 0
    %2491 = vmatpush1.bf16.msra.mxu0 0
    %2492 = vmatprep.subr.bf16.mxu0 0
    %2493 = vmatpush1.bf16.msra.mxu0 0
    %2494 = vmatprep.subr.bf16.mxu0 0
    %2495 = vmatpush1.bf16.msra.mxu0 0
    %2496 = vmatprep.subr.bf16.mxu0 0
    %2497 = vmatpush1.bf16.msra.mxu0 0
    %2498 = vmatprep.subr.bf16.mxu0 0
    %2499 = vmatpush1.bf16.msra.mxu0 0
    %2500 = vmatprep.subr.bf16.mxu0 0
    %2501 = vmatpush1.bf16.msra.mxu0 0
    %2502 = vmatprep.subr.bf16.mxu0 0
    %2503 = vmatpush1.bf16.msra.mxu0 0
    %2504 = vmatprep.subr.bf16.mxu0 0
    %2505 = vmatpush1.bf16.msra.mxu0 0
    %2506 = vmatprep.mubr.bf16.mxu0 0
    %2507 = vmatmul.mubr.bf16.gmra.mrb[0].mxu0 %v2469
    %v2508 = vpop.f32.mrb[0].mxu0
    %v2509 = vadd.f32 0.0, %v2508
    %v2510 = vpop.f32.mrb[0].mxu0
    %v2511 = vpop.f32.mrb[0].mxu0
    %v2512 = vpop.f32.mrb[0].mxu0
    %2513 = vdwg.mxu0
    %v2515 = vsel %vm1906, %v2092, 0
    %v2518 = vsel %vm2102, %v995, 0
    %2520 = vmatprep.subr.bf16.mxu0 0
    %2521 = vmatpush1.bf16.msra.mxu0 %v2518
    %2522 = vmatprep.subr.bf16.mxu0 0
    %2523 = vmatpush1.bf16.msra.mxu0 0
    %2524 = vmatprep.subr.bf16.mxu0 0
    %2525 = vmatpush1.bf16.msra.mxu0 0
    %2526 = vmatprep.subr.bf16.mxu0 0
    %2527 = vmatpush1.bf16.msra.mxu0 0
    %2528 = vmatprep.subr.bf16.mxu0 0
    %2529 = vmatpush1.bf16.msra.mxu0 0
    %2530 = vmatprep.subr.bf16.mxu0 0
    %2531 = vmatpush1.bf16.msra.mxu0 0
    %2532 = vmatprep.subr.bf16.mxu0 0
    %2533 = vmatpush1.bf16.msra.mxu0 0
    %2534 = vmatprep.subr.bf16.mxu0 0
    %2535 = vmatpush1.bf16.msra.mxu0 0
    %2536 = vmatprep.subr.bf16.mxu0 0
    %2537 = vmatpush1.bf16.msra.mxu0 0
    %2538 = vmatprep.subr.bf16.mxu0 0
    %2539 = vmatpush1.bf16.msra.mxu0 0
    %2540 = vmatprep.subr.bf16.mxu0 0
    %2541 = vmatpush1.bf16.msra.mxu0 0
    %2542 = vmatprep.subr.bf16.mxu0 0
    %2543 = vmatpush1.bf16.msra.mxu0 0
    %2544 = vmatprep.subr.bf16.mxu0 0
    %2545 = vmatpush1.bf16.msra.mxu0 0
    %2546 = vmatprep.subr.bf16.mxu0 0
    %2547 = vmatpush1.bf16.msra.mxu0 0
    %2548 = vmatprep.subr.bf16.mxu0 0
    %2549 = vmatpush1.bf16.msra.mxu0 0
    %2550 = vmatprep.subr.bf16.mxu0 0
    %2551 = vmatpush1.bf16.msra.mxu0 0
    %2552 = vmatprep.mubr.bf16.mxu0 0
    %2553 = vmatmul.mubr.bf16.gmra.mrb[0].mxu0 %v2515
    %v2554 = vpop.f32.mrb[0].mxu0
    %v2555 = vadd.f32 0.0, %v2554
    %v2556 = vpop.f32.mrb[0].mxu0
    %v2557 = vpop.f32.mrb[0].mxu0
    %v2558 = vpop.f32.mrb[0].mxu0
    %2559 = vdwg.mxu0
    %v2561 = vsel %vm1906, %v2093, 0
    %v2564 = vsel %vm2102, %v996, 0
    %2566 = vmatprep.subr.bf16.mxu0 0
    %2567 = vmatpush1.bf16.msra.mxu0 %v2564
    %2568 = vmatprep.subr.bf16.mxu0 0
    %2569 = vmatpush1.bf16.msra.mxu0 0
    %2570 = vmatprep.subr.bf16.mxu0 0
    %2571 = vmatpush1.bf16.msra.mxu0 0
    %2572 = vmatprep.subr.bf16.mxu0 0
    %2573 = vmatpush1.bf16.msra.mxu0 0
    %2574 = vmatprep.subr.bf16.mxu0 0
    %2575 = vmatpush1.bf16.msra.mxu0 0
    %2576 = vmatprep.subr.bf16.mxu0 0
    %2577 = vmatpush1.bf16.msra.mxu0 0
    %2578 = vmatprep.subr.bf16.mxu0 0
    %2579 = vmatpush1.bf16.msra.mxu0 0
    %2580 = vmatprep.subr.bf16.mxu0 0
    %2581 = vmatpush1.bf16.msra.mxu0 0
    %2582 = vmatprep.subr.bf16.mxu0 0
    %2583 = vmatpush1.bf16.msra.mxu0 0
    %2584 = vmatprep.subr.bf16.mxu0 0
    %2585 = vmatpush1.bf16.msra.mxu0 0
    %2586 = vmatprep.subr.bf16.mxu0 0
    %2587 = vmatpush1.bf16.msra.mxu0 0
    %2588 = vmatprep.subr.bf16.mxu0 0
    %2589 = vmatpush1.bf16.msra.mxu0 0
    %2590 = vmatprep.subr.bf16.mxu0 0
    %2591 = vmatpush1.bf16.msra.mxu0 0
    %2592 = vmatprep.subr.bf16.mxu0 0
    %2593 = vmatpush1.bf16.msra.mxu0 0
    %2594 = vmatprep.subr.bf16.mxu0 0
    %2595 = vmatpush1.bf16.msra.mxu0 0
    %2596 = vmatprep.subr.bf16.mxu0 0
    %2597 = vmatpush1.bf16.msra.mxu0 0
    %2598 = vmatprep.mubr.bf16.mxu0 0
    %2599 = vmatmul.mubr.bf16.gmra.mrb[0].mxu0 %v2561
    %v2600 = vpop.f32.mrb[0].mxu0
    %v2601 = vadd.f32 0.0, %v2600
    %v2602 = vpop.f32.mrb[0].mxu0
    %v2603 = vpop.f32.mrb[0].mxu0
    %v2604 = vpop.f32.mrb[0].mxu0
    %2605 = vdwg.mxu0
    %v2607 = vsel %vm1906, %v2094, 0
    %v2610 = vsel %vm2102, %v997, 0
    %2612 = vmatprep.subr.bf16.mxu0 0
    %2613 = vmatpush1.bf16.msra.mxu0 %v2610
    %2614 = vmatprep.subr.bf16.mxu0 0
    %2615 = vmatpush1.bf16.msra.mxu0 0
    %2616 = vmatprep.subr.bf16.mxu0 0
    %2617 = vmatpush1.bf16.msra.mxu0 0
    %2618 = vmatprep.subr.bf16.mxu0 0
    %2619 = vmatpush1.bf16.msra.mxu0 0
    %2620 = vmatprep.subr.bf16.mxu0 0
    %2621 = vmatpush1.bf16.msra.mxu0 0
    %2622 = vmatprep.subr.bf16.mxu0 0
    %2623 = vmatpush1.bf16.msra.mxu0 0
    %2624 = vmatprep.subr.bf16.mxu0 0
    %2625 = vmatpush1.bf16.msra.mxu0 0
    %2626 = vmatprep.subr.bf16.mxu0 0
    %2627 = vmatpush1.bf16.msra.mxu0 0
    %2628 = vmatprep.subr.bf16.mxu0 0
    %2629 = vmatpush1.bf16.msra.mxu0 0
    %2630 = vmatprep.subr.bf16.mxu0 0
    %2631 = vmatpush1.bf16.msra.mxu0 0
    %2632 = vmatprep.subr.bf16.mxu0 0
    %2633 = vmatpush1.bf16.msra.mxu0 0
    %2634 = vmatprep.subr.bf16.mxu0 0
    %2635 = vmatpush1.bf16.msra.mxu0 0
    %2636 = vmatprep.subr.bf16.mxu0 0
    %2637 = vmatpush1.bf16.msra.mxu0 0
    %2638 = vmatprep.subr.bf16.mxu0 0
    %2639 = vmatpush1.bf16.msra.mxu0 0
    %2640 = vmatprep.subr.bf16.mxu0 0
    %2641 = vmatpush1.bf16.msra.mxu0 0
    %2642 = vmatprep.subr.bf16.mxu0 0
    %2643 = vmatpush1.bf16.msra.mxu0 0
    %2644 = vmatprep.mubr.bf16.mxu0 0
    %2645 = vmatmul.mubr.bf16.gmra.mrb[0].mxu0 %v2607
    %v2646 = vpop.f32.mrb[0].mxu0
    %v2647 = vadd.f32 0.0, %v2646
    %v2648 = vpop.f32.mrb[0].mxu0
    %v2649 = vpop.f32.mrb[0].mxu0
    %v2650 = vpop.f32.mrb[0].mxu0
    %2651 = vdwg.mxu0
    %v2653 = vsel %vm1906, %v2095, 0
    %v2656 = vsel %vm2102, %v998, 0
    %2658 = vmatprep.subr.bf16.mxu0 0
    %2659 = vmatpush1.bf16.msra.mxu0 %v2656
    %2660 = vmatprep.subr.bf16.mxu0 0
    %2661 = vmatpush1.bf16.msra.mxu0 0
    %2662 = vmatprep.subr.bf16.mxu0 0
    %2663 = vmatpush1.bf16.msra.mxu0 0
    %2664 = vmatprep.subr.bf16.mxu0 0
    %2665 = vmatpush1.bf16.msra.mxu0 0
    %2666 = vmatprep.subr.bf16.mxu0 0
    %2667 = vmatpush1.bf16.msra.mxu0 0
    %2668 = vmatprep.subr.bf16.mxu0 0
    %2669 = vmatpush1.bf16.msra.mxu0 0
    %2670 = vmatprep.subr.bf16.mxu0 0
    %2671 = vmatpush1.bf16.msra.mxu0 0
    %2672 = vmatprep.subr.bf16.mxu0 0
    %2673 = vmatpush1.bf16.msra.mxu0 0
    %2674 = vmatprep.subr.bf16.mxu0 0
    %2675 = vmatpush1.bf16.msra.mxu0 0
    %2676 = vmatprep.subr.bf16.mxu0 0
    %2677 = vmatpush1.bf16.msra.mxu0 0
    %2678 = vmatprep.subr.bf16.mxu0 0
    %2679 = vmatpush1.bf16.msra.mxu0 0
    %2680 = vmatprep.subr.bf16.mxu0 0
    %2681 = vmatpush1.bf16.msra.mxu0 0
    %2682 = vmatprep.subr.bf16.mxu0 0
    %2683 = vmatpush1.bf16.msra.mxu0 0
    %2684 = vmatprep.subr.bf16.mxu0 0
    %2685 = vmatpush1.bf16.msra.mxu0 0
    %2686 = vmatprep.subr.bf16.mxu0 0
    %2687 = vmatpush1.bf16.msra.mxu0 0
    %2688 = vmatprep.subr.bf16.mxu0 0
    %2689 = vmatpush1.bf16.msra.mxu0 0
    %2690 = vmatprep.mubr.bf16.mxu0 0
    %2691 = vmatmul.mubr.bf16.gmra.mrb[0].mxu0 %v2653
    %v2692 = vpop.f32.mrb[0].mxu0
    %v2693 = vadd.f32 0.0, %v2692
    %v2694 = vpop.f32.mrb[0].mxu0
    %v2695 = vpop.f32.mrb[0].mxu0
    %v2696 = vpop.f32.mrb[0].mxu0
    %2697 = vdwg.mxu0
    %v2699 = vsel %vm1906, %v2096, 0
    %v2702 = vsel %vm2102, %v999, 0
    %2704 = vmatprep.subr.bf16.mxu0 0
    %2705 = vmatpush1.bf16.msra.mxu0 %v2702
    %2706 = vmatprep.subr.bf16.mxu0 0
    %2707 = vmatpush1.bf16.msra.mxu0 0
    %2708 = vmatprep.subr.bf16.mxu0 0
    %2709 = vmatpush1.bf16.msra.mxu0 0
    %2710 = vmatprep.subr.bf16.mxu0 0
    %2711 = vmatpush1.bf16.msra.mxu0 0
    %2712 = vmatprep.subr.bf16.mxu0 0
    %2713 = vmatpush1.bf16.msra.mxu0 0
    %2714 = vmatprep.subr.bf16.mxu0 0
    %2715 = vmatpush1.bf16.msra.mxu0 0
    %2716 = vmatprep.subr.bf16.mxu0 0
    %2717 = vmatpush1.bf16.msra.mxu0 0
    %2718 = vmatprep.subr.bf16.mxu0 0
    %2719 = vmatpush1.bf16.msra.mxu0 0
    %2720 = vmatprep.subr.bf16.mxu0 0
    %2721 = vmatpush1.bf16.msra.mxu0 0
    %2722 = vmatprep.subr.bf16.mxu0 0
    %2723 = vmatpush1.bf16.msra.mxu0 0
    %2724 = vmatprep.subr.bf16.mxu0 0
    %2725 = vmatpush1.bf16.msra.mxu0 0
    %2726 = vmatprep.subr.bf16.mxu0 0
    %2727 = vmatpush1.bf16.msra.mxu0 0
    %2728 = vmatprep.subr.bf16.mxu0 0
    %2729 = vmatpush1.bf16.msra.mxu0 0
    %2730 = vmatprep.subr.bf16.mxu0 0
    %2731 = vmatpush1.bf16.msra.mxu0 0
    %2732 = vmatprep.subr.bf16.mxu0 0
    %2733 = vmatpush1.bf16.msra.mxu0 0
    %2734 = vmatprep.subr.bf16.mxu0 0
    %2735 = vmatpush1.bf16.msra.mxu0 0
    %2736 = vmatprep.mubr.bf16.mxu0 0
    %2737 = vmatmul.mubr.bf16.gmra.mrb[0].mxu0 %v2699
    %v2738 = vpop.f32.mrb[0].mxu0
    %v2739 = vadd.f32 0.0, %v2738
    %v2740 = vpop.f32.mrb[0].mxu0
    %v2741 = vpop.f32.mrb[0].mxu0
    %v2742 = vpop.f32.mrb[0].mxu0
    %2743 = vdwg.mxu0
    %v2745 = vsel %vm1906, %v2097, 0
    %v2748 = vsel %vm2102, %v1000, 0
    %2750 = vmatprep.subr.bf16.mxu0 0
    %2751 = vmatpush1.bf16.msra.mxu0 %v2748
    %2752 = vmatprep.subr.bf16.mxu0 0
    %2753 = vmatpush1.bf16.msra.mxu0 0
    %2754 = vmatprep.subr.bf16.mxu0 0
    %2755 = vmatpush1.bf16.msra.mxu0 0
    %2756 = vmatprep.subr.bf16.mxu0 0
    %2757 = vmatpush1.bf16.msra.mxu0 0
    %2758 = vmatprep.subr.bf16.mxu0 0
    %2759 = vmatpush1.bf16.msra.mxu0 0
    %2760 = vmatprep.subr.bf16.mxu0 0
    %2761 = vmatpush1.bf16.msra.mxu0 0
    %2762 = vmatprep.subr.bf16.mxu0 0
    %2763 = vmatpush1.bf16.msra.mxu0 0
    %2764 = vmatprep.subr.bf16.mxu0 0
    %2765 = vmatpush1.bf16.msra.mxu0 0
    %2766 = vmatprep.subr.bf16.mxu0 0
    %2767 = vmatpush1.bf16.msra.mxu0 0
    %2768 = vmatprep.subr.bf16.mxu0 0
    %2769 = vmatpush1.bf16.msra.mxu0 0
    %2770 = vmatprep.subr.bf16.mxu0 0
    %2771 = vmatpush1.bf16.msra.mxu0 0
    %2772 = vmatprep.subr.bf16.mxu0 0
    %2773 = vmatpush1.bf16.msra.mxu0 0
    %2774 = vmatprep.subr.bf16.mxu0 0
    %2775 = vmatpush1.bf16.msra.mxu0 0
    %2776 = vmatprep.subr.bf16.mxu0 0
    %2777 = vmatpush1.bf16.msra.mxu0 0
    %2778 = vmatprep.subr.bf16.mxu0 0
    %2779 = vmatpush1.bf16.msra.mxu0 0
    %2780 = vmatprep.subr.bf16.mxu0 0
    %2781 = vmatpush1.bf16.msra.mxu0 0
    %2782 = vmatprep.mubr.bf16.mxu0 0
    %2783 = vmatmul.mubr.bf16.gmra.mrb[0].mxu0 %v2745
    %v2784 = vpop.f32.mrb[0].mxu0
    %v2785 = vadd.f32 0.0, %v2784
    %v2786 = vpop.f32.mrb[0].mxu0
    %v2787 = vpop.f32.mrb[0].mxu0
    %v2788 = vpop.f32.mrb[0].mxu0
    %2789 = vdwg.mxu0
    %v2791 = vsel %vm1906, %v2098, 0
    %v2794 = vsel %vm2102, %v1001, 0
    %2796 = vmatprep.subr.bf16.mxu0 0
    %2797 = vmatpush1.bf16.msra.mxu0 %v2794
    %2798 = vmatprep.subr.bf16.mxu0 0
    %2799 = vmatpush1.bf16.msra.mxu0 0
    %2800 = vmatprep.subr.bf16.mxu0 0
    %2801 = vmatpush1.bf16.msra.mxu0 0
    %2802 = vmatprep.subr.bf16.mxu0 0
    %2803 = vmatpush1.bf16.msra.mxu0 0
    %2804 = vmatprep.subr.bf16.mxu0 0
    %2805 = vmatpush1.bf16.msra.mxu0 0
    %2806 = vmatprep.subr.bf16.mxu0 0
    %2807 = vmatpush1.bf16.msra.mxu0 0
    %2808 = vmatprep.subr.bf16.mxu0 0
    %2809 = vmatpush1.bf16.msra.mxu0 0
    %2810 = vmatprep.subr.bf16.mxu0 0
    %2811 = vmatpush1.bf16.msra.mxu0 0
    %2812 = vmatprep.subr.bf16.mxu0 0
    %2813 = vmatpush1.bf16.msra.mxu0 0
    %2814 = vmatprep.subr.bf16.mxu0 0
    %2815 = vmatpush1.bf16.msra.mxu0 0
    %2816 = vmatprep.subr.bf16.mxu0 0
    %2817 = vmatpush1.bf16.msra.mxu0 0
    %2818 = vmatprep.subr.bf16.mxu0 0
    %2819 = vmatpush1.bf16.msra.mxu0 0
    %2820 = vmatprep.subr.bf16.mxu0 0
    %2821 = vmatpush1.bf16.msra.mxu0 0
    %2822 = vmatprep.subr.bf16.mxu0 0
    %2823 = vmatpush1.bf16.msra.mxu0 0
    %2824 = vmatprep.subr.bf16.mxu0 0
    %2825 = vmatpush1.bf16.msra.mxu0 0
    %2826 = vmatprep.subr.bf16.mxu0 0
    %2827 = vmatpush1.bf16.msra.mxu0 0
    %2828 = vmatprep.mubr.bf16.mxu0 0
    %2829 = vmatmul.mubr.bf16.gmra.mrb[0].mxu0 %v2791
    %v2830 = vpop.f32.mrb[0].mxu0
    %v2831 = vadd.f32 0.0, %v2830
    %v2832 = vpop.f32.mrb[0].mxu0
    %v2833 = vpop.f32.mrb[0].mxu0
    %v2834 = vpop.f32.mrb[0].mxu0
    %2835 = vdwg.mxu0
    %v2836 = vpack.c.bf16 %v2187, %v2141
    %v2837 = vpack.c.bf16 %v2279, %v2233
    %v2838 = vpack.c.bf16 %v2371, %v2325
    %v2839 = vpack.c.bf16 %v2463, %v2417
    %v2840 = vpack.c.bf16 %v2555, %v2509
    %v2841 = vpack.c.bf16 %v2647, %v2601
    %v2842 = vpack.c.bf16 %v2739, %v2693
    %v2843 = vpack.c.bf16 %v2831, %v2785
    %v2844 = vld [vmem:[#allocation5 + $0xc] sm:$0xf]
    %v2845 = vld [vmem:[#allocation5 + $0x34] sm:$0xf]
    %v2846 = vld [vmem:[#allocation5 + $0x5c] sm:$0xf]
    %v2847 = vld [vmem:[#allocation5 + $0x84] sm:$0xf]
    %v2848 = vld [vmem:[#allocation5 + $0xac] sm:$0xf]
    %v2849 = vld [vmem:[#allocation5 + $0xd4] sm:$0xf]
    %v2850 = vld [vmem:[#allocation5 + $0xfc] sm:$0xf]
    %v2851 = vld [vmem:[#allocation5 + $0x124] sm:$0xf]
    %v2852 = vld [vmem:[#allocation5 + $0x14c] sm:$0xf]
    %v2853 = vld [vmem:[#allocation5 + $0x174] sm:$0xf]
    %v2854 = vld [vmem:[#allocation5 + $0x19c] sm:$0xf]
    %v2855 = vld [vmem:[#allocation5 + $0x1c4] sm:$0xf]
    %v2856 = vld [vmem:[#allocation5 + $0x1ec] sm:$0xf]
    %v2857 = vld [vmem:[#allocation5 + $0x214] sm:$0xf]
    %v2858 = vld [vmem:[#allocation5 + $0x23c] sm:$0xf]
    %v2859 = vld [vmem:[#allocation5 + $0x264] sm:$0xf]
    %v2860 = vld [vmem:[%s8 + $0x3] sm:$0x1]
    %v2862 = vlaneseq
    %v2863 = vshrl.u32 %v2862, 7
    %v2864 = vsub.s32 0, %v2863
    %v2865 = vrot.slane %v2860, %v2864
    %v2883 = vunpack.c.l.b16 %v2844
    %v2884 = vunpack.c.l.b16 %v2845
    %v2885 = vunpack.c.l.b16 %v2846
    %v2886 = vunpack.c.l.b16 %v2847
    %v2887 = vunpack.c.l.b16 %v2848
    %v2888 = vunpack.c.l.b16 %v2849
    %v2889 = vunpack.c.l.b16 %v2850
    %v2890 = vunpack.c.l.b16 %v2851
    %v2891 = vunpack.c.l.b16 %v2852
    %v2892 = vunpack.c.l.b16 %v2853
    %v2893 = vunpack.c.l.b16 %v2854
    %v2894 = vunpack.c.l.b16 %v2855
    %v2895 = vunpack.c.l.b16 %v2856
    %v2896 = vunpack.c.l.b16 %v2857
    %v2897 = vunpack.c.l.b16 %v2858
    %v2898 = vunpack.c.l.b16 %v2859
    %v2899 = vpack.c.b16 %v2884, %v2883
    %v2900 = vpack.c.b16 %v2886, %v2885
    %v2901 = vpack.c.b16 %v2888, %v2887
    %v2902 = vpack.c.b16 %v2890, %v2889
    %v2903 = vpack.c.b16 %v2892, %v2891
    %v2904 = vpack.c.b16 %v2894, %v2893
    %v2905 = vpack.c.b16 %v2896, %v2895
    %v2906 = vpack.c.b16 %v2898, %v2897
    %2915 = vmatprep.subr.bf16.mxu0 0
    %2916 = vmatpush1.bf16.msra.mxu0 %v2899
    %2917 = vmatprep.subr.bf16.mxu0 0
    %2918 = vmatpush1.bf16.msra.mxu0 %v2900
    %2919 = vmatprep.subr.bf16.mxu0 0
    %2920 = vmatpush1.bf16.msra.mxu0 %v2901
    %2921 = vmatprep.subr.bf16.mxu0 0
    %2922 = vmatpush1.bf16.msra.mxu0 %v2902
    %2923 = vmatprep.subr.bf16.mxu0 0
    %2924 = vmatpush1.bf16.msra.mxu0 %v2903
    %2925 = vmatprep.subr.bf16.mxu0 0
    %2926 = vmatpush1.bf16.msra.mxu0 %v2904
    %2927 = vmatprep.subr.bf16.mxu0 0
    %2928 = vmatpush1.bf16.msra.mxu0 %v2905
    %2929 = vmatprep.subr.bf16.mxu0 0
    %2930 = vmatpush1.bf16.msra.mxu0 %v2906
    %2931 = vmatprep.subr.bf16.mxu0 0
    %2932 = vmatpush1.bf16.msra.mxu0 0
    %2933 = vmatprep.subr.bf16.mxu0 0
    %2934 = vmatpush1.bf16.msra.mxu0 0
    %2935 = vmatprep.subr.bf16.mxu0 0
    %2936 = vmatpush1.bf16.msra.mxu0 0
    %2937 = vmatprep.subr.bf16.mxu0 0
    %2938 = vmatpush1.bf16.msra.mxu0 0
    %2939 = vmatprep.subr.bf16.mxu0 0
    %2940 = vmatpush1.bf16.msra.mxu0 0
    %2941 = vmatprep.subr.bf16.mxu0 0
    %2942 = vmatpush1.bf16.msra.mxu0 0
    %2943 = vmatprep.subr.bf16.mxu0 0
    %2944 = vmatpush1.bf16.msra.mxu0 0
    %2945 = vmatprep.subr.bf16.mxu0 0
    %2946 = vmatpush1.bf16.msra.mxu0 0
    %2947 = vmatprep.mubr.bf16.mxu0 0
    %2948 = vmatmul.mubr.bf16.gmra.mrb[0].mxu0 %v2836
    %v2949 = vpop.f32.mrb[0].mxu0
    %v2950 = vadd.f32 %v2865, %v2949
    %v2951 = vpop.f32.mrb[0].mxu0
    %v2952 = vpop.f32.mrb[0].mxu0
    %v2953 = vadd.f32 %v2865, %v2952
    %v2954 = vpop.f32.mrb[0].mxu0
    %2955 = vmatprep.mubr.bf16.mxu0 0
    %2956 = vmatmul.mubr.bf16.gmra.mrb[0].mxu0 %v2837
    %v2957 = vpop.f32.mrb[0].mxu0
    %v2958 = vadd.f32 %v2865, %v2957
    %v2959 = vpop.f32.mrb[0].mxu0
    %v2960 = vpop.f32.mrb[0].mxu0
    %v2961 = vadd.f32 %v2865, %v2960
    %v2962 = vpop.f32.mrb[0].mxu0
    %2963 = vmatprep.mubr.bf16.mxu0 0
    %2964 = vmatmul.mubr.bf16.gmra.mrb[0].mxu0 %v2838
    %v2965 = vpop.f32.mrb[0].mxu0
    %v2966 = vadd.f32 %v2865, %v2965
    %v2967 = vpop.f32.mrb[0].mxu0
    %v2968 = vpop.f32.mrb[0].mxu0
    %v2969 = vadd.f32 %v2865, %v2968
    %v2970 = vpop.f32.mrb[0].mxu0
    %2971 = vmatprep.mubr.bf16.mxu0 0
    %2972 = vmatmul.mubr.bf16.gmra.mrb[0].mxu0 %v2839
    %v2973 = vpop.f32.mrb[0].mxu0
    %v2974 = vadd.f32 %v2865, %v2973
    %v2975 = vpop.f32.mrb[0].mxu0
    %v2976 = vpop.f32.mrb[0].mxu0
    %v2977 = vadd.f32 %v2865, %v2976
    %v2978 = vpop.f32.mrb[0].mxu0
    %2979 = vmatprep.mubr.bf16.mxu0 0
    %2980 = vmatmul.mubr.bf16.gmra.mrb[0].mxu0 %v2840
    %v2981 = vpop.f32.mrb[0].mxu0
    %v2982 = vadd.f32 %v2865, %v2981
    %v2983 = vpop.f32.mrb[0].mxu0
    %v2984 = vpop.f32.mrb[0].mxu0
    %v2985 = vadd.f32 %v2865, %v2984
    %v2986 = vpop.f32.mrb[0].mxu0
    %2987 = vmatprep.mubr.bf16.mxu0 0
    %2988 = vmatmul.mubr.bf16.gmra.mrb[0].mxu0 %v2841
    %v2989 = vpop.f32.mrb[0].mxu0
    %v2990 = vadd.f32 %v2865, %v2989
    %v2991 = vpop.f32.mrb[0].mxu0
    %v2992 = vpop.f32.mrb[0].mxu0
    %v2993 = vadd.f32 %v2865, %v2992
    %v2994 = vpop.f32.mrb[0].mxu0
    %2995 = vmatprep.mubr.bf16.mxu0 0
    %2996 = vmatmul.mubr.bf16.gmra.mrb[0].mxu0 %v2842
    %v2997 = vpop.f32.mrb[0].mxu0
    %v2998 = vadd.f32 %v2865, %v2997
    %v2999 = vpop.f32.mrb[0].mxu0
    %v3000 = vpop.f32.mrb[0].mxu0
    %v3001 = vadd.f32 %v2865, %v3000
    %v3002 = vpop.f32.mrb[0].mxu0
    %3003 = vmatprep.mubr.bf16.mxu0 0
    %3004 = vmatmul.mubr.bf16.gmra.mrb[0].mxu0 %v2843
    %v3005 = vpop.f32.mrb[0].mxu0
    %v3006 = vadd.f32 %v2865, %v3005
    %v3007 = vpop.f32.mrb[0].mxu0
    %v3008 = vpop.f32.mrb[0].mxu0
    %v3009 = vadd.f32 %v2865, %v3008
    %v3010 = vpop.f32.mrb[0].mxu0
    %3011 = vdwg.mxu0
    %v3012 = vadd.f32 %v415, %v2950
    %v3013 = vadd.f32 %v416, %v2953
    %v3014 = vadd.f32 %v417, %v2958
    %v3015 = vadd.f32 %v418, %v2961
    %v3016 = vadd.f32 %v419, %v2966
    %v3017 = vadd.f32 %v420, %v2969
    %v3018 = vadd.f32 %v421, %v2974
    %v3019 = vadd.f32 %v422, %v2977
    %v3020 = vadd.f32 %v423, %v2982
    %v3021 = vadd.f32 %v424, %v2985
    %v3022 = vadd.f32 %v425, %v2990
    %v3023 = vadd.f32 %v426, %v2993
    %v3024 = vadd.f32 %v427, %v2998
    %v3025 = vadd.f32 %v428, %v3001
    %v3026 = vadd.f32 %v429, %v3006
    %v3027 = vadd.f32 %v430, %v3009
    %v3028 = vld [vmem:[%s8 + $0x4] sm:$0x1]
    %v3029 = vld [vmem:[%s8 + $0x5] sm:$0x1]
    %3030 = vadd.xlane.f32.xlu0 %v3012
    %v3031 = vpop.xlane.xlu0 %3030
    %3032 = vadd.xlane.f32.xlu0 %v3013
    %v3033 = vpop.xlane.xlu0 %3032
    %3034 = vadd.xlane.f32.xlu0 %v3014
    %v3035 = vpop.xlane.xlu0 %3034
    %3036 = vadd.xlane.f32.xlu0 %v3015
    %v3037 = vpop.xlane.xlu0 %3036
    %3038 = vadd.xlane.f32.xlu0 %v3016
    %v3039 = vpop.xlane.xlu0 %3038
    %3040 = vadd.xlane.f32.xlu0 %v3017
    %v3041 = vpop.xlane.xlu0 %3040
    %3042 = vadd.xlane.f32.xlu0 %v3018
    %v3043 = vpop.xlane.xlu0 %3042
    %3044 = vadd.xlane.f32.xlu0 %v3019
    %v3045 = vpop.xlane.xlu0 %3044
    %3046 = vadd.xlane.f32.xlu0 %v3020
    %v3047 = vpop.xlane.xlu0 %3046
    %3048 = vadd.xlane.f32.xlu0 %v3021
    %v3049 = vpop.xlane.xlu0 %3048
    %3050 = vadd.xlane.f32.xlu0 %v3022
    %v3051 = vpop.xlane.xlu0 %3050
    %3052 = vadd.xlane.f32.xlu0 %v3023
    %v3053 = vpop.xlane.xlu0 %3052
    %3054 = vadd.xlane.f32.xlu0 %v3024
    %v3055 = vpop.xlane.xlu0 %3054
    %3056 = vadd.xlane.f32.xlu0 %v3025
    %v3057 = vpop.xlane.xlu0 %3056
    %3058 = vadd.xlane.f32.xlu0 %v3026
    %v3059 = vpop.xlane.xlu0 %3058
    %3060 = vadd.xlane.f32.xlu0 %v3027
    %v3061 = vpop.xlane.xlu0 %3060
    %v3062 = vrcp.pop 128.0
    %v3063 = vmul.f32 %v3031, %v3062
    %v3064 = vmul.f32 %v3033, %v3062
    %v3065 = vmul.f32 %v3035, %v3062
    %v3066 = vmul.f32 %v3037, %v3062
    %v3067 = vmul.f32 %v3039, %v3062
    %v3068 = vmul.f32 %v3041, %v3062
    %v3069 = vmul.f32 %v3043, %v3062
    %v3070 = vmul.f32 %v3045, %v3062
    %v3071 = vmul.f32 %v3047, %v3062
    %v3072 = vmul.f32 %v3049, %v3062
    %v3073 = vmul.f32 %v3051, %v3062
    %v3074 = vmul.f32 %v3053, %v3062
    %v3075 = vmul.f32 %v3055, %v3062
    %v3076 = vmul.f32 %v3057, %v3062
    %v3077 = vmul.f32 %v3059, %v3062
    %v3078 = vmul.f32 %v3061, %v3062
    %v3079 = vsub.f32 %v3012, %v3063
    %v3080 = vsub.f32 %v3013, %v3064
    %v3081 = vsub.f32 %v3014, %v3065
    %v3082 = vsub.f32 %v3015, %v3066
    %v3083 = vsub.f32 %v3016, %v3067
    %v3084 = vsub.f32 %v3017, %v3068
    %v3085 = vsub.f32 %v3018, %v3069
    %v3086 = vsub.f32 %v3019, %v3070
    %v3087 = vsub.f32 %v3020, %v3071
    %v3088 = vsub.f32 %v3021, %v3072
    %v3089 = vsub.f32 %v3022, %v3073
    %v3090 = vsub.f32 %v3023, %v3074
    %v3091 = vsub.f32 %v3024, %v3075
    %v3092 = vsub.f32 %v3025, %v3076
    %v3093 = vsub.f32 %v3026, %v3077
    %v3094 = vsub.f32 %v3027, %v3078
    %v3095 = vmul.f32 %v3079, %v3079
    %v3096 = vmul.f32 %v3080, %v3080
    %v3097 = vmul.f32 %v3081, %v3081
    %v3098 = vmul.f32 %v3082, %v3082
    %v3099 = vmul.f32 %v3083, %v3083
    %v3100 = vmul.f32 %v3084, %v3084
    %v3101 = vmul.f32 %v3085, %v3085
    %v3102 = vmul.f32 %v3086, %v3086
    %v3103 = vmul.f32 %v3087, %v3087
    %v3104 = vmul.f32 %v3088, %v3088
    %v3105 = vmul.f32 %v3089, %v3089
    %v3106 = vmul.f32 %v3090, %v3090
    %v3107 = vmul.f32 %v3091, %v3091
    %v3108 = vmul.f32 %v3092, %v3092
    %v3109 = vmul.f32 %v3093, %v3093
    %v3110 = vmul.f32 %v3094, %v3094
    %3111 = vadd.xlane.f32.xlu0 %v3095
    %v3112 = vpop.xlane.xlu0 %3111
    %3113 = vadd.xlane.f32.xlu0 %v3096
    %v3114 = vpop.xlane.xlu0 %3113
    %3115 = vadd.xlane.f32.xlu0 %v3097
    %v3116 = vpop.xlane.xlu0 %3115
    %3117 = vadd.xlane.f32.xlu0 %v3098
    %v3118 = vpop.xlane.xlu0 %3117
    %3119 = vadd.xlane.f32.xlu0 %v3099
    %v3120 = vpop.xlane.xlu0 %3119
    %3121 = vadd.xlane.f32.xlu0 %v3100
    %v3122 = vpop.xlane.xlu0 %3121
    %3123 = vadd.xlane.f32.xlu0 %v3101
    %v3124 = vpop.xlane.xlu0 %3123
    %3125 = vadd.xlane.f32.xlu0 %v3102
    %v3126 = vpop.xlane.xlu0 %3125
    %3127 = vadd.xlane.f32.xlu0 %v3103
    %v3128 = vpop.xlane.xlu0 %3127
    %3129 = vadd.xlane.f32.xlu0 %v3104
    %v3130 = vpop.xlane.xlu0 %3129
    %3131 = vadd.xlane.f32.xlu0 %v3105
    %v3132 = vpop.xlane.xlu0 %3131
    %3133 = vadd.xlane.f32.xlu0 %v3106
    %v3134 = vpop.xlane.xlu0 %3133
    %3135 = vadd.xlane.f32.xlu0 %v3107
    %v3136 = vpop.xlane.xlu0 %3135
    %3137 = vadd.xlane.f32.xlu0 %v3108
    %v3138 = vpop.xlane.xlu0 %3137
    %3139 = vadd.xlane.f32.xlu0 %v3109
    %v3140 = vpop.xlane.xlu0 %3139
    %3141 = vadd.xlane.f32.xlu0 %v3110
    %v3142 = vpop.xlane.xlu0 %3141
    %v3143 = vmul.f32 %v3112, %v3062
    %v3144 = vmul.f32 %v3114, %v3062
    %v3145 = vmul.f32 %v3116, %v3062
    %v3146 = vmul.f32 %v3118, %v3062
    %v3147 = vmul.f32 %v3120, %v3062
    %v3148 = vmul.f32 %v3122, %v3062
    %v3149 = vmul.f32 %v3124, %v3062
    %v3150 = vmul.f32 %v3126, %v3062
    %v3151 = vmul.f32 %v3128, %v3062
    %v3152 = vmul.f32 %v3130, %v3062
    %v3153 = vmul.f32 %v3132, %v3062
    %v3154 = vmul.f32 %v3134, %v3062
    %v3155 = vmul.f32 %v3136, %v3062
    %v3156 = vmul.f32 %v3138, %v3062
    %v3157 = vmul.f32 %v3140, %v3062
    %v3158 = vmul.f32 %v3142, %v3062
    %v3159 = vadd.f32 %v3143, 1e-05
    %v3160 = vadd.f32 %v3144, 1e-05
    %v3161 = vadd.f32 %v3145, 1e-05
    %v3162 = vadd.f32 %v3146, 1e-05
    %v3163 = vadd.f32 %v3147, 1e-05
    %v3164 = vadd.f32 %v3148, 1e-05
    %v3165 = vadd.f32 %v3149, 1e-05
    %v3166 = vadd.f32 %v3150, 1e-05
    %v3167 = vadd.f32 %v3151, 1e-05
    %v3168 = vadd.f32 %v3152, 1e-05
    %v3169 = vadd.f32 %v3153, 1e-05
    %v3170 = vadd.f32 %v3154, 1e-05
    %v3171 = vadd.f32 %v3155, 1e-05
    %v3172 = vadd.f32 %v3156, 1e-05
    %v3173 = vadd.f32 %v3157, 1e-05
    %v3174 = vadd.f32 %v3158, 1e-05
    %v3175 = vrsqrt.pop %v3159
    %v3176 = vrsqrt.pop %v3160
    %v3177 = vrsqrt.pop %v3161
    %v3178 = vrsqrt.pop %v3162
    %v3179 = vrsqrt.pop %v3163
    %v3180 = vrsqrt.pop %v3164
    %v3181 = vrsqrt.pop %v3165
    %v3182 = vrsqrt.pop %v3166
    %v3183 = vrsqrt.pop %v3167
    %v3184 = vrsqrt.pop %v3168
    %v3185 = vrsqrt.pop %v3169
    %v3186 = vrsqrt.pop %v3170
    %v3187 = vrsqrt.pop %v3171
    %v3188 = vrsqrt.pop %v3172
    %v3189 = vrsqrt.pop %v3173
    %v3190 = vrsqrt.pop %v3174
    %v3191 = vmul.f32 %v3079, %v3175
    %v3192 = vmul.f32 %v3080, %v3176
    %v3193 = vmul.f32 %v3081, %v3177
    %v3194 = vmul.f32 %v3082, %v3178
    %v3195 = vmul.f32 %v3083, %v3179
    %v3196 = vmul.f32 %v3084, %v3180
    %v3197 = vmul.f32 %v3085, %v3181
    %v3198 = vmul.f32 %v3086, %v3182
    %v3199 = vmul.f32 %v3087, %v3183
    %v3200 = vmul.f32 %v3088, %v3184
    %v3201 = vmul.f32 %v3089, %v3185
    %v3202 = vmul.f32 %v3090, %v3186
    %v3203 = vmul.f32 %v3091, %v3187
    %v3204 = vmul.f32 %v3092, %v3188
    %v3205 = vmul.f32 %v3093, %v3189
    %v3206 = vmul.f32 %v3094, %v3190
    %v3208 = vlaneseq
    %v3209 = vshrl.u32 %v3208, 7
    %v3210 = vsub.s32 0, %v3209
    %v3211 = vrot.slane %v3028, %v3210
    %v3213 = vmul.f32 %v3191, %v3211
    %v3214 = vmul.f32 %v3192, %v3211
    %v3215 = vmul.f32 %v3193, %v3211
    %v3216 = vmul.f32 %v3194, %v3211
    %v3217 = vmul.f32 %v3195, %v3211
    %v3218 = vmul.f32 %v3196, %v3211
    %v3219 = vmul.f32 %v3197, %v3211
    %v3220 = vmul.f32 %v3198, %v3211
    %v3221 = vmul.f32 %v3199, %v3211
    %v3222 = vmul.f32 %v3200, %v3211
    %v3223 = vmul.f32 %v3201, %v3211
    %v3224 = vmul.f32 %v3202, %v3211
    %v3225 = vmul.f32 %v3203, %v3211
    %v3226 = vmul.f32 %v3204, %v3211
    %v3227 = vmul.f32 %v3205, %v3211
    %v3228 = vmul.f32 %v3206, %v3211
    %v3230 = vlaneseq
    %v3231 = vshrl.u32 %v3230, 7
    %v3232 = vsub.s32 0, %v3231
    %v3233 = vrot.slane %v3029, %v3232
    %v3235 = vadd.f32 %v3213, %v3233
    %v3236 = vadd.f32 %v3214, %v3233
    %v3237 = vadd.f32 %v3215, %v3233
    %v3238 = vadd.f32 %v3216, %v3233
    %v3239 = vadd.f32 %v3217, %v3233
    %v3240 = vadd.f32 %v3218, %v3233
    %v3241 = vadd.f32 %v3219, %v3233
    %v3242 = vadd.f32 %v3220, %v3233
    %v3243 = vadd.f32 %v3221, %v3233
    %v3244 = vadd.f32 %v3222, %v3233
    %v3245 = vadd.f32 %v3223, %v3233
    %v3246 = vadd.f32 %v3224, %v3233
    %v3247 = vadd.f32 %v3225, %v3233
    %v3248 = vadd.f32 %v3226, %v3233
    %v3249 = vadd.f32 %v3227, %v3233
    %v3250 = vadd.f32 %v3228, %v3233
    %v3251 = vpack.c.bf16 %v3236, %v3235
    %v3252 = vpack.c.bf16 %v3238, %v3237
    %v3253 = vpack.c.bf16 %v3240, %v3239
    %v3254 = vpack.c.bf16 %v3242, %v3241
    %v3255 = vpack.c.bf16 %v3244, %v3243
    %v3256 = vpack.c.bf16 %v3246, %v3245
    %v3257 = vpack.c.bf16 %v3248, %v3247
    %v3258 = vpack.c.bf16 %v3250, %v3249
    %v3259 = vld [vmem:[#allocation5 + $0x10] sm:$0xff]
    %v3260 = vld [vmem:[#allocation5 + $0x38] sm:$0xff]
    %v3261 = vld [vmem:[#allocation5 + $0x60] sm:$0xff]
    %v3262 = vld [vmem:[#allocation5 + $0x88] sm:$0xff]
    %v3263 = vld [vmem:[#allocation5 + $0xb0] sm:$0xff]
    %v3264 = vld [vmem:[#allocation5 + $0xd8] sm:$0xff]
    %v3265 = vld [vmem:[#allocation5 + $0x100] sm:$0xff]
    %v3266 = vld [vmem:[#allocation5 + $0x128] sm:$0xff]
    %v3267 = vld [vmem:[#allocation5 + $0x150] sm:$0xff]
    %v3268 = vld [vmem:[#allocation5 + $0x178] sm:$0xff]
    %v3269 = vld [vmem:[#allocation5 + $0x1a0] sm:$0xff]
    %v3270 = vld [vmem:[#allocation5 + $0x1c8] sm:$0xff]
    %v3271 = vld [vmem:[#allocation5 + $0x1f0] sm:$0xff]
    %v3272 = vld [vmem:[#allocation5 + $0x218] sm:$0xff]
    %v3273 = vld [vmem:[#allocation5 + $0x240] sm:$0xff]
    %v3274 = vld [vmem:[#allocation5 + $0x268] sm:$0xff]
    %v3275 = vld [vmem:[%s8 + $0x6] sm:$0x3]
    %v3277 = vlaneseq
    %v3278 = vshrl.u32 %v3277, 7
    %v3279 = vsub.s32 0, %v3278
    %v3280 = vrot.slane %v3275, %v3279
    %v3281 = vlaneseq
    %v3282 = vshrl.u32 %v3281, 7
    %v3283 = vsub.s32 1, %v3282
    %v3284 = vrot.slane %v3275, %v3283
    %v3303 = vunpack.c.l.b16 %v3259
    %v3304 = vunpack.c.h.b16 %v3259
    %v3305 = vunpack.c.l.b16 %v3260
    %v3306 = vunpack.c.h.b16 %v3260
    %v3307 = vunpack.c.l.b16 %v3261
    %v3308 = vunpack.c.h.b16 %v3261
    %v3309 = vunpack.c.l.b16 %v3262
    %v3310 = vunpack.c.h.b16 %v3262
    %v3311 = vunpack.c.l.b16 %v3263
    %v3312 = vunpack.c.h.b16 %v3263
    %v3313 = vunpack.c.l.b16 %v3264
    %v3314 = vunpack.c.h.b16 %v3264
    %v3315 = vunpack.c.l.b16 %v3265
    %v3316 = vunpack.c.h.b16 %v3265
    %v3317 = vunpack.c.l.b16 %v3266
    %v3318 = vunpack.c.h.b16 %v3266
    %v3319 = vunpack.c.l.b16 %v3267
    %v3320 = vunpack.c.h.b16 %v3267
    %v3321 = vunpack.c.l.b16 %v3268
    %v3322 = vunpack.c.h.b16 %v3268
    %v3323 = vunpack.c.l.b16 %v3269
    %v3324 = vunpack.c.h.b16 %v3269
    %v3325 = vunpack.c.l.b16 %v3270
    %v3326 = vunpack.c.h.b16 %v3270
    %v3327 = vunpack.c.l.b16 %v3271
    %v3328 = vunpack.c.h.b16 %v3271
    %v3329 = vunpack.c.l.b16 %v3272
    %v3330 = vunpack.c.h.b16 %v3272
    %v3331 = vunpack.c.l.b16 %v3273
    %v3332 = vunpack.c.h.b16 %v3273
    %v3333 = vunpack.c.l.b16 %v3274
    %v3334 = vunpack.c.h.b16 %v3274
    %v3335 = vpack.c.b16 %v3305, %v3303
    %v3336 = vpack.c.b16 %v3306, %v3304
    %v3337 = vpack.c.b16 %v3309, %v3307
    %v3338 = vpack.c.b16 %v3310, %v3308
    %v3339 = vpack.c.b16 %v3313, %v3311
    %v3340 = vpack.c.b16 %v3314, %v3312
    %v3341 = vpack.c.b16 %v3317, %v3315
    %v3342 = vpack.c.b16 %v3318, %v3316
    %v3343 = vpack.c.b16 %v3321, %v3319
    %v3344 = vpack.c.b16 %v3322, %v3320
    %v3345 = vpack.c.b16 %v3325, %v3323
    %v3346 = vpack.c.b16 %v3326, %v3324
    %v3347 = vpack.c.b16 %v3329, %v3327
    %v3348 = vpack.c.b16 %v3330, %v3328
    %v3349 = vpack.c.b16 %v3333, %v3331
    %v3350 = vpack.c.b16 %v3334, %v3332
    %3367 = vmatprep.subr.bf16.mxu0 %v3336
    %3368 = vmatpush1.bf16.msra.mxu0 %v3335
    %3369 = vmatprep.subr.bf16.mxu0 %v3338
    %3370 = vmatpush1.bf16.msra.mxu0 %v3337
    %3371 = vmatprep.subr.bf16.mxu0 %v3340
    %3372 = vmatpush1.bf16.msra.mxu0 %v3339
    %3373 = vmatprep.subr.bf16.mxu0 %v3342
    %3374 = vmatpush1.bf16.msra.mxu0 %v3341
    %3375 = vmatprep.subr.bf16.mxu0 %v3344
    %3376 = vmatpush1.bf16.msra.mxu0 %v3343
    %3377 = vmatprep.subr.bf16.mxu0 %v3346
    %3378 = vmatpush1.bf16.msra.mxu0 %v3345
    %3379 = vmatprep.subr.bf16.mxu0 %v3348
    %3380 = vmatpush1.bf16.msra.mxu0 %v3347
    %3381 = vmatprep.subr.bf16.mxu0 %v3350
    %3382 = vmatpush1.bf16.msra.mxu0 %v3349
    %3383 = vmatprep.subr.bf16.mxu0 0
    %3384 = vmatpush1.bf16.msra.mxu0 0
    %3385 = vmatprep.subr.bf16.mxu0 0
    %3386 = vmatpush1.bf16.msra.mxu0 0
    %3387 = vmatprep.subr.bf16.mxu0 0
    %3388 = vmatpush1.bf16.msra.mxu0 0
    %3389 = vmatprep.subr.bf16.mxu0 0
    %3390 = vmatpush1.bf16.msra.mxu0 0
    %3391 = vmatprep.subr.bf16.mxu0 0
    %3392 = vmatpush1.bf16.msra.mxu0 0
    %3393 = vmatprep.subr.bf16.mxu0 0
    %3394 = vmatpush1.bf16.msra.mxu0 0
    %3395 = vmatprep.subr.bf16.mxu0 0
    %3396 = vmatpush1.bf16.msra.mxu0 0
    %3397 = vmatprep.subr.bf16.mxu0 0
    %3398 = vmatpush1.bf16.msra.mxu0 0
    %3399 = vmatprep.mubr.bf16.mxu0 0
    %3400 = vmatmul.mubr.bf16.gmra.mrb[0].mxu0 %v3251
    %v3401 = vpop.f32.mrb[0].mxu0
    %v3402 = vadd.f32 %v3280, %v3401
    %v3403 = vpop.f32.mrb[0].mxu0
    %v3404 = vadd.f32 %v3284, %v3403
    %v3405 = vpop.f32.mrb[0].mxu0
    %v3406 = vadd.f32 %v3280, %v3405
    %v3407 = vpop.f32.mrb[0].mxu0
    %v3408 = vadd.f32 %v3284, %v3407
    %3409 = vmatprep.mubr.bf16.mxu0 0
    %3410 = vmatmul.mubr.bf16.gmra.mrb[0].mxu0 %v3252
    %v3411 = vpop.f32.mrb[0].mxu0
    %v3412 = vadd.f32 %v3280, %v3411
    %v3413 = vpop.f32.mrb[0].mxu0
    %v3414 = vadd.f32 %v3284, %v3413
    %v3415 = vpop.f32.mrb[0].mxu0
    %v3416 = vadd.f32 %v3280, %v3415
    %v3417 = vpop.f32.mrb[0].mxu0
    %v3418 = vadd.f32 %v3284, %v3417
    %3419 = vmatprep.mubr.bf16.mxu0 0
    %3420 = vmatmul.mubr.bf16.gmra.mrb[0].mxu0 %v3253
    %v3421 = vpop.f32.mrb[0].mxu0
    %v3422 = vadd.f32 %v3280, %v3421
    %v3423 = vpop.f32.mrb[0].mxu0
    %v3424 = vadd.f32 %v3284, %v3423
    %v3425 = vpop.f32.mrb[0].mxu0
    %v3426 = vadd.f32 %v3280, %v3425
    %v3427 = vpop.f32.mrb[0].mxu0
    %v3428 = vadd.f32 %v3284, %v3427
    %3429 = vmatprep.mubr.bf16.mxu0 0
    %3430 = vmatmul.mubr.bf16.gmra.mrb[0].mxu0 %v3254
    %v3431 = vpop.f32.mrb[0].mxu0
    %v3432 = vadd.f32 %v3280, %v3431
    %v3433 = vpop.f32.mrb[0].mxu0
    %v3434 = vadd.f32 %v3284, %v3433
    %v3435 = vpop.f32.mrb[0].mxu0
    %v3436 = vadd.f32 %v3280, %v3435
    %v3437 = vpop.f32.mrb[0].mxu0
    %v3438 = vadd.f32 %v3284, %v3437
    %3439 = vmatprep.mubr.bf16.mxu0 0
    %3440 = vmatmul.mubr.bf16.gmra.mrb[0].mxu0 %v3255
    %v3441 = vpop.f32.mrb[0].mxu0
    %v3442 = vadd.f32 %v3280, %v3441
    %v3443 = vpop.f32.mrb[0].mxu0
    %v3444 = vadd.f32 %v3284, %v3443
    %v3445 = vpop.f32.mrb[0].mxu0
    %v3446 = vadd.f32 %v3280, %v3445
    %v3447 = vpop.f32.mrb[0].mxu0
    %v3448 = vadd.f32 %v3284, %v3447
    %3449 = vmatprep.mubr.bf16.mxu0 0
    %3450 = vmatmul.mubr.bf16.gmra.mrb[0].mxu0 %v3256
    %v3451 = vpop.f32.mrb[0].mxu0
    %v3452 = vadd.f32 %v3280, %v3451
    %v3453 = vpop.f32.mrb[0].mxu0
    %v3454 = vadd.f32 %v3284, %v3453
    %v3455 = vpop.f32.mrb[0].mxu0
    %v3456 = vadd.f32 %v3280, %v3455
    %v3457 = vpop.f32.mrb[0].mxu0
    %v3458 = vadd.f32 %v3284, %v3457
    %3459 = vmatprep.mubr.bf16.mxu0 0
    %3460 = vmatmul.mubr.bf16.gmra.mrb[0].mxu0 %v3257
    %v3461 = vpop.f32.mrb[0].mxu0
    %v3462 = vadd.f32 %v3280, %v3461
    %v3463 = vpop.f32.mrb[0].mxu0
    %v3464 = vadd.f32 %v3284, %v3463
    %v3465 = vpop.f32.mrb[0].mxu0
    %v3466 = vadd.f32 %v3280, %v3465
    %v3467 = vpop.f32.mrb[0].mxu0
    %v3468 = vadd.f32 %v3284, %v3467
    %3469 = vmatprep.mubr.bf16.mxu0 0
    %3470 = vmatmul.mubr.bf16.gmra.mrb[0].mxu0 %v3258
    %v3471 = vpop.f32.mrb[0].mxu0
    %v3472 = vadd.f32 %v3280, %v3471
    %v3473 = vpop.f32.mrb[0].mxu0
    %v3474 = vadd.f32 %v3284, %v3473
    %v3475 = vpop.f32.mrb[0].mxu0
    %v3476 = vadd.f32 %v3280, %v3475
    %v3477 = vpop.f32.mrb[0].mxu0
    %v3478 = vadd.f32 %v3284, %v3477
    %3479 = vdwg.mxu0
    %v3480 = vmax.f32 %v3402, 0.0
    %v3481 = vmax.f32 %v3404, 0.0
    %v3482 = vmax.f32 %v3406, 0.0
    %v3483 = vmax.f32 %v3408, 0.0
    %v3484 = vmax.f32 %v3412, 0.0
    %v3485 = vmax.f32 %v3414, 0.0
    %v3486 = vmax.f32 %v3416, 0.0
    %v3487 = vmax.f32 %v3418, 0.0
    %v3488 = vmax.f32 %v3422, 0.0
    %v3489 = vmax.f32 %v3424, 0.0
    %v3490 = vmax.f32 %v3426, 0.0
    %v3491 = vmax.f32 %v3428, 0.0
    %v3492 = vmax.f32 %v3432, 0.0
    %v3493 = vmax.f32 %v3434, 0.0
    %v3494 = vmax.f32 %v3436, 0.0
    %v3495 = vmax.f32 %v3438, 0.0
    %v3496 = vmax.f32 %v3442, 0.0
    %v3497 = vmax.f32 %v3444, 0.0
    %v3498 = vmax.f32 %v3446, 0.0
    %v3499 = vmax.f32 %v3448, 0.0
    %v3500 = vmax.f32 %v3452, 0.0
    %v3501 = vmax.f32 %v3454, 0.0
    %v3502 = vmax.f32 %v3456, 0.0
    %v3503 = vmax.f32 %v3458, 0.0
    %v3504 = vmax.f32 %v3462, 0.0
    %v3505 = vmax.f32 %v3464, 0.0
    %v3506 = vmax.f32 %v3466, 0.0
    %v3507 = vmax.f32 %v3468, 0.0
    %v3508 = vmax.f32 %v3472, 0.0
    %v3509 = vmax.f32 %v3474, 0.0
    %v3510 = vmax.f32 %v3476, 0.0
    %v3511 = vmax.f32 %v3478, 0.0
    %v3512 = vpack.c.bf16 %v3482, %v3480
    %v3513 = vpack.c.bf16 %v3483, %v3481
    %v3514 = vpack.c.bf16 %v3486, %v3484
    %v3515 = vpack.c.bf16 %v3487, %v3485
    %v3516 = vpack.c.bf16 %v3490, %v3488
    %v3517 = vpack.c.bf16 %v3491, %v3489
    %v3518 = vpack.c.bf16 %v3494, %v3492
    %v3519 = vpack.c.bf16 %v3495, %v3493
    %v3520 = vpack.c.bf16 %v3498, %v3496
    %v3521 = vpack.c.bf16 %v3499, %v3497
    %v3522 = vpack.c.bf16 %v3502, %v3500
    %v3523 = vpack.c.bf16 %v3503, %v3501
    %v3524 = vpack.c.bf16 %v3506, %v3504
    %v3525 = vpack.c.bf16 %v3507, %v3505
    %v3526 = vpack.c.bf16 %v3510, %v3508
    %v3527 = vpack.c.bf16 %v3511, %v3509
    %v3528 = vld [vmem:[%s5] sm:$0xf]
    %v3529 = vld [vmem:[%s5 + $0x4] sm:$0xf]
    %v3530 = vld [vmem:[%s5 + $0x8] sm:$0xf]
    %v3531 = vld [vmem:[%s5 + $0xc] sm:$0xf]
    %v3532 = vld [vmem:[%s5 + $0x10] sm:$0xf]
    %v3533 = vld [vmem:[%s5 + $0x14] sm:$0xf]
    %v3534 = vld [vmem:[%s5 + $0x18] sm:$0xf]
    %v3535 = vld [vmem:[%s5 + $0x1c] sm:$0xf]
    %v3536 = vld [vmem:[%s5 + $0x20] sm:$0xf]
    %v3537 = vld [vmem:[%s5 + $0x24] sm:$0xf]
    %v3538 = vld [vmem:[%s5 + $0x28] sm:$0xf]
    %v3539 = vld [vmem:[%s5 + $0x2c] sm:$0xf]
    %v3540 = vld [vmem:[%s5 + $0x30] sm:$0xf]
    %v3541 = vld [vmem:[%s5 + $0x34] sm:$0xf]
    %v3542 = vld [vmem:[%s5 + $0x38] sm:$0xf]
    %v3543 = vld [vmem:[%s5 + $0x3c] sm:$0xf]
    %v3544 = vld [vmem:[%s5 + $0x40] sm:$0xf]
    %v3545 = vld [vmem:[%s5 + $0x44] sm:$0xf]
    %v3546 = vld [vmem:[%s5 + $0x48] sm:$0xf]
    %v3547 = vld [vmem:[%s5 + $0x4c] sm:$0xf]
    %v3548 = vld [vmem:[%s5 + $0x50] sm:$0xf]
    %v3549 = vld [vmem:[%s5 + $0x54] sm:$0xf]
    %v3550 = vld [vmem:[%s5 + $0x58] sm:$0xf]
    %v3551 = vld [vmem:[%s5 + $0x5c] sm:$0xf]
    %v3552 = vld [vmem:[%s5 + $0x60] sm:$0xf]
    %v3553 = vld [vmem:[%s5 + $0x64] sm:$0xf]
    %v3554 = vld [vmem:[%s5 + $0x68] sm:$0xf]
    %v3555 = vld [vmem:[%s5 + $0x6c] sm:$0xf]
    %v3556 = vld [vmem:[%s5 + $0x70] sm:$0xf]
    %v3557 = vld [vmem:[%s5 + $0x74] sm:$0xf]
    %v3558 = vld [vmem:[%s5 + $0x78] sm:$0xf]
    %v3559 = vld [vmem:[%s5 + $0x7c] sm:$0xf]
    %v3560 = vld [vmem:[%s8 + $0x8] sm:$0x1]
    %v3562 = vlaneseq
    %v3563 = vshrl.u32 %v3562, 7
    %v3564 = vsub.s32 0, %v3563
    %v3565 = vrot.slane %v3560, %v3564
    %v3599 = vunpack.c.l.b16 %v3528
    %v3600 = vunpack.c.l.b16 %v3529
    %v3601 = vunpack.c.l.b16 %v3530
    %v3602 = vunpack.c.l.b16 %v3531
    %v3603 = vunpack.c.l.b16 %v3532
    %v3604 = vunpack.c.l.b16 %v3533
    %v3605 = vunpack.c.l.b16 %v3534
    %v3606 = vunpack.c.l.b16 %v3535
    %v3607 = vunpack.c.l.b16 %v3536
    %v3608 = vunpack.c.l.b16 %v3537
    %v3609 = vunpack.c.l.b16 %v3538
    %v3610 = vunpack.c.l.b16 %v3539
    %v3611 = vunpack.c.l.b16 %v3540
    %v3612 = vunpack.c.l.b16 %v3541
    %v3613 = vunpack.c.l.b16 %v3542
    %v3614 = vunpack.c.l.b16 %v3543
    %v3615 = vunpack.c.l.b16 %v3544
    %v3616 = vunpack.c.l.b16 %v3545
    %v3617 = vunpack.c.l.b16 %v3546
    %v3618 = vunpack.c.l.b16 %v3547
    %v3619 = vunpack.c.l.b16 %v3548
    %v3620 = vunpack.c.l.b16 %v3549
    %v3621 = vunpack.c.l.b16 %v3550
    %v3622 = vunpack.c.l.b16 %v3551
    %v3623 = vunpack.c.l.b16 %v3552
    %v3624 = vunpack.c.l.b16 %v3553
    %v3625 = vunpack.c.l.b16 %v3554
    %v3626 = vunpack.c.l.b16 %v3555
    %v3627 = vunpack.c.l.b16 %v3556
    %v3628 = vunpack.c.l.b16 %v3557
    %v3629 = vunpack.c.l.b16 %v3558
    %v3630 = vunpack.c.l.b16 %v3559
    %v3631 = vpack.c.b16 %v3600, %v3599
    %v3632 = vpack.c.b16 %v3602, %v3601
    %v3633 = vpack.c.b16 %v3604, %v3603
    %v3634 = vpack.c.b16 %v3606, %v3605
    %v3635 = vpack.c.b16 %v3608, %v3607
    %v3636 = vpack.c.b16 %v3610, %v3609
    %v3637 = vpack.c.b16 %v3612, %v3611
    %v3638 = vpack.c.b16 %v3614, %v3613
    %v3639 = vpack.c.b16 %v3616, %v3615
    %v3640 = vpack.c.b16 %v3618, %v3617
    %v3641 = vpack.c.b16 %v3620, %v3619
    %v3642 = vpack.c.b16 %v3622, %v3621
    %v3643 = vpack.c.b16 %v3624, %v3623
    %v3644 = vpack.c.b16 %v3626, %v3625
    %v3645 = vpack.c.b16 %v3628, %v3627
    %v3646 = vpack.c.b16 %v3630, %v3629
    %3663 = vmatprep.subr.bf16.mxu0 0
    %3664 = vmatpush1.bf16.msra.mxu0 %v3631
    %3665 = vmatprep.subr.bf16.mxu0 0
    %3666 = vmatpush1.bf16.msra.mxu0 %v3632
    %3667 = vmatprep.subr.bf16.mxu0 0
    %3668 = vmatpush1.bf16.msra.mxu0 %v3633
    %3669 = vmatprep.subr.bf16.mxu0 0
    %3670 = vmatpush1.bf16.msra.mxu0 %v3634
    %3671 = vmatprep.subr.bf16.mxu0 0
    %3672 = vmatpush1.bf16.msra.mxu0 %v3635
    %3673 = vmatprep.subr.bf16.mxu0 0
    %3674 = vmatpush1.bf16.msra.mxu0 %v3636
    %3675 = vmatprep.subr.bf16.mxu0 0
    %3676 = vmatpush1.bf16.msra.mxu0 %v3637
    %3677 = vmatprep.subr.bf16.mxu0 0
    %3678 = vmatpush1.bf16.msra.mxu0 %v3638
    %3679 = vmatprep.subr.bf16.mxu0 0
    %3680 = vmatpush1.bf16.msra.mxu0 %v3639
    %3681 = vmatprep.subr.bf16.mxu0 0
    %3682 = vmatpush1.bf16.msra.mxu0 %v3640
    %3683 = vmatprep.subr.bf16.mxu0 0
    %3684 = vmatpush1.bf16.msra.mxu0 %v3641
    %3685 = vmatprep.subr.bf16.mxu0 0
    %3686 = vmatpush1.bf16.msra.mxu0 %v3642
    %3687 = vmatprep.subr.bf16.mxu0 0
    %3688 = vmatpush1.bf16.msra.mxu0 %v3643
    %3689 = vmatprep.subr.bf16.mxu0 0
    %3690 = vmatpush1.bf16.msra.mxu0 %v3644
    %3691 = vmatprep.subr.bf16.mxu0 0
    %3692 = vmatpush1.bf16.msra.mxu0 %v3645
    %3693 = vmatprep.subr.bf16.mxu0 0
    %3694 = vmatpush1.bf16.msra.mxu0 %v3646
    %3695 = vmatprep.mubr.bf16.mxu0 %v3513
    %3696 = vmatmul.mubr.bf16.gmra.mrb[0].mxu0 %v3512
    %v3697 = vpop.f32.mrb[0].mxu0
    %v3698 = vadd.f32 %v3565, %v3697
    %v3699 = vpop.f32.mrb[0].mxu0
    %v3700 = vpop.f32.mrb[0].mxu0
    %v3701 = vadd.f32 %v3565, %v3700
    %v3702 = vpop.f32.mrb[0].mxu0
    %3703 = vmatprep.mubr.bf16.mxu0 %v3515
    %3704 = vmatmul.mubr.bf16.gmra.mrb[0].mxu0 %v3514
    %v3705 = vpop.f32.mrb[0].mxu0
    %v3706 = vadd.f32 %v3565, %v3705
    %v3707 = vpop.f32.mrb[0].mxu0
    %v3708 = vpop.f32.mrb[0].mxu0
    %v3709 = vadd.f32 %v3565, %v3708
    %v3710 = vpop.f32.mrb[0].mxu0
    %3711 = vmatprep.mubr.bf16.mxu0 %v3517
    %3712 = vmatmul.mubr.bf16.gmra.mrb[0].mxu0 %v3516
    %v3713 = vpop.f32.mrb[0].mxu0
    %v3714 = vadd.f32 %v3565, %v3713
    %v3715 = vpop.f32.mrb[0].mxu0
    %v3716 = vpop.f32.mrb[0].mxu0
    %v3717 = vadd.f32 %v3565, %v3716
    %v3718 = vpop.f32.mrb[0].mxu0
    %3719 = vmatprep.mubr.bf16.mxu0 %v3519
    %3720 = vmatmul.mubr.bf16.gmra.mrb[0].mxu0 %v3518
    %v3721 = vpop.f32.mrb[0].mxu0
    %v3722 = vadd.f32 %v3565, %v3721
    %v3723 = vpop.f32.mrb[0].mxu0
    %v3724 = vpop.f32.mrb[0].mxu0
    %v3725 = vadd.f32 %v3565, %v3724
    %v3726 = vpop.f32.mrb[0].mxu0
    %3727 = vmatprep.mubr.bf16.mxu0 %v3521
    %3728 = vmatmul.mubr.bf16.gmra.mrb[0].mxu0 %v3520
    %v3729 = vpop.f32.mrb[0].mxu0
    %v3730 = vadd.f32 %v3565, %v3729
    %v3731 = vpop.f32.mrb[0].mxu0
    %v3732 = vpop.f32.mrb[0].mxu0
    %v3733 = vadd.f32 %v3565, %v3732
    %v3734 = vpop.f32.mrb[0].mxu0
    %3735 = vmatprep.mubr.bf16.mxu0 %v3523
    %3736 = vmatmul.mubr.bf16.gmra.mrb[0].mxu0 %v3522
    %v3737 = vpop.f32.mrb[0].mxu0
    %v3738 = vadd.f32 %v3565, %v3737
    %v3739 = vpop.f32.mrb[0].mxu0
    %v3740 = vpop.f32.mrb[0].mxu0
    %v3741 = vadd.f32 %v3565, %v3740
    %v3742 = vpop.f32.mrb[0].mxu0
    %3743 = vmatprep.mubr.bf16.mxu0 %v3525
    %3744 = vmatmul.mubr.bf16.gmra.mrb[0].mxu0 %v3524
    %v3745 = vpop.f32.mrb[0].mxu0
    %v3746 = vadd.f32 %v3565, %v3745
    %v3747 = vpop.f32.mrb[0].mxu0
    %v3748 = vpop.f32.mrb[0].mxu0
    %v3749 = vadd.f32 %v3565, %v3748
    %v3750 = vpop.f32.mrb[0].mxu0
    %3751 = vmatprep.mubr.bf16.mxu0 %v3527
    %3752 = vmatmul.mubr.bf16.gmra.mrb[0].mxu0 %v3526
    %v3753 = vpop.f32.mrb[0].mxu0
    %v3754 = vadd.f32 %v3565, %v3753
    %v3755 = vpop.f32.mrb[0].mxu0
    %v3756 = vpop.f32.mrb[0].mxu0
    %v3757 = vadd.f32 %v3565, %v3756
    %v3758 = vpop.f32.mrb[0].mxu0
    %3759 = vdwg.mxu0
    %v3760 = vadd.f32 %v3235, %v3698
    %v3761 = vadd.f32 %v3236, %v3701
    %v3762 = vadd.f32 %v3237, %v3706
    %v3763 = vadd.f32 %v3238, %v3709
    %v3764 = vadd.f32 %v3239, %v3714
    %v3765 = vadd.f32 %v3240, %v3717
    %v3766 = vadd.f32 %v3241, %v3722
    %v3767 = vadd.f32 %v3242, %v3725
    %v3768 = vadd.f32 %v3243, %v3730
    %v3769 = vadd.f32 %v3244, %v3733
    %v3770 = vadd.f32 %v3245, %v3738
    %v3771 = vadd.f32 %v3246, %v3741
    %v3772 = vadd.f32 %v3247, %v3746
    %v3773 = vadd.f32 %v3248, %v3749
    %v3774 = vadd.f32 %v3249, %v3754
    %v3775 = vadd.f32 %v3250, %v3757
    %v3776 = vld [vmem:[%s8 + $0x9] sm:$0x1]
    %v3777 = vld [vmem:[%s8 + $0xa] sm:$0x1]
    %3778 = vadd.xlane.f32.xlu0 %v3760
    %v3779 = vpop.xlane.xlu0 %3778
    %3780 = vadd.xlane.f32.xlu0 %v3761
    %v3781 = vpop.xlane.xlu0 %3780
    %3782 = vadd.xlane.f32.xlu0 %v3762
    %v3783 = vpop.xlane.xlu0 %3782
    %3784 = vadd.xlane.f32.xlu0 %v3763
    %v3785 = vpop.xlane.xlu0 %3784
    %3786 = vadd.xlane.f32.xlu0 %v3764
    %v3787 = vpop.xlane.xlu0 %3786
    %3788 = vadd.xlane.f32.xlu0 %v3765
    %v3789 = vpop.xlane.xlu0 %3788
    %3790 = vadd.xlane.f32.xlu0 %v3766
    %v3791 = vpop.xlane.xlu0 %3790
    %3792 = vadd.xlane.f32.xlu0 %v3767
    %v3793 = vpop.xlane.xlu0 %3792
    %3794 = vadd.xlane.f32.xlu0 %v3768
    %v3795 = vpop.xlane.xlu0 %3794
    %3796 = vadd.xlane.f32.xlu0 %v3769
    %v3797 = vpop.xlane.xlu0 %3796
    %3798 = vadd.xlane.f32.xlu0 %v3770
    %v3799 = vpop.xlane.xlu0 %3798
    %3800 = vadd.xlane.f32.xlu0 %v3771
    %v3801 = vpop.xlane.xlu0 %3800
    %3802 = vadd.xlane.f32.xlu0 %v3772
    %v3803 = vpop.xlane.xlu0 %3802
    %3804 = vadd.xlane.f32.xlu0 %v3773
    %v3805 = vpop.xlane.xlu0 %3804
    %3806 = vadd.xlane.f32.xlu0 %v3774
    %v3807 = vpop.xlane.xlu0 %3806
    %3808 = vadd.xlane.f32.xlu0 %v3775
    %v3809 = vpop.xlane.xlu0 %3808
    %v3810 = vmul.f32 %v3779, %v3062
    %v3811 = vmul.f32 %v3781, %v3062
    %v3812 = vmul.f32 %v3783, %v3062
    %v3813 = vmul.f32 %v3785, %v3062
    %v3814 = vmul.f32 %v3787, %v3062
    %v3815 = vmul.f32 %v3789, %v3062
    %v3816 = vmul.f32 %v3791, %v3062
    %v3817 = vmul.f32 %v3793, %v3062
    %v3818 = vmul.f32 %v3795, %v3062
    %v3819 = vmul.f32 %v3797, %v3062
    %v3820 = vmul.f32 %v3799, %v3062
    %v3821 = vmul.f32 %v3801, %v3062
    %v3822 = vmul.f32 %v3803, %v3062
    %v3823 = vmul.f32 %v3805, %v3062
    %v3824 = vmul.f32 %v3807, %v3062
    %v3825 = vmul.f32 %v3809, %v3062
    %v3826 = vsub.f32 %v3760, %v3810
    %v3827 = vsub.f32 %v3761, %v3811
    %v3828 = vsub.f32 %v3762, %v3812
    %v3829 = vsub.f32 %v3763, %v3813
    %v3830 = vsub.f32 %v3764, %v3814
    %v3831 = vsub.f32 %v3765, %v3815
    %v3832 = vsub.f32 %v3766, %v3816
    %v3833 = vsub.f32 %v3767, %v3817
    %v3834 = vsub.f32 %v3768, %v3818
    %v3835 = vsub.f32 %v3769, %v3819
    %v3836 = vsub.f32 %v3770, %v3820
    %v3837 = vsub.f32 %v3771, %v3821
    %v3838 = vsub.f32 %v3772, %v3822
    %v3839 = vsub.f32 %v3773, %v3823
    %v3840 = vsub.f32 %v3774, %v3824
    %v3841 = vsub.f32 %v3775, %v3825
    %v3842 = vmul.f32 %v3826, %v3826
    %v3843 = vmul.f32 %v3827, %v3827
    %v3844 = vmul.f32 %v3828, %v3828
    %v3845 = vmul.f32 %v3829, %v3829
    %v3846 = vmul.f32 %v3830, %v3830
    %v3847 = vmul.f32 %v3831, %v3831
    %v3848 = vmul.f32 %v3832, %v3832
    %v3849 = vmul.f32 %v3833, %v3833
    %v3850 = vmul.f32 %v3834, %v3834
    %v3851 = vmul.f32 %v3835, %v3835
    %v3852 = vmul.f32 %v3836, %v3836
    %v3853 = vmul.f32 %v3837, %v3837
    %v3854 = vmul.f32 %v3838, %v3838
    %v3855 = vmul.f32 %v3839, %v3839
    %v3856 = vmul.f32 %v3840, %v3840
    %v3857 = vmul.f32 %v3841, %v3841
    %3858 = vadd.xlane.f32.xlu0 %v3842
    %v3859 = vpop.xlane.xlu0 %3858
    %3860 = vadd.xlane.f32.xlu0 %v3843
    %v3861 = vpop.xlane.xlu0 %3860
    %3862 = vadd.xlane.f32.xlu0 %v3844
    %v3863 = vpop.xlane.xlu0 %3862
    %3864 = vadd.xlane.f32.xlu0 %v3845
    %v3865 = vpop.xlane.xlu0 %3864
    %3866 = vadd.xlane.f32.xlu0 %v3846
    %v3867 = vpop.xlane.xlu0 %3866
    %3868 = vadd.xlane.f32.xlu0 %v3847
    %v3869 = vpop.xlane.xlu0 %3868
    %3870 = vadd.xlane.f32.xlu0 %v3848
    %v3871 = vpop.xlane.xlu0 %3870
    %3872 = vadd.xlane.f32.xlu0 %v3849
    %v3873 = vpop.xlane.xlu0 %3872
    %3874 = vadd.xlane.f32.xlu0 %v3850
    %v3875 = vpop.xlane.xlu0 %3874
    %3876 = vadd.xlane.f32.xlu0 %v3851
    %v3877 = vpop.xlane.xlu0 %3876
    %3878 = vadd.xlane.f32.xlu0 %v3852
    %v3879 = vpop.xlane.xlu0 %3878
    %3880 = vadd.xlane.f32.xlu0 %v3853
    %v3881 = vpop.xlane.xlu0 %3880
    %3882 = vadd.xlane.f32.xlu0 %v3854
    %v3883 = vpop.xlane.xlu0 %3882
    %3884 = vadd.xlane.f32.xlu0 %v3855
    %v3885 = vpop.xlane.xlu0 %3884
    %3886 = vadd.xlane.f32.xlu0 %v3856
    %v3887 = vpop.xlane.xlu0 %3886
    %3888 = vadd.xlane.f32.xlu0 %v3857
    %v3889 = vpop.xlane.xlu0 %3888
    %v3890 = vmul.f32 %v3859, %v3062
    %v3891 = vmul.f32 %v3861, %v3062
    %v3892 = vmul.f32 %v3863, %v3062
    %v3893 = vmul.f32 %v3865, %v3062
    %v3894 = vmul.f32 %v3867, %v3062
    %v3895 = vmul.f32 %v3869, %v3062
    %v3896 = vmul.f32 %v3871, %v3062
    %v3897 = vmul.f32 %v3873, %v3062
    %v3898 = vmul.f32 %v3875, %v3062
    %v3899 = vmul.f32 %v3877, %v3062
    %v3900 = vmul.f32 %v3879, %v3062
    %v3901 = vmul.f32 %v3881, %v3062
    %v3902 = vmul.f32 %v3883, %v3062
    %v3903 = vmul.f32 %v3885, %v3062
    %v3904 = vmul.f32 %v3887, %v3062
    %v3905 = vmul.f32 %v3889, %v3062
    %v3906 = vadd.f32 %v3890, 1e-05
    %v3907 = vadd.f32 %v3891, 1e-05
    %v3908 = vadd.f32 %v3892, 1e-05
    %v3909 = vadd.f32 %v3893, 1e-05
    %v3910 = vadd.f32 %v3894, 1e-05
    %v3911 = vadd.f32 %v3895, 1e-05
    %v3912 = vadd.f32 %v3896, 1e-05
    %v3913 = vadd.f32 %v3897, 1e-05
    %v3914 = vadd.f32 %v3898, 1e-05
    %v3915 = vadd.f32 %v3899, 1e-05
    %v3916 = vadd.f32 %v3900, 1e-05
    %v3917 = vadd.f32 %v3901, 1e-05
    %v3918 = vadd.f32 %v3902, 1e-05
    %v3919 = vadd.f32 %v3903, 1e-05
    %v3920 = vadd.f32 %v3904, 1e-05
    %v3921 = vadd.f32 %v3905, 1e-05
    %v3922 = vrsqrt.pop %v3906
    %v3923 = vrsqrt.pop %v3907
    %v3924 = vrsqrt.pop %v3908
    %v3925 = vrsqrt.pop %v3909
    %v3926 = vrsqrt.pop %v3910
    %v3927 = vrsqrt.pop %v3911
    %v3928 = vrsqrt.pop %v3912
    %v3929 = vrsqrt.pop %v3913
    %v3930 = vrsqrt.pop %v3914
    %v3931 = vrsqrt.pop %v3915
    %v3932 = vrsqrt.pop %v3916
    %v3933 = vrsqrt.pop %v3917
    %v3934 = vrsqrt.pop %v3918
    %v3935 = vrsqrt.pop %v3919
    %v3936 = vrsqrt.pop %v3920
    %v3937 = vrsqrt.pop %v3921
    %v3938 = vmul.f32 %v3826, %v3922
    %v3939 = vmul.f32 %v3827, %v3923
    %v3940 = vmul.f32 %v3828, %v3924
    %v3941 = vmul.f32 %v3829, %v3925
    %v3942 = vmul.f32 %v3830, %v3926
    %v3943 = vmul.f32 %v3831, %v3927
    %v3944 = vmul.f32 %v3832, %v3928
    %v3945 = vmul.f32 %v3833, %v3929
    %v3946 = vmul.f32 %v3834, %v3930
    %v3947 = vmul.f32 %v3835, %v3931
    %v3948 = vmul.f32 %v3836, %v3932
    %v3949 = vmul.f32 %v3837, %v3933
    %v3950 = vmul.f32 %v3838, %v3934
    %v3951 = vmul.f32 %v3839, %v3935
    %v3952 = vmul.f32 %v3840, %v3936
    %v3953 = vmul.f32 %v3841, %v3937
    %v3955 = vlaneseq
    %v3956 = vshrl.u32 %v3955, 7
    %v3957 = vsub.s32 0, %v3956
    %v3958 = vrot.slane %v3776, %v3957
    %v3960 = vmul.f32 %v3938, %v3958
    %v3961 = vmul.f32 %v3939, %v3958
    %v3962 = vmul.f32 %v3940, %v3958
    %v3963 = vmul.f32 %v3941, %v3958
    %v3964 = vmul.f32 %v3942, %v3958
    %v3965 = vmul.f32 %v3943, %v3958
    %v3966 = vmul.f32 %v3944, %v3958
    %v3967 = vmul.f32 %v3945, %v3958
    %v3968 = vmul.f32 %v3946, %v3958
    %v3969 = vmul.f32 %v3947, %v3958
    %v3970 = vmul.f32 %v3948, %v3958
    %v3971 = vmul.f32 %v3949, %v3958
    %v3972 = vmul.f32 %v3950, %v3958
    %v3973 = vmul.f32 %v3951, %v3958
    %v3974 = vmul.f32 %v3952, %v3958
    %v3975 = vmul.f32 %v3953, %v3958
    %v3977 = vlaneseq
    %v3978 = vshrl.u32 %v3977, 7
    %v3979 = vsub.s32 0, %v3978
    %v3980 = vrot.slane %v3777, %v3979
    %v3982 = vadd.f32 %v3960, %v3980
    %v3983 = vadd.f32 %v3961, %v3980
    %v3984 = vadd.f32 %v3962, %v3980
    %v3985 = vadd.f32 %v3963, %v3980
    %v3986 = vadd.f32 %v3964, %v3980
    %v3987 = vadd.f32 %v3965, %v3980
    %v3988 = vadd.f32 %v3966, %v3980
    %v3989 = vadd.f32 %v3967, %v3980
    %v3990 = vadd.f32 %v3968, %v3980
    %v3991 = vadd.f32 %v3969, %v3980
    %v3992 = vadd.f32 %v3970, %v3980
    %v3993 = vadd.f32 %v3971, %v3980
    %v3994 = vadd.f32 %v3972, %v3980
    %v3995 = vadd.f32 %v3973, %v3980
    %v3996 = vadd.f32 %v3974, %v3980
    %v3997 = vadd.f32 %v3975, %v3980
    %v3998 = vpack.c.bf16 %v3982, %v3982
    %v3999 = vpack.c.bf16 %v3983, %v3983
    %v4000 = vpack.c.bf16 %v3984, %v3984
    %v4001 = vpack.c.bf16 %v3985, %v3985
    %v4002 = vpack.c.bf16 %v3986, %v3986
    %v4003 = vpack.c.bf16 %v3987, %v3987
    %v4004 = vpack.c.bf16 %v3988, %v3988
    %v4005 = vpack.c.bf16 %v3989, %v3989
    %v4006 = vpack.c.bf16 %v3990, %v3990
    %v4007 = vpack.c.bf16 %v3991, %v3991
    %v4008 = vpack.c.bf16 %v3992, %v3992
    %v4009 = vpack.c.bf16 %v3993, %v3993
    %v4010 = vpack.c.bf16 %v3994, %v3994
    %v4011 = vpack.c.bf16 %v3995, %v3995
    %v4012 = vpack.c.bf16 %v3996, %v3996
    %v4013 = vpack.c.bf16 %v3997, %v3997
    %v4014 = vld [vmem:[#allocation5 + $0x18] sm:$0xff]
    %v4015 = vld [vmem:[#allocation5 + $0x20] sm:$0xff]
    %v4016 = vld [vmem:[#allocation5 + $0x40] sm:$0xff]
    %v4017 = vld [vmem:[#allocation5 + $0x48] sm:$0xff]
    %v4018 = vld [vmem:[#allocation5 + $0x68] sm:$0xff]
    %v4019 = vld [vmem:[#allocation5 + $0x70] sm:$0xff]
    %v4020 = vld [vmem:[#allocation5 + $0x90] sm:$0xff]
    %v4021 = vld [vmem:[#allocation5 + $0x98] sm:$0xff]
    %v4022 = vld [vmem:[#allocation5 + $0xb8] sm:$0xff]
    %v4023 = vld [vmem:[#allocation5 + $0xc0] sm:$0xff]
    %v4024 = vld [vmem:[#allocation5 + $0xe0] sm:$0xff]
    %v4025 = vld [vmem:[#allocation5 + $0xe8] sm:$0xff]
    %v4026 = vld [vmem:[#allocation5 + $0x108] sm:$0xff]
    %v4027 = vld [vmem:[#allocation5 + $0x110] sm:$0xff]
    %v4028 = vld [vmem:[#allocation5 + $0x130] sm:$0xff]
    %v4029 = vld [vmem:[#allocation5 + $0x138] sm:$0xff]
    %v4030 = vld [vmem:[#allocation5 + $0x158] sm:$0xff]
    %v4031 = vld [vmem:[#allocation5 + $0x160] sm:$0xff]
    %v4032 = vld [vmem:[#allocation5 + $0x180] sm:$0xff]
    %v4033 = vld [vmem:[#allocation5 + $0x188] sm:$0xff]
    %v4034 = vld [vmem:[#allocation5 + $0x1a8] sm:$0xff]
    %v4035 = vld [vmem:[#allocation5 + $0x1b0] sm:$0xff]
    %v4036 = vld [vmem:[#allocation5 + $0x1d0] sm:$0xff]
    %v4037 = vld [vmem:[#allocation5 + $0x1d8] sm:$0xff]
    %v4038 = vld [vmem:[#allocation5 + $0x1f8] sm:$0xff]
    %v4039 = vld [vmem:[#allocation5 + $0x200] sm:$0xff]
    %v4040 = vld [vmem:[#allocation5 + $0x220] sm:$0xff]
    %v4041 = vld [vmem:[#allocation5 + $0x228] sm:$0xff]
    %v4042 = vld [vmem:[#allocation5 + $0x248] sm:$0xff]
    %v4043 = vld [vmem:[#allocation5 + $0x250] sm:$0xff]
    %v4044 = vld [vmem:[#allocation5 + $0x270] sm:$0xff]
    %v4045 = vld [vmem:[#allocation5 + $0x278] sm:$0xff]
    %v4046 = vld [vmem:[%s8 + $0xb] sm:$0xf]
    %v4048 = vlaneseq
    %v4049 = vshrl.u32 %v4048, 7
    %v4050 = vsub.s32 0, %v4049
    %v4051 = vrot.slane %v4046, %v4050
    %v4052 = vlaneseq
    %v4053 = vshrl.u32 %v4052, 7
    %v4054 = vsub.s32 1, %v4053
    %v4055 = vrot.slane %v4046, %v4054
    %v4056 = vlaneseq
    %v4057 = vshrl.u32 %v4056, 7
    %v4058 = vsub.s32 2, %v4057
    %v4059 = vrot.slane %v4046, %v4058
    %v4060 = vlaneseq
    %v4061 = vshrl.u32 %v4060, 7
    %v4062 = vsub.s32 3, %v4061
    %v4063 = vrot.slane %v4046, %v4062
    %v4084 = vunpack.c.l.b16 %v3998
    %v4085 = vunpack.c.l.b16 %v3999
    %v4086 = vunpack.c.l.b16 %v4000
    %v4087 = vunpack.c.l.b16 %v4001
    %v4088 = vunpack.c.l.b16 %v4002
    %v4089 = vunpack.c.l.b16 %v4003
    %v4090 = vunpack.c.l.b16 %v4004
    %v4091 = vunpack.c.l.b16 %v4005
    %v4092 = vunpack.c.l.b16 %v4006
    %v4093 = vunpack.c.l.b16 %v4007
    %v4094 = vunpack.c.l.b16 %v4008
    %v4095 = vunpack.c.l.b16 %v4009
    %v4096 = vunpack.c.l.b16 %v4010
    %v4097 = vunpack.c.l.b16 %v4011
    %v4098 = vunpack.c.l.b16 %v4012
    %v4099 = vunpack.c.l.b16 %v4013
    %v4100 = vrot.slane %v4085, 7
    %vm4101 = vcmask 1041409
    %v4102 = vsel %vm4101, %v4100, %v4084
    %v4103 = vrot.slane %v4086, 6
    %vm4104 = vcmask 1042434
    %v4105 = vsel %vm4104, %v4103, %v4102
    %v4106 = vrot.slane %v4087, 5
    %vm4107 = vcmask 1043459
    %v4108 = vsel %vm4107, %v4106, %v4105
    %v4109 = vrot.slane %v4088, 4
    %vm4110 = vcmask 1044484
    %v4111 = vsel %vm4110, %v4109, %v4108
    %v4112 = vrot.slane %v4089, 3
    %vm4113 = vcmask 1045509
    %v4114 = vsel %vm4113, %v4112, %v4111
    %v4115 = vrot.slane %v4090, 2
    %vm4116 = vcmask 1046534
    %v4117 = vsel %vm4116, %v4115, %v4114
    %v4118 = vrot.slane %v4091, 1
    %vm4119 = vcmask 1047559
    %v4120 = vsel %vm4119, %v4118, %v4117
    %v4121 = vrot.slane %v4093, 7
    %v4122 = vsel %vm4101, %v4121, %v4092
    %v4123 = vrot.slane %v4094, 6
    %v4124 = vsel %vm4104, %v4123, %v4122
    %v4125 = vrot.slane %v4095, 5
    %v4126 = vsel %vm4107, %v4125, %v4124
    %v4127 = vrot.slane %v4096, 4
    %v4128 = vsel %vm4110, %v4127, %v4126
    %v4129 = vrot.slane %v4097, 3
    %v4130 = vsel %vm4113, %v4129, %v4128
    %v4131 = vrot.slane %v4098, 2
    %v4132 = vsel %vm4116, %v4131, %v4130
    %v4133 = vrot.slane %v4099, 1
    %v4134 = vsel %vm4119, %v4133, %v4132
    %v4135 = vpack.c.b16 %v4134, %v4120
    %v4169 = vunpack.c.l.b16 %v4014
    %v4170 = vunpack.c.h.b16 %v4014
    %v4171 = vunpack.c.l.b16 %v4015
    %v4172 = vunpack.c.h.b16 %v4015
    %v4173 = vunpack.c.l.b16 %v4016
    %v4174 = vunpack.c.h.b16 %v4016
    %v4175 = vunpack.c.l.b16 %v4017
    %v4176 = vunpack.c.h.b16 %v4017
    %v4177 = vunpack.c.l.b16 %v4018
    %v4178 = vunpack.c.h.b16 %v4018
    %v4179 = vunpack.c.l.b16 %v4019
    %v4180 = vunpack.c.h.b16 %v4019
    %v4181 = vunpack.c.l.b16 %v4020
    %v4182 = vunpack.c.h.b16 %v4020
    %v4183 = vunpack.c.l.b16 %v4021
    %v4184 = vunpack.c.h.b16 %v4021
    %v4185 = vunpack.c.l.b16 %v4022
    %v4186 = vunpack.c.h.b16 %v4022
    %v4187 = vunpack.c.l.b16 %v4023
    %v4188 = vunpack.c.h.b16 %v4023
    %v4189 = vunpack.c.l.b16 %v4024
    %v4190 = vunpack.c.h.b16 %v4024
    %v4191 = vunpack.c.l.b16 %v4025
    %v4192 = vunpack.c.h.b16 %v4025
    %v4193 = vunpack.c.l.b16 %v4026
    %v4194 = vunpack.c.h.b16 %v4026
    %v4195 = vunpack.c.l.b16 %v4027
    %v4196 = vunpack.c.h.b16 %v4027
    %v4197 = vunpack.c.l.b16 %v4028
    %v4198 = vunpack.c.h.b16 %v4028
    %v4199 = vunpack.c.l.b16 %v4029
    %v4200 = vunpack.c.h.b16 %v4029
    %v4201 = vunpack.c.l.b16 %v4030
    %v4202 = vunpack.c.h.b16 %v4030
    %v4203 = vunpack.c.l.b16 %v4031
    %v4204 = vunpack.c.h.b16 %v4031
    %v4205 = vunpack.c.l.b16 %v4032
    %v4206 = vunpack.c.h.b16 %v4032
    %v4207 = vunpack.c.l.b16 %v4033
    %v4208 = vunpack.c.h.b16 %v4033
    %v4209 = vunpack.c.l.b16 %v4034
    %v4210 = vunpack.c.h.b16 %v4034
    %v4211 = vunpack.c.l.b16 %v4035
    %v4212 = vunpack.c.h.b16 %v4035
    %v4213 = vunpack.c.l.b16 %v4036
    %v4214 = vunpack.c.h.b16 %v4036
    %v4215 = vunpack.c.l.b16 %v4037
    %v4216 = vunpack.c.h.b16 %v4037
    %v4217 = vunpack.c.l.b16 %v4038
    %v4218 = vunpack.c.h.b16 %v4038
    %v4219 = vunpack.c.l.b16 %v4039
    %v4220 = vunpack.c.h.b16 %v4039
    %v4221 = vunpack.c.l.b16 %v4040
    %v4222 = vunpack.c.h.b16 %v4040
    %v4223 = vunpack.c.l.b16 %v4041
    %v4224 = vunpack.c.h.b16 %v4041
    %v4225 = vunpack.c.l.b16 %v4042
    %v4226 = vunpack.c.h.b16 %v4042
    %v4227 = vunpack.c.l.b16 %v4043
    %v4228 = vunpack.c.h.b16 %v4043
    %v4229 = vunpack.c.l.b16 %v4044
    %v4230 = vunpack.c.h.b16 %v4044
    %v4231 = vunpack.c.l.b16 %v4045
    %v4232 = vunpack.c.h.b16 %v4045
    %v4233 = vpack.c.b16 %v4173, %v4169
    %v4234 = vpack.c.b16 %v4174, %v4170
    %v4235 = vpack.c.b16 %v4175, %v4171
    %v4236 = vpack.c.b16 %v4176, %v4172
    %v4237 = vpack.c.b16 %v4181, %v4177
    %v4238 = vpack.c.b16 %v4182, %v4178
    %v4239 = vpack.c.b16 %v4183, %v4179
    %v4240 = vpack.c.b16 %v4184, %v4180
    %v4241 = vpack.c.b16 %v4189, %v4185
    %v4242 = vpack.c.b16 %v4190, %v4186
    %v4243 = vpack.c.b16 %v4191, %v4187
    %v4244 = vpack.c.b16 %v4192, %v4188
    %v4245 = vpack.c.b16 %v4197, %v4193
    %v4246 = vpack.c.b16 %v4198, %v4194
    %v4247 = vpack.c.b16 %v4199, %v4195
    %v4248 = vpack.c.b16 %v4200, %v4196
    %v4249 = vpack.c.b16 %v4205, %v4201
    %v4250 = vpack.c.b16 %v4206, %v4202
    %v4251 = vpack.c.b16 %v4207, %v4203
    %v4252 = vpack.c.b16 %v4208, %v4204
    %v4253 = vpack.c.b16 %v4213, %v4209
    %v4254 = vpack.c.b16 %v4214, %v4210
    %v4255 = vpack.c.b16 %v4215, %v4211
    %v4256 = vpack.c.b16 %v4216, %v4212
    %v4257 = vpack.c.b16 %v4221, %v4217
    %v4258 = vpack.c.b16 %v4222, %v4218
    %v4259 = vpack.c.b16 %v4223, %v4219
    %v4260 = vpack.c.b16 %v4224, %v4220
    %v4261 = vpack.c.b16 %v4229, %v4225
    %v4262 = vpack.c.b16 %v4230, %v4226
    %v4263 = vpack.c.b16 %v4231, %v4227
    %v4264 = vpack.c.b16 %v4232, %v4228
    %4297 = vmatprep.subr.bf16.mxu0 %v4234
    %4298 = vmatpush1.bf16.msra.mxu0 %v4233
    %4299 = vmatprep.subr.bf16.mxu0 %v4238
    %4300 = vmatpush1.bf16.msra.mxu0 %v4237
    %4301 = vmatprep.subr.bf16.mxu0 %v4242
    %4302 = vmatpush1.bf16.msra.mxu0 %v4241
    %4303 = vmatprep.subr.bf16.mxu0 %v4246
    %4304 = vmatpush1.bf16.msra.mxu0 %v4245
    %4305 = vmatprep.subr.bf16.mxu0 %v4250
    %4306 = vmatpush1.bf16.msra.mxu0 %v4249
    %4307 = vmatprep.subr.bf16.mxu0 %v4254
    %4308 = vmatpush1.bf16.msra.mxu0 %v4253
    %4309 = vmatprep.subr.bf16.mxu0 %v4258
    %4310 = vmatpush1.bf16.msra.mxu0 %v4257
    %4311 = vmatprep.subr.bf16.mxu0 %v4262
    %4312 = vmatpush1.bf16.msra.mxu0 %v4261
    %4313 = vmatprep.subr.bf16.mxu0 0
    %4314 = vmatpush1.bf16.msra.mxu0 0
    %4315 = vmatprep.subr.bf16.mxu0 0
    %4316 = vmatpush1.bf16.msra.mxu0 0
    %4317 = vmatprep.subr.bf16.mxu0 0
    %4318 = vmatpush1.bf16.msra.mxu0 0
    %4319 = vmatprep.subr.bf16.mxu0 0
    %4320 = vmatpush1.bf16.msra.mxu0 0
    %4321 = vmatprep.subr.bf16.mxu0 0
    %4322 = vmatpush1.bf16.msra.mxu0 0
    %4323 = vmatprep.subr.bf16.mxu0 0
    %4324 = vmatpush1.bf16.msra.mxu0 0
    %4325 = vmatprep.subr.bf16.mxu0 0
    %4326 = vmatpush1.bf16.msra.mxu0 0
    %4327 = vmatprep.subr.bf16.mxu0 0
    %4328 = vmatpush1.bf16.msra.mxu0 0
    %4329 = vmatprep.mubr.bf16.mxu0 0
    %4330 = vmatmul.mubr.bf16.gmra.mrb[0].mxu0 %v4135
    %v4331 = vpop.f32.mrb[0].mxu0
    %v4332 = vadd.f32 %v4051, %v4331
    %v4333 = vpop.f32.mrb[0].mxu0
    %v4334 = vadd.f32 %v4055, %v4333
    %v4335 = vpop.f32.mrb[0].mxu0
    %v4336 = vadd.f32 %v4051, %v4335
    %v4337 = vpop.f32.mrb[0].mxu0
    %v4338 = vadd.f32 %v4055, %v4337
    %4339 = vdwg.mxu0
    %4340 = vmatprep.subr.bf16.mxu0 %v4236
    %4341 = vmatpush1.bf16.msra.mxu0 %v4235
    %4342 = vmatprep.subr.bf16.mxu0 %v4240
    %4343 = vmatpush1.bf16.msra.mxu0 %v4239
    %4344 = vmatprep.subr.bf16.mxu0 %v4244
    %4345 = vmatpush1.bf16.msra.mxu0 %v4243
    %4346 = vmatprep.subr.bf16.mxu0 %v4248
    %4347 = vmatpush1.bf16.msra.mxu0 %v4247
    %4348 = vmatprep.subr.bf16.mxu0 %v4252
    %4349 = vmatpush1.bf16.msra.mxu0 %v4251
    %4350 = vmatprep.subr.bf16.mxu0 %v4256
    %4351 = vmatpush1.bf16.msra.mxu0 %v4255
    %4352 = vmatprep.subr.bf16.mxu0 %v4260
    %4353 = vmatpush1.bf16.msra.mxu0 %v4259
    %4354 = vmatprep.subr.bf16.mxu0 %v4264
    %4355 = vmatpush1.bf16.msra.mxu0 %v4263
    %4356 = vmatprep.subr.bf16.mxu0 0
    %4357 = vmatpush1.bf16.msra.mxu0 0
    %4358 = vmatprep.subr.bf16.mxu0 0
    %4359 = vmatpush1.bf16.msra.mxu0 0
    %4360 = vmatprep.subr.bf16.mxu0 0
    %4361 = vmatpush1.bf16.msra.mxu0 0
    %4362 = vmatprep.subr.bf16.mxu0 0
    %4363 = vmatpush1.bf16.msra.mxu0 0
    %4364 = vmatprep.subr.bf16.mxu0 0
    %4365 = vmatpush1.bf16.msra.mxu0 0
    %4366 = vmatprep.subr.bf16.mxu0 0
    %4367 = vmatpush1.bf16.msra.mxu0 0
    %4368 = vmatprep.subr.bf16.mxu0 0
    %4369 = vmatpush1.bf16.msra.mxu0 0
    %4370 = vmatprep.subr.bf16.mxu0 0
    %4371 = vmatpush1.bf16.msra.mxu0 0
    %4372 = vmatprep.mubr.bf16.mxu0 0
    %4373 = vmatmul.mubr.bf16.gmra.mrb[0].mxu0 %v4135
    %v4374 = vpop.f32.mrb[0].mxu0
    %v4375 = vadd.f32 %v4059, %v4374
    %v4376 = vpop.f32.mrb[0].mxu0
    %v4377 = vadd.f32 %v4063, %v4376
    %v4378 = vpop.f32.mrb[0].mxu0
    %v4379 = vadd.f32 %v4059, %v4378
    %v4380 = vpop.f32.mrb[0].mxu0
    %v4381 = vadd.f32 %v4063, %v4380
    %4382 = vdwg.mxu0
    %v4383 = vmax.f32 %v4332, 0.0
    %v4384 = vmax.f32 %v4334, 0.0
    %v4385 = vmax.f32 %v4375, 0.0
    %v4386 = vmax.f32 %v4377, 0.0
    %v4387 = vmax.f32 %v4336, 0.0
    %v4388 = vmax.f32 %v4338, 0.0
    %v4389 = vmax.f32 %v4379, 0.0
    %v4390 = vmax.f32 %v4381, 0.0
    %v4391 = vpack.c.bf16 %v4387, %v4383
    %v4392 = vpack.c.bf16 %v4388, %v4384
    %v4393 = vpack.c.bf16 %v4389, %v4385
    %v4394 = vpack.c.bf16 %v4390, %v4386
    %v4395 = vld [vmem:[#allocation8] sm:$0xff]
    %v4396 = vld [vmem:[#allocation8 + $0x14] sm:$0xff]
    %v4397 = vld [vmem:[#allocation8 + $0x28] sm:$0xff]
    %v4398 = vld [vmem:[#allocation8 + $0x3c] sm:$0xff]
    %v4399 = vld [vmem:[#allocation8 + $0x50] sm:$0xff]
    %v4400 = vld [vmem:[#allocation8 + $0x64] sm:$0xff]
    %v4401 = vld [vmem:[#allocation8 + $0x78] sm:$0xff]
    %v4402 = vld [vmem:[#allocation8 + $0x8c] sm:$0xff]
    %v4403 = vld [vmem:[#allocation8 + $0xa0] sm:$0xff]
    %v4404 = vld [vmem:[#allocation8 + $0xb4] sm:$0xff]
    %v4405 = vld [vmem:[#allocation8 + $0xc8] sm:$0xff]
    %v4406 = vld [vmem:[#allocation8 + $0xdc] sm:$0xff]
    %v4407 = vld [vmem:[#allocation8 + $0xf0] sm:$0xff]
    %v4408 = vld [vmem:[#allocation8 + $0x104] sm:$0xff]
    %v4409 = vld [vmem:[#allocation8 + $0x118] sm:$0xff]
    %v4410 = vld [vmem:[#allocation8 + $0x12c] sm:$0xff]
    %v4411 = vld [vmem:[#allocation8 + $0x140] sm:$0xff]
    %v4412 = vld [vmem:[#allocation8 + $0x154] sm:$0xff]
    %v4413 = vld [vmem:[#allocation8 + $0x168] sm:$0xff]
    %v4414 = vld [vmem:[#allocation8 + $0x17c] sm:$0xff]
    %v4415 = vld [vmem:[#allocation8 + $0x190] sm:$0xff]
    %v4416 = vld [vmem:[#allocation8 + $0x1a4] sm:$0xff]
    %v4417 = vld [vmem:[#allocation8 + $0x1b8] sm:$0xff]
    %v4418 = vld [vmem:[#allocation8 + $0x1cc] sm:$0xff]
    %v4419 = vld [vmem:[#allocation8 + $0x1e0] sm:$0xff]
    %v4420 = vld [vmem:[#allocation8 + $0x1f4] sm:$0xff]
    %v4421 = vld [vmem:[#allocation8 + $0x208] sm:$0xff]
    %v4422 = vld [vmem:[#allocation8 + $0x21c] sm:$0xff]
    %v4423 = vld [vmem:[#allocation8 + $0x230] sm:$0xff]
    %v4424 = vld [vmem:[#allocation8 + $0x244] sm:$0xff]
    %v4425 = vld [vmem:[#allocation8 + $0x258] sm:$0xff]
    %v4426 = vld [vmem:[#allocation8 + $0x26c] sm:$0xff]
    %v4427 = vld [vmem:[#allocation8 + $0x280] sm:$0xff]
    %v4428 = vld [vmem:[#allocation8 + $0x294] sm:$0xff]
    %v4429 = vld [vmem:[#allocation8 + $0x2a8] sm:$0xff]
    %v4430 = vld [vmem:[#allocation8 + $0x2bc] sm:$0xff]
    %v4431 = vld [vmem:[#allocation8 + $0x2d0] sm:$0xff]
    %v4432 = vld [vmem:[#allocation8 + $0x2e4] sm:$0xff]
    %v4433 = vld [vmem:[#allocation8 + $0x2f8] sm:$0xff]
    %v4434 = vld [vmem:[#allocation8 + $0x30c] sm:$0xff]
    %v4435 = vld [vmem:[#allocation8 + $0x320] sm:$0xff]
    %v4436 = vld [vmem:[#allocation8 + $0x334] sm:$0xff]
    %v4437 = vld [vmem:[#allocation8 + $0x348] sm:$0xff]
    %v4438 = vld [vmem:[#allocation8 + $0x35c] sm:$0xff]
    %v4439 = vld [vmem:[#allocation8 + $0x370] sm:$0xff]
    %v4440 = vld [vmem:[#allocation8 + $0x384] sm:$0xff]
    %v4441 = vld [vmem:[#allocation8 + $0x398] sm:$0xff]
    %v4442 = vld [vmem:[#allocation8 + $0x3ac] sm:$0xff]
    %v4443 = vld [vmem:[#allocation8 + $0x3c0] sm:$0xff]
    %v4444 = vld [vmem:[#allocation8 + $0x3d4] sm:$0xff]
    %v4445 = vld [vmem:[#allocation8 + $0x3e8] sm:$0xff]
    %v4446 = vld [vmem:[#allocation8 + $0x3fc] sm:$0xff]
    %v4447 = vld [vmem:[#allocation8 + $0x410] sm:$0xff]
    %v4448 = vld [vmem:[#allocation8 + $0x424] sm:$0xff]
    %v4449 = vld [vmem:[#allocation8 + $0x438] sm:$0xff]
    %v4450 = vld [vmem:[#allocation8 + $0x44c] sm:$0xff]
    %v4451 = vld [vmem:[#allocation8 + $0x460] sm:$0xff]
    %v4452 = vld [vmem:[#allocation8 + $0x474] sm:$0xff]
    %v4453 = vld [vmem:[#allocation8 + $0x488] sm:$0xff]
    %v4454 = vld [vmem:[#allocation8 + $0x49c] sm:$0xff]
    %v4455 = vld [vmem:[#allocation8 + $0x4b0] sm:$0xff]
    %v4456 = vld [vmem:[#allocation8 + $0x4c4] sm:$0xff]
    %v4457 = vld [vmem:[#allocation8 + $0x4d8] sm:$0xff]
    %v4458 = vld [vmem:[#allocation8 + $0x4ec] sm:$0xff]
    %v4459 = vld [vmem:[%s8 + $0xf] sm:$0x3]
    %v4461 = vlaneseq
    %v4462 = vshrl.u32 %v4461, 7
    %v4463 = vsub.s32 0, %v4462
    %v4464 = vrot.slane %v4459, %v4463
    %v4465 = vlaneseq
    %v4466 = vshrl.u32 %v4465, 7
    %v4467 = vsub.s32 1, %v4466
    %v4468 = vrot.slane %v4459, %v4467
    %v4535 = vunpack.c.l.b16 %v4395
    %v4536 = vunpack.c.h.b16 %v4395
    %v4537 = vunpack.c.l.b16 %v4396
    %v4538 = vunpack.c.h.b16 %v4396
    %v4539 = vunpack.c.l.b16 %v4397
    %v4540 = vunpack.c.h.b16 %v4397
    %v4541 = vunpack.c.l.b16 %v4398
    %v4542 = vunpack.c.h.b16 %v4398
    %v4543 = vunpack.c.l.b16 %v4399
    %v4544 = vunpack.c.h.b16 %v4399
    %v4545 = vunpack.c.l.b16 %v4400
    %v4546 = vunpack.c.h.b16 %v4400
    %v4547 = vunpack.c.l.b16 %v4401
    %v4548 = vunpack.c.h.b16 %v4401
    %v4549 = vunpack.c.l.b16 %v4402
    %v4550 = vunpack.c.h.b16 %v4402
    %v4551 = vunpack.c.l.b16 %v4403
    %v4552 = vunpack.c.h.b16 %v4403
    %v4553 = vunpack.c.l.b16 %v4404
    %v4554 = vunpack.c.h.b16 %v4404
    %v4555 = vunpack.c.l.b16 %v4405
    %v4556 = vunpack.c.h.b16 %v4405
    %v4557 = vunpack.c.l.b16 %v4406
    %v4558 = vunpack.c.h.b16 %v4406
    %v4559 = vunpack.c.l.b16 %v4407
    %v4560 = vunpack.c.h.b16 %v4407
    %v4561 = vunpack.c.l.b16 %v4408
    %v4562 = vunpack.c.h.b16 %v4408
    %v4563 = vunpack.c.l.b16 %v4409
    %v4564 = vunpack.c.h.b16 %v4409
    %v4565 = vunpack.c.l.b16 %v4410
    %v4566 = vunpack.c.h.b16 %v4410
    %v4567 = vunpack.c.l.b16 %v4411
    %v4568 = vunpack.c.h.b16 %v4411
    %v4569 = vunpack.c.l.b16 %v4412
    %v4570 = vunpack.c.h.b16 %v4412
    %v4571 = vunpack.c.l.b16 %v4413
    %v4572 = vunpack.c.h.b16 %v4413
    %v4573 = vunpack.c.l.b16 %v4414
    %v4574 = vunpack.c.h.b16 %v4414
    %v4575 = vunpack.c.l.b16 %v4415
    %v4576 = vunpack.c.h.b16 %v4415
    %v4577 = vunpack.c.l.b16 %v4416
    %v4578 = vunpack.c.h.b16 %v4416
    %v4579 = vunpack.c.l.b16 %v4417
    %v4580 = vunpack.c.h.b16 %v4417
    %v4581 = vunpack.c.l.b16 %v4418
    %v4582 = vunpack.c.h.b16 %v4418
    %v4583 = vunpack.c.l.b16 %v4419
    %v4584 = vunpack.c.h.b16 %v4419
    %v4585 = vunpack.c.l.b16 %v4420
    %v4586 = vunpack.c.h.b16 %v4420
    %v4587 = vunpack.c.l.b16 %v4421
    %v4588 = vunpack.c.h.b16 %v4421
    %v4589 = vunpack.c.l.b16 %v4422
    %v4590 = vunpack.c.h.b16 %v4422
    %v4591 = vunpack.c.l.b16 %v4423
    %v4592 = vunpack.c.h.b16 %v4423
    %v4593 = vunpack.c.l.b16 %v4424
    %v4594 = vunpack.c.h.b16 %v4424
    %v4595 = vunpack.c.l.b16 %v4425
    %v4596 = vunpack.c.h.b16 %v4425
    %v4597 = vunpack.c.l.b16 %v4426
    %v4598 = vunpack.c.h.b16 %v4426
    %v4599 = vunpack.c.l.b16 %v4427
    %v4600 = vunpack.c.h.b16 %v4427
    %v4601 = vunpack.c.l.b16 %v4428
    %v4602 = vunpack.c.h.b16 %v4428
    %v4603 = vunpack.c.l.b16 %v4429
    %v4604 = vunpack.c.h.b16 %v4429
    %v4605 = vunpack.c.l.b16 %v4430
    %v4606 = vunpack.c.h.b16 %v4430
    %v4607 = vunpack.c.l.b16 %v4431
    %v4608 = vunpack.c.h.b16 %v4431
    %v4609 = vunpack.c.l.b16 %v4432
    %v4610 = vunpack.c.h.b16 %v4432
    %v4611 = vunpack.c.l.b16 %v4433
    %v4612 = vunpack.c.h.b16 %v4433
    %v4613 = vunpack.c.l.b16 %v4434
    %v4614 = vunpack.c.h.b16 %v4434
    %v4615 = vunpack.c.l.b16 %v4435
    %v4616 = vunpack.c.h.b16 %v4435
    %v4617 = vunpack.c.l.b16 %v4436
    %v4618 = vunpack.c.h.b16 %v4436
    %v4619 = vunpack.c.l.b16 %v4437
    %v4620 = vunpack.c.h.b16 %v4437
    %v4621 = vunpack.c.l.b16 %v4438
    %v4622 = vunpack.c.h.b16 %v4438
    %v4623 = vunpack.c.l.b16 %v4439
    %v4624 = vunpack.c.h.b16 %v4439
    %v4625 = vunpack.c.l.b16 %v4440
    %v4626 = vunpack.c.h.b16 %v4440
    %v4627 = vunpack.c.l.b16 %v4441
    %v4628 = vunpack.c.h.b16 %v4441
    %v4629 = vunpack.c.l.b16 %v4442
    %v4630 = vunpack.c.h.b16 %v4442
    %v4631 = vunpack.c.l.b16 %v4443
    %v4632 = vunpack.c.h.b16 %v4443
    %v4633 = vunpack.c.l.b16 %v4444
    %v4634 = vunpack.c.h.b16 %v4444
    %v4635 = vunpack.c.l.b16 %v4445
    %v4636 = vunpack.c.h.b16 %v4445
    %v4637 = vunpack.c.l.b16 %v4446
    %v4638 = vunpack.c.h.b16 %v4446
    %v4639 = vunpack.c.l.b16 %v4447
    %v4640 = vunpack.c.h.b16 %v4447
    %v4641 = vunpack.c.l.b16 %v4448
    %v4642 = vunpack.c.h.b16 %v4448
    %v4643 = vunpack.c.l.b16 %v4449
    %v4644 = vunpack.c.h.b16 %v4449
    %v4645 = vunpack.c.l.b16 %v4450
    %v4646 = vunpack.c.h.b16 %v4450
    %v4647 = vunpack.c.l.b16 %v4451
    %v4648 = vunpack.c.h.b16 %v4451
    %v4649 = vunpack.c.l.b16 %v4452
    %v4650 = vunpack.c.h.b16 %v4452
    %v4651 = vunpack.c.l.b16 %v4453
    %v4652 = vunpack.c.h.b16 %v4453
    %v4653 = vunpack.c.l.b16 %v4454
    %v4654 = vunpack.c.h.b16 %v4454
    %v4655 = vunpack.c.l.b16 %v4455
    %v4656 = vunpack.c.h.b16 %v4455
    %v4657 = vunpack.c.l.b16 %v4456
    %v4658 = vunpack.c.h.b16 %v4456
    %v4659 = vunpack.c.l.b16 %v4457
    %v4660 = vunpack.c.h.b16 %v4457
    %v4661 = vunpack.c.l.b16 %v4458
    %v4662 = vunpack.c.h.b16 %v4458
    %v4663 = vpack.c.b16 %v4537, %v4535
    %v4664 = vpack.c.b16 %v4538, %v4536
    %v4665 = vpack.c.b16 %v4541, %v4539
    %v4666 = vpack.c.b16 %v4542, %v4540
    %v4667 = vpack.c.b16 %v4545, %v4543
    %v4668 = vpack.c.b16 %v4546, %v4544
    %v4669 = vpack.c.b16 %v4549, %v4547
    %v4670 = vpack.c.b16 %v4550, %v4548
    %v4671 = vpack.c.b16 %v4553, %v4551
    %v4672 = vpack.c.b16 %v4554, %v4552
    %v4673 = vpack.c.b16 %v4557, %v4555
    %v4674 = vpack.c.b16 %v4558, %v4556
    %v4675 = vpack.c.b16 %v4561, %v4559
    %v4676 = vpack.c.b16 %v4562, %v4560
    %v4677 = vpack.c.b16 %v4565, %v4563
    %v4678 = vpack.c.b16 %v4566, %v4564
    %v4679 = vpack.c.b16 %v4569, %v4567
    %v4680 = vpack.c.b16 %v4570, %v4568
    %v4681 = vpack.c.b16 %v4573, %v4571
    %v4682 = vpack.c.b16 %v4574, %v4572
    %v4683 = vpack.c.b16 %v4577, %v4575
    %v4684 = vpack.c.b16 %v4578, %v4576
    %v4685 = vpack.c.b16 %v4581, %v4579
    %v4686 = vpack.c.b16 %v4582, %v4580
    %v4687 = vpack.c.b16 %v4585, %v4583
    %v4688 = vpack.c.b16 %v4586, %v4584
    %v4689 = vpack.c.b16 %v4589, %v4587
    %v4690 = vpack.c.b16 %v4590, %v4588
    %v4691 = vpack.c.b16 %v4593, %v4591
    %v4692 = vpack.c.b16 %v4594, %v4592
    %v4693 = vpack.c.b16 %v4597, %v4595
    %v4694 = vpack.c.b16 %v4598, %v4596
    %v4695 = vpack.c.b16 %v4601, %v4599
    %v4696 = vpack.c.b16 %v4602, %v4600
    %v4697 = vpack.c.b16 %v4605, %v4603
    %v4698 = vpack.c.b16 %v4606, %v4604
    %v4699 = vpack.c.b16 %v4609, %v4607
    %v4700 = vpack.c.b16 %v4610, %v4608
    %v4701 = vpack.c.b16 %v4613, %v4611
    %v4702 = vpack.c.b16 %v4614, %v4612
    %v4703 = vpack.c.b16 %v4617, %v4615
    %v4704 = vpack.c.b16 %v4618, %v4616
    %v4705 = vpack.c.b16 %v4621, %v4619
    %v4706 = vpack.c.b16 %v4622, %v4620
    %v4707 = vpack.c.b16 %v4625, %v4623
    %v4708 = vpack.c.b16 %v4626, %v4624
    %v4709 = vpack.c.b16 %v4629, %v4627
    %v4710 = vpack.c.b16 %v4630, %v4628
    %v4711 = vpack.c.b16 %v4633, %v4631
    %v4712 = vpack.c.b16 %v4634, %v4632
    %v4713 = vpack.c.b16 %v4637, %v4635
    %v4714 = vpack.c.b16 %v4638, %v4636
    %v4715 = vpack.c.b16 %v4641, %v4639
    %v4716 = vpack.c.b16 %v4642, %v4640
    %v4717 = vpack.c.b16 %v4645, %v4643
    %v4718 = vpack.c.b16 %v4646, %v4644
    %v4719 = vpack.c.b16 %v4649, %v4647
    %v4720 = vpack.c.b16 %v4650, %v4648
    %v4721 = vpack.c.b16 %v4653, %v4651
    %v4722 = vpack.c.b16 %v4654, %v4652
    %v4723 = vpack.c.b16 %v4657, %v4655
    %v4724 = vpack.c.b16 %v4658, %v4656
    %v4725 = vpack.c.b16 %v4661, %v4659
    %v4726 = vpack.c.b16 %v4662, %v4660
    %4791 = vmatprep.subr.bf16.mxu0 %v4664
    %4792 = vmatpush1.bf16.msra.mxu0 %v4663
    %4793 = vmatprep.subr.bf16.mxu0 %v4666
    %4794 = vmatpush1.bf16.msra.mxu0 %v4665
    %4795 = vmatprep.subr.bf16.mxu0 %v4668
    %4796 = vmatpush1.bf16.msra.mxu0 %v4667
    %4797 = vmatprep.subr.bf16.mxu0 %v4670
    %4798 = vmatpush1.bf16.msra.mxu0 %v4669
    %4799 = vmatprep.subr.bf16.mxu0 %v4672
    %4800 = vmatpush1.bf16.msra.mxu0 %v4671
    %4801 = vmatprep.subr.bf16.mxu0 %v4674
    %4802 = vmatpush1.bf16.msra.mxu0 %v4673
    %4803 = vmatprep.subr.bf16.mxu0 %v4676
    %4804 = vmatpush1.bf16.msra.mxu0 %v4675
    %4805 = vmatprep.subr.bf16.mxu0 %v4678
    %4806 = vmatpush1.bf16.msra.mxu0 %v4677
    %4807 = vmatprep.subr.bf16.mxu0 %v4680
    %4808 = vmatpush1.bf16.msra.mxu0 %v4679
    %4809 = vmatprep.subr.bf16.mxu0 %v4682
    %4810 = vmatpush1.bf16.msra.mxu0 %v4681
    %4811 = vmatprep.subr.bf16.mxu0 %v4684
    %4812 = vmatpush1.bf16.msra.mxu0 %v4683
    %4813 = vmatprep.subr.bf16.mxu0 %v4686
    %4814 = vmatpush1.bf16.msra.mxu0 %v4685
    %4815 = vmatprep.subr.bf16.mxu0 %v4688
    %4816 = vmatpush1.bf16.msra.mxu0 %v4687
    %4817 = vmatprep.subr.bf16.mxu0 %v4690
    %4818 = vmatpush1.bf16.msra.mxu0 %v4689
    %4819 = vmatprep.subr.bf16.mxu0 %v4692
    %4820 = vmatpush1.bf16.msra.mxu0 %v4691
    %4821 = vmatprep.subr.bf16.mxu0 %v4694
    %4822 = vmatpush1.bf16.msra.mxu0 %v4693
    %4823 = vmatprep.mubr.bf16.mxu0 %v4392
    %4824 = vmatmul.mubr.bf16.gmra.mrb[0].mxu0 %v4391
    %v4825 = vpop.f32.mrb[0].mxu0
    %v4826 = vadd.f32 %v4464, %v4825
    %v4827 = vpop.f32.mrb[0].mxu0
    %v4828 = vadd.f32 %v4468, %v4827
    %v4829 = vpop.f32.mrb[0].mxu0
    %v4830 = vadd.f32 %v4464, %v4829
    %v4831 = vpop.f32.mrb[0].mxu0
    %v4832 = vadd.f32 %v4468, %v4831
    %4833 = vdwg.mxu0
    %4834 = vmatprep.subr.bf16.mxu0 %v4696
    %4835 = vmatpush1.bf16.msra.mxu0 %v4695
    %4836 = vmatprep.subr.bf16.mxu0 %v4698
    %4837 = vmatpush1.bf16.msra.mxu0 %v4697
    %4838 = vmatprep.subr.bf16.mxu0 %v4700
    %4839 = vmatpush1.bf16.msra.mxu0 %v4699
    %4840 = vmatprep.subr.bf16.mxu0 %v4702
    %4841 = vmatpush1.bf16.msra.mxu0 %v4701
    %4842 = vmatprep.subr.bf16.mxu0 %v4704
    %4843 = vmatpush1.bf16.msra.mxu0 %v4703
    %4844 = vmatprep.subr.bf16.mxu0 %v4706
    %4845 = vmatpush1.bf16.msra.mxu0 %v4705
    %4846 = vmatprep.subr.bf16.mxu0 %v4708
    %4847 = vmatpush1.bf16.msra.mxu0 %v4707
    %4848 = vmatprep.subr.bf16.mxu0 %v4710
    %4849 = vmatpush1.bf16.msra.mxu0 %v4709
    %4850 = vmatprep.subr.bf16.mxu0 %v4712
    %4851 = vmatpush1.bf16.msra.mxu0 %v4711
    %4852 = vmatprep.subr.bf16.mxu0 %v4714
    %4853 = vmatpush1.bf16.msra.mxu0 %v4713
    %4854 = vmatprep.subr.bf16.mxu0 %v4716
    %4855 = vmatpush1.bf16.msra.mxu0 %v4715
    %4856 = vmatprep.subr.bf16.mxu0 %v4718
    %4857 = vmatpush1.bf16.msra.mxu0 %v4717
    %4858 = vmatprep.subr.bf16.mxu0 %v4720
    %4859 = vmatpush1.bf16.msra.mxu0 %v4719
    %4860 = vmatprep.subr.bf16.mxu0 %v4722
    %4861 = vmatpush1.bf16.msra.mxu0 %v4721
    %4862 = vmatprep.subr.bf16.mxu0 %v4724
    %4863 = vmatpush1.bf16.msra.mxu0 %v4723
    %4864 = vmatprep.subr.bf16.mxu0 %v4726
    %4865 = vmatpush1.bf16.msra.mxu0 %v4725
    %4866 = vmatprep.mubr.bf16.mxu0 %v4394
    %4867 = vmatmul.mubr.bf16.gmra.mrb[0].mxu0 %v4393
    %v4868 = vpop.f32.mrb[0].mxu0
    %v4869 = vadd.f32 %v4826, %v4868
    %v4870 = vpop.f32.mrb[0].mxu0
    %v4871 = vadd.f32 %v4828, %v4870
    %v4872 = vpop.f32.mrb[0].mxu0
    %v4873 = vadd.f32 %v4830, %v4872
    %v4874 = vpop.f32.mrb[0].mxu0
    %v4875 = vadd.f32 %v4832, %v4874
    %4876 = vdwg.mxu0
    %v4877 = vld [vmem:[%s8 + $0x11] sm:$0x3]
    %v4878 = vld [vmem:[%s8 + $0x13] sm:$0x3]
    %v4879 = vadd.f32 %v4869, %v4871
    %4880 = vadd.xlane.f32.xlu0 %v4879
    %v4881 = vpop.xlane.xlu0 %4880
    %v4882 = vadd.f32 %v4873, %v4875
    %4883 = vadd.xlane.f32.xlu0 %v4882
    %v4884 = vpop.xlane.xlu0 %4883
    %v4885 = vrcp.pop 256.0
    %v4886 = vmul.f32 %v4881, %v4885
    %v4887 = vmul.f32 %v4884, %v4885
    %v4888 = vsub.f32 %v4869, %v4886
    %v4889 = vsub.f32 %v4871, %v4886
    %v4890 = vsub.f32 %v4873, %v4887
    %v4891 = vsub.f32 %v4875, %v4887
    %v4892 = vmul.f32 %v4888, %v4888
    %v4893 = vmul.f32 %v4889, %v4889
    %v4894 = vmul.f32 %v4890, %v4890
    %v4895 = vmul.f32 %v4891, %v4891
    %v4896 = vadd.f32 %v4892, %v4893
    %4897 = vadd.xlane.f32.xlu0 %v4896
    %v4898 = vpop.xlane.xlu0 %4897
    %v4899 = vadd.f32 %v4894, %v4895
    %4900 = vadd.xlane.f32.xlu0 %v4899
    %v4901 = vpop.xlane.xlu0 %4900
    %v4902 = vmul.f32 %v4898, %v4885
    %v4903 = vmul.f32 %v4901, %v4885
    %v4904 = vadd.f32 %v4902, 1e-05
    %v4905 = vadd.f32 %v4903, 1e-05
    %v4906 = vrsqrt.pop %v4904
    %v4907 = vrsqrt.pop %v4905
    %v4908 = vmul.f32 %v4888, %v4906
    %v4909 = vmul.f32 %v4889, %v4906
    %v4910 = vmul.f32 %v4890, %v4907
    %v4911 = vmul.f32 %v4891, %v4907
    %v4913 = vlaneseq
    %v4914 = vshrl.u32 %v4913, 7
    %v4915 = vsub.s32 0, %v4914
    %v4916 = vrot.slane %v4877, %v4915
    %v4917 = vlaneseq
    %v4918 = vshrl.u32 %v4917, 7
    %v4919 = vsub.s32 1, %v4918
    %v4920 = vrot.slane %v4877, %v4919
    %v4923 = vmul.f32 %v4908, %v4916
    %v4924 = vmul.f32 %v4909, %v4920
    %v4925 = vmul.f32 %v4910, %v4916
    %v4926 = vmul.f32 %v4911, %v4920
    %v4928 = vlaneseq
    %v4929 = vshrl.u32 %v4928, 7
    %v4930 = vsub.s32 0, %v4929
    %v4931 = vrot.slane %v4878, %v4930
    %v4932 = vlaneseq
    %v4933 = vshrl.u32 %v4932, 7
    %v4934 = vsub.s32 1, %v4933
    %v4935 = vrot.slane %v4878, %v4934
    %v4938 = vadd.f32 %v4923, %v4931
    %v4939 = vadd.f32 %v4924, %v4935
    %v4940 = vadd.f32 %v4925, %v4931
    %v4941 = vadd.f32 %v4926, %v4935
    %4942 = vst [vmem:[#allocation10] sm:$0xff] %v4938
    %4943 = vst [vmem:[#allocation10 + $0x8] sm:$0xff] %v4939
    %4944 = vst [vmem:[#allocation10 + $0x10] sm:$0xff] %v4940
    %4945 = vst [vmem:[#allocation10 + $0x18] sm:$0xff] %v4941
    %v4946 = vpack.c.bf16 %v4940, %v4938
    %v4947 = vpack.c.bf16 %v4941, %v4939
    %v4948 = vld [vmem:[#allocation7] sm:$0xff]
    %v4949 = vld [vmem:[#allocation7 + $0x8] sm:$0xff]
    %v4950 = vld [vmem:[#allocation7 + $0x10] sm:$0xff]
    %v4951 = vld [vmem:[#allocation7 + $0x18] sm:$0xff]
    %v4952 = vld [vmem:[#allocation7 + $0x20] sm:$0xff]
    %v4953 = vld [vmem:[#allocation7 + $0x28] sm:$0xff]
    %v4954 = vld [vmem:[#allocation7 + $0x30] sm:$0xff]
    %v4955 = vld [vmem:[#allocation7 + $0x38] sm:$0xff]
    %v4956 = vld [vmem:[#allocation7 + $0x40] sm:$0xff]
    %v4957 = vld [vmem:[#allocation7 + $0x48] sm:$0xff]
    %v4958 = vld [vmem:[#allocation7 + $0x50] sm:$0xff]
    %v4959 = vld [vmem:[#allocation7 + $0x58] sm:$0xff]
    %v4960 = vld [vmem:[#allocation7 + $0x60] sm:$0xff]
    %v4961 = vld [vmem:[#allocation7 + $0x68] sm:$0xff]
    %v4962 = vld [vmem:[#allocation7 + $0x70] sm:$0xff]
    %v4963 = vld [vmem:[#allocation7 + $0x78] sm:$0xff]
    %v4964 = vld [vmem:[#allocation7 + $0x80] sm:$0xff]
    %v4965 = vld [vmem:[#allocation7 + $0x88] sm:$0xff]
    %v4966 = vld [vmem:[#allocation7 + $0x90] sm:$0xff]
    %v4967 = vld [vmem:[#allocation7 + $0x98] sm:$0xff]
    %v4968 = vld [vmem:[#allocation7 + $0xa0] sm:$0xff]
    %v4969 = vld [vmem:[#allocation7 + $0xa8] sm:$0xff]
    %v4970 = vld [vmem:[#allocation7 + $0xb0] sm:$0xff]
    %v4971 = vld [vmem:[#allocation7 + $0xb8] sm:$0xff]
    %v4972 = vld [vmem:[#allocation7 + $0xc0] sm:$0xff]
    %v4973 = vld [vmem:[#allocation7 + $0xc8] sm:$0xff]
    %v4974 = vld [vmem:[#allocation7 + $0xd0] sm:$0xff]
    %v4975 = vld [vmem:[#allocation7 + $0xd8] sm:$0xff]
    %v4976 = vld [vmem:[#allocation7 + $0xe0] sm:$0xff]
    %v4977 = vld [vmem:[#allocation7 + $0xe8] sm:$0xff]
    %v4978 = vld [vmem:[#allocation7 + $0xf0] sm:$0xff]
    %v4979 = vld [vmem:[#allocation7 + $0xf8] sm:$0xff]
    %v4980 = vld [vmem:[#allocation7 + $0x100] sm:$0xff]
    %v4981 = vld [vmem:[#allocation7 + $0x108] sm:$0xff]
    %v4982 = vld [vmem:[#allocation7 + $0x110] sm:$0xff]
    %v4983 = vld [vmem:[#allocation7 + $0x118] sm:$0xff]
    %v4984 = vld [vmem:[#allocation7 + $0x120] sm:$0xff]
    %v4985 = vld [vmem:[#allocation7 + $0x128] sm:$0xff]
    %v4986 = vld [vmem:[#allocation7 + $0x130] sm:$0xff]
    %v4987 = vld [vmem:[#allocation7 + $0x138] sm:$0xff]
    %v4988 = vld [vmem:[#allocation7 + $0x140] sm:$0xff]
    %v4989 = vld [vmem:[#allocation7 + $0x148] sm:$0xff]
    %v4990 = vld [vmem:[#allocation7 + $0x150] sm:$0xff]
    %v4991 = vld [vmem:[#allocation7 + $0x158] sm:$0xff]
    %v4992 = vld [vmem:[#allocation7 + $0x160] sm:$0xff]
    %v4993 = vld [vmem:[#allocation7 + $0x168] sm:$0xff]
    %v4994 = vld [vmem:[#allocation7 + $0x170] sm:$0xff]
    %v4995 = vld [vmem:[#allocation7 + $0x178] sm:$0xff]
    %v4996 = vld [vmem:[#allocation7 + $0x180] sm:$0xff]
    %v4997 = vld [vmem:[#allocation7 + $0x188] sm:$0xff]
    %v4998 = vld [vmem:[#allocation7 + $0x190] sm:$0xff]
    %v4999 = vld [vmem:[#allocation7 + $0x198] sm:$0xff]
    %v5000 = vld [vmem:[#allocation7 + $0x1a0] sm:$0xff]
    %v5001 = vld [vmem:[#allocation7 + $0x1a8] sm:$0xff]
    %v5002 = vld [vmem:[#allocation7 + $0x1b0] sm:$0xff]
    %v5003 = vld [vmem:[#allocation7 + $0x1b8] sm:$0xff]
    %v5004 = vld [vmem:[#allocation7 + $0x1c0] sm:$0xff]
    %v5005 = vld [vmem:[#allocation7 + $0x1c8] sm:$0xff]
    %v5006 = vld [vmem:[#allocation7 + $0x1d0] sm:$0xff]
    %v5007 = vld [vmem:[#allocation7 + $0x1d8] sm:$0xff]
    %v5008 = vld [vmem:[#allocation7 + $0x1e0] sm:$0xff]
    %v5009 = vld [vmem:[#allocation7 + $0x1e8] sm:$0xff]
    %v5010 = vld [vmem:[#allocation7 + $0x1f0] sm:$0xff]
    %v5011 = vld [vmem:[#allocation7 + $0x1f8] sm:$0xff]
    %v5012 = vld [vmem:[%s8 + $0x15] sm:$0xf]
    %v5014 = vlaneseq
    %v5015 = vshrl.u32 %v5014, 7
    %v5016 = vsub.s32 0, %v5015
    %v5017 = vrot.slane %v5012, %v5016
    %v5018 = vlaneseq
    %v5019 = vshrl.u32 %v5018, 7
    %v5020 = vsub.s32 1, %v5019
    %v5021 = vrot.slane %v5012, %v5020
    %v5022 = vlaneseq
    %v5023 = vshrl.u32 %v5022, 7
    %v5024 = vsub.s32 2, %v5023
    %v5025 = vrot.slane %v5012, %v5024
    %v5026 = vlaneseq
    %v5027 = vshrl.u32 %v5026, 7
    %v5028 = vsub.s32 3, %v5027
    %v5029 = vrot.slane %v5012, %v5028
    %v5098 = vunpack.c.l.b16 %v4948
    %v5099 = vunpack.c.h.b16 %v4948
    %v5100 = vunpack.c.l.b16 %v4949
    %v5101 = vunpack.c.h.b16 %v4949
    %v5102 = vunpack.c.l.b16 %v4950
    %v5103 = vunpack.c.h.b16 %v4950
    %v5104 = vunpack.c.l.b16 %v4951
    %v5105 = vunpack.c.h.b16 %v4951
    %v5106 = vunpack.c.l.b16 %v4952
    %v5107 = vunpack.c.h.b16 %v4952
    %v5108 = vunpack.c.l.b16 %v4953
    %v5109 = vunpack.c.h.b16 %v4953
    %v5110 = vunpack.c.l.b16 %v4954
    %v5111 = vunpack.c.h.b16 %v4954
    %v5112 = vunpack.c.l.b16 %v4955
    %v5113 = vunpack.c.h.b16 %v4955
    %v5114 = vunpack.c.l.b16 %v4956
    %v5115 = vunpack.c.h.b16 %v4956
    %v5116 = vunpack.c.l.b16 %v4957
    %v5117 = vunpack.c.h.b16 %v4957
    %v5118 = vunpack.c.l.b16 %v4958
    %v5119 = vunpack.c.h.b16 %v4958
    %v5120 = vunpack.c.l.b16 %v4959
    %v5121 = vunpack.c.h.b16 %v4959
    %v5122 = vunpack.c.l.b16 %v4960
    %v5123 = vunpack.c.h.b16 %v4960
    %v5124 = vunpack.c.l.b16 %v4961
    %v5125 = vunpack.c.h.b16 %v4961
    %v5126 = vunpack.c.l.b16 %v4962
    %v5127 = vunpack.c.h.b16 %v4962
    %v5128 = vunpack.c.l.b16 %v4963
    %v5129 = vunpack.c.h.b16 %v4963
    %v5130 = vunpack.c.l.b16 %v4964
    %v5131 = vunpack.c.h.b16 %v4964
    %v5132 = vunpack.c.l.b16 %v4965
    %v5133 = vunpack.c.h.b16 %v4965
    %v5134 = vunpack.c.l.b16 %v4966
    %v5135 = vunpack.c.h.b16 %v4966
    %v5136 = vunpack.c.l.b16 %v4967
    %v5137 = vunpack.c.h.b16 %v4967
    %v5138 = vunpack.c.l.b16 %v4968
    %v5139 = vunpack.c.h.b16 %v4968
    %v5140 = vunpack.c.l.b16 %v4969
    %v5141 = vunpack.c.h.b16 %v4969
    %v5142 = vunpack.c.l.b16 %v4970
    %v5143 = vunpack.c.h.b16 %v4970
    %v5144 = vunpack.c.l.b16 %v4971
    %v5145 = vunpack.c.h.b16 %v4971
    %v5146 = vunpack.c.l.b16 %v4972
    %v5147 = vunpack.c.h.b16 %v4972
    %v5148 = vunpack.c.l.b16 %v4973
    %v5149 = vunpack.c.h.b16 %v4973
    %v5150 = vunpack.c.l.b16 %v4974
    %v5151 = vunpack.c.h.b16 %v4974
    %v5152 = vunpack.c.l.b16 %v4975
    %v5153 = vunpack.c.h.b16 %v4975
    %v5154 = vunpack.c.l.b16 %v4976
    %v5155 = vunpack.c.h.b16 %v4976
    %v5156 = vunpack.c.l.b16 %v4977
    %v5157 = vunpack.c.h.b16 %v4977
    %v5158 = vunpack.c.l.b16 %v4978
    %v5159 = vunpack.c.h.b16 %v4978
    %v5160 = vunpack.c.l.b16 %v4979
    %v5161 = vunpack.c.h.b16 %v4979
    %v5162 = vunpack.c.l.b16 %v4980
    %v5163 = vunpack.c.h.b16 %v4980
    %v5164 = vunpack.c.l.b16 %v4981
    %v5165 = vunpack.c.h.b16 %v4981
    %v5166 = vunpack.c.l.b16 %v4982
    %v5167 = vunpack.c.h.b16 %v4982
    %v5168 = vunpack.c.l.b16 %v4983
    %v5169 = vunpack.c.h.b16 %v4983
    %v5170 = vunpack.c.l.b16 %v4984
    %v5171 = vunpack.c.h.b16 %v4984
    %v5172 = vunpack.c.l.b16 %v4985
    %v5173 = vunpack.c.h.b16 %v4985
    %v5174 = vunpack.c.l.b16 %v4986
    %v5175 = vunpack.c.h.b16 %v4986
    %v5176 = vunpack.c.l.b16 %v4987
    %v5177 = vunpack.c.h.b16 %v4987
    %v5178 = vunpack.c.l.b16 %v4988
    %v5179 = vunpack.c.h.b16 %v4988
    %v5180 = vunpack.c.l.b16 %v4989
    %v5181 = vunpack.c.h.b16 %v4989
    %v5182 = vunpack.c.l.b16 %v4990
    %v5183 = vunpack.c.h.b16 %v4990
    %v5184 = vunpack.c.l.b16 %v4991
    %v5185 = vunpack.c.h.b16 %v4991
    %v5186 = vunpack.c.l.b16 %v4992
    %v5187 = vunpack.c.h.b16 %v4992
    %v5188 = vunpack.c.l.b16 %v4993
    %v5189 = vunpack.c.h.b16 %v4993
    %v5190 = vunpack.c.l.b16 %v4994
    %v5191 = vunpack.c.h.b16 %v4994
    %v5192 = vunpack.c.l.b16 %v4995
    %v5193 = vunpack.c.h.b16 %v4995
    %v5194 = vunpack.c.l.b16 %v4996
    %v5195 = vunpack.c.h.b16 %v4996
    %v5196 = vunpack.c.l.b16 %v4997
    %v5197 = vunpack.c.h.b16 %v4997
    %v5198 = vunpack.c.l.b16 %v4998
    %v5199 = vunpack.c.h.b16 %v4998
    %v5200 = vunpack.c.l.b16 %v4999
    %v5201 = vunpack.c.h.b16 %v4999
    %v5202 = vunpack.c.l.b16 %v5000
    %v5203 = vunpack.c.h.b16 %v5000
    %v5204 = vunpack.c.l.b16 %v5001
    %v5205 = vunpack.c.h.b16 %v5001
    %v5206 = vunpack.c.l.b16 %v5002
    %v5207 = vunpack.c.h.b16 %v5002
    %v5208 = vunpack.c.l.b16 %v5003
    %v5209 = vunpack.c.h.b16 %v5003
    %v5210 = vunpack.c.l.b16 %v5004
    %v5211 = vunpack.c.h.b16 %v5004
    %v5212 = vunpack.c.l.b16 %v5005
    %v5213 = vunpack.c.h.b16 %v5005
    %v5214 = vunpack.c.l.b16 %v5006
    %v5215 = vunpack.c.h.b16 %v5006
    %v5216 = vunpack.c.l.b16 %v5007
    %v5217 = vunpack.c.h.b16 %v5007
    %v5218 = vunpack.c.l.b16 %v5008
    %v5219 = vunpack.c.h.b16 %v5008
    %v5220 = vunpack.c.l.b16 %v5009
    %v5221 = vunpack.c.h.b16 %v5009
    %v5222 = vunpack.c.l.b16 %v5010
    %v5223 = vunpack.c.h.b16 %v5010
    %v5224 = vunpack.c.l.b16 %v5011
    %v5225 = vunpack.c.h.b16 %v5011
    %v5226 = vpack.c.b16 %v5102, %v5098
    %v5227 = vpack.c.b16 %v5103, %v5099
    %v5228 = vpack.c.b16 %v5104, %v5100
    %v5229 = vpack.c.b16 %v5105, %v5101
    %v5230 = vpack.c.b16 %v5110, %v5106
    %v5231 = vpack.c.b16 %v5111, %v5107
    %v5232 = vpack.c.b16 %v5112, %v5108
    %v5233 = vpack.c.b16 %v5113, %v5109
    %v5234 = vpack.c.b16 %v5118, %v5114
    %v5235 = vpack.c.b16 %v5119, %v5115
    %v5236 = vpack.c.b16 %v5120, %v5116
    %v5237 = vpack.c.b16 %v5121, %v5117
    %v5238 = vpack.c.b16 %v5126, %v5122
    %v5239 = vpack.c.b16 %v5127, %v5123
    %v5240 = vpack.c.b16 %v5128, %v5124
    %v5241 = vpack.c.b16 %v5129, %v5125
    %v5242 = vpack.c.b16 %v5134, %v5130
    %v5243 = vpack.c.b16 %v5135, %v5131
    %v5244 = vpack.c.b16 %v5136, %v5132
    %v5245 = vpack.c.b16 %v5137, %v5133
    %v5246 = vpack.c.b16 %v5142, %v5138
    %v5247 = vpack.c.b16 %v5143, %v5139
    %v5248 = vpack.c.b16 %v5144, %v5140
    %v5249 = vpack.c.b16 %v5145, %v5141
    %v5250 = vpack.c.b16 %v5150, %v5146
    %v5251 = vpack.c.b16 %v5151, %v5147
    %v5252 = vpack.c.b16 %v5152, %v5148
    %v5253 = vpack.c.b16 %v5153, %v5149
    %v5254 = vpack.c.b16 %v5158, %v5154
    %v5255 = vpack.c.b16 %v5159, %v5155
    %v5256 = vpack.c.b16 %v5160, %v5156
    %v5257 = vpack.c.b16 %v5161, %v5157
    %v5258 = vpack.c.b16 %v5166, %v5162
    %v5259 = vpack.c.b16 %v5167, %v5163
    %v5260 = vpack.c.b16 %v5168, %v5164
    %v5261 = vpack.c.b16 %v5169, %v5165
    %v5262 = vpack.c.b16 %v5174, %v5170
    %v5263 = vpack.c.b16 %v5175, %v5171
    %v5264 = vpack.c.b16 %v5176, %v5172
    %v5265 = vpack.c.b16 %v5177, %v5173
    %v5266 = vpack.c.b16 %v5182, %v5178
    %v5267 = vpack.c.b16 %v5183, %v5179
    %v5268 = vpack.c.b16 %v5184, %v5180
    %v5269 = vpack.c.b16 %v5185, %v5181
    %v5270 = vpack.c.b16 %v5190, %v5186
    %v5271 = vpack.c.b16 %v5191, %v5187
    %v5272 = vpack.c.b16 %v5192, %v5188
    %v5273 = vpack.c.b16 %v5193, %v5189
    %v5274 = vpack.c.b16 %v5198, %v5194
    %v5275 = vpack.c.b16 %v5199, %v5195
    %v5276 = vpack.c.b16 %v5200, %v5196
    %v5277 = vpack.c.b16 %v5201, %v5197
    %v5278 = vpack.c.b16 %v5206, %v5202
    %v5279 = vpack.c.b16 %v5207, %v5203
    %v5280 = vpack.c.b16 %v5208, %v5204
    %v5281 = vpack.c.b16 %v5209, %v5205
    %v5282 = vpack.c.b16 %v5214, %v5210
    %v5283 = vpack.c.b16 %v5215, %v5211
    %v5284 = vpack.c.b16 %v5216, %v5212
    %v5285 = vpack.c.b16 %v5217, %v5213
    %v5286 = vpack.c.b16 %v5222, %v5218
    %v5287 = vpack.c.b16 %v5223, %v5219
    %v5288 = vpack.c.b16 %v5224, %v5220
    %v5289 = vpack.c.b16 %v5225, %v5221
    %5354 = vmatprep.subr.bf16.mxu0 %v5227
    %5355 = vmatpush1.bf16.msra.mxu0 %v5226
    %5356 = vmatprep.subr.bf16.mxu0 %v5231
    %5357 = vmatpush1.bf16.msra.mxu0 %v5230
    %5358 = vmatprep.subr.bf16.mxu0 %v5235
    %5359 = vmatpush1.bf16.msra.mxu0 %v5234
    %5360 = vmatprep.subr.bf16.mxu0 %v5239
    %5361 = vmatpush1.bf16.msra.mxu0 %v5238
    %5362 = vmatprep.subr.bf16.mxu0 %v5243
    %5363 = vmatpush1.bf16.msra.mxu0 %v5242
    %5364 = vmatprep.subr.bf16.mxu0 %v5247
    %5365 = vmatpush1.bf16.msra.mxu0 %v5246
    %5366 = vmatprep.subr.bf16.mxu0 %v5251
    %5367 = vmatpush1.bf16.msra.mxu0 %v5250
    %5368 = vmatprep.subr.bf16.mxu0 %v5255
    %5369 = vmatpush1.bf16.msra.mxu0 %v5254
    %5370 = vmatprep.subr.bf16.mxu0 %v5259
    %5371 = vmatpush1.bf16.msra.mxu0 %v5258
    %5372 = vmatprep.subr.bf16.mxu0 %v5263
    %5373 = vmatpush1.bf16.msra.mxu0 %v5262
    %5374 = vmatprep.subr.bf16.mxu0 %v5267
    %5375 = vmatpush1.bf16.msra.mxu0 %v5266
    %5376 = vmatprep.subr.bf16.mxu0 %v5271
    %5377 = vmatpush1.bf16.msra.mxu0 %v5270
    %5378 = vmatprep.subr.bf16.mxu0 %v5275
    %5379 = vmatpush1.bf16.msra.mxu0 %v5274
    %5380 = vmatprep.subr.bf16.mxu0 %v5279
    %5381 = vmatpush1.bf16.msra.mxu0 %v5278
    %5382 = vmatprep.subr.bf16.mxu0 %v5283
    %5383 = vmatpush1.bf16.msra.mxu0 %v5282
    %5384 = vmatprep.subr.bf16.mxu0 %v5287
    %5385 = vmatpush1.bf16.msra.mxu0 %v5286
    %5386 = vmatprep.mubr.bf16.mxu0 %v4947
    %5387 = vmatmul.mubr.bf16.gmra.mrb[0].mxu0 %v4946
    %v5388 = vpop.f32.mrb[0].mxu0
    %v5389 = vadd.f32 %v5017, %v5388
    %v5390 = vpop.f32.mrb[0].mxu0
    %v5391 = vadd.f32 %v5021, %v5390
    %v5392 = vpop.f32.mrb[0].mxu0
    %v5393 = vadd.f32 %v5017, %v5392
    %v5394 = vpop.f32.mrb[0].mxu0
    %v5395 = vadd.f32 %v5021, %v5394
    %5396 = vdwg.mxu0
    %5397 = vmatprep.subr.bf16.mxu0 %v5229
    %5398 = vmatpush1.bf16.msra.mxu0 %v5228
    %5399 = vmatprep.subr.bf16.mxu0 %v5233
    %5400 = vmatpush1.bf16.msra.mxu0 %v5232
    %5401 = vmatprep.subr.bf16.mxu0 %v5237
    %5402 = vmatpush1.bf16.msra.mxu0 %v5236
    %5403 = vmatprep.subr.bf16.mxu0 %v5241
    %5404 = vmatpush1.bf16.msra.mxu0 %v5240
    %5405 = vmatprep.subr.bf16.mxu0 %v5245
    %5406 = vmatpush1.bf16.msra.mxu0 %v5244
    %5407 = vmatprep.subr.bf16.mxu0 %v5249
    %5408 = vmatpush1.bf16.msra.mxu0 %v5248
    %5409 = vmatprep.subr.bf16.mxu0 %v5253
    %5410 = vmatpush1.bf16.msra.mxu0 %v5252
    %5411 = vmatprep.subr.bf16.mxu0 %v5257
    %5412 = vmatpush1.bf16.msra.mxu0 %v5256
    %5413 = vmatprep.subr.bf16.mxu0 %v5261
    %5414 = vmatpush1.bf16.msra.mxu0 %v5260
    %5415 = vmatprep.subr.bf16.mxu0 %v5265
    %5416 = vmatpush1.bf16.msra.mxu0 %v5264
    %5417 = vmatprep.subr.bf16.mxu0 %v5269
    %5418 = vmatpush1.bf16.msra.mxu0 %v5268
    %5419 = vmatprep.subr.bf16.mxu0 %v5273
    %5420 = vmatpush1.bf16.msra.mxu0 %v5272
    %5421 = vmatprep.subr.bf16.mxu0 %v5277
    %5422 = vmatpush1.bf16.msra.mxu0 %v5276
    %5423 = vmatprep.subr.bf16.mxu0 %v5281
    %5424 = vmatpush1.bf16.msra.mxu0 %v5280
    %5425 = vmatprep.subr.bf16.mxu0 %v5285
    %5426 = vmatpush1.bf16.msra.mxu0 %v5284
    %5427 = vmatprep.subr.bf16.mxu0 %v5289
    %5428 = vmatpush1.bf16.msra.mxu0 %v5288
    %5429 = vmatprep.mubr.bf16.mxu0 %v4947
    %5430 = vmatmul.mubr.bf16.gmra.mrb[0].mxu0 %v4946
    %v5431 = vpop.f32.mrb[0].mxu0
    %v5432 = vadd.f32 %v5025, %v5431
    %v5433 = vpop.f32.mrb[0].mxu0
    %v5434 = vadd.f32 %v5029, %v5433
    %v5435 = vpop.f32.mrb[0].mxu0
    %v5436 = vadd.f32 %v5025, %v5435
    %v5437 = vpop.f32.mrb[0].mxu0
    %v5438 = vadd.f32 %v5029, %v5437
    %5439 = vdwg.mxu0
    %v5440 = vmax.f32 %v5389, 0.0
    %v5441 = vmax.f32 %v5391, 0.0
    %v5442 = vmax.f32 %v5432, 0.0
    %v5443 = vmax.f32 %v5434, 0.0
    %v5444 = vmax.f32 %v5393, 0.0
    %v5445 = vmax.f32 %v5395, 0.0
    %v5446 = vmax.f32 %v5436, 0.0
    %v5447 = vmax.f32 %v5438, 0.0
    %v5448 = vpack.c.bf16 %v5444, %v5440
    %v5449 = vpack.c.bf16 %v5445, %v5441
    %v5450 = vpack.c.bf16 %v5446, %v5442
    %v5451 = vpack.c.bf16 %v5447, %v5443
    %v5452 = vld [vmem:[#allocation8 + $0x8] sm:$0xff]
    %v5453 = vld [vmem:[#allocation8 + $0x1c] sm:$0xff]
    %v5454 = vld [vmem:[#allocation8 + $0x30] sm:$0xff]
    %v5455 = vld [vmem:[#allocation8 + $0x44] sm:$0xff]
    %v5456 = vld [vmem:[#allocation8 + $0x58] sm:$0xff]
    %v5457 = vld [vmem:[#allocation8 + $0x6c] sm:$0xff]
    %v5458 = vld [vmem:[#allocation8 + $0x80] sm:$0xff]
    %v5459 = vld [vmem:[#allocation8 + $0x94] sm:$0xff]
    %v5460 = vld [vmem:[#allocation8 + $0xa8] sm:$0xff]
    %v5461 = vld [vmem:[#allocation8 + $0xbc] sm:$0xff]
    %v5462 = vld [vmem:[#allocation8 + $0xd0] sm:$0xff]
    %v5463 = vld [vmem:[#allocation8 + $0xe4] sm:$0xff]
    %v5464 = vld [vmem:[#allocation8 + $0xf8] sm:$0xff]
    %v5465 = vld [vmem:[#allocation8 + $0x10c] sm:$0xff]
    %v5466 = vld [vmem:[#allocation8 + $0x120] sm:$0xff]
    %v5467 = vld [vmem:[#allocation8 + $0x134] sm:$0xff]
    %v5468 = vld [vmem:[#allocation8 + $0x148] sm:$0xff]
    %v5469 = vld [vmem:[#allocation8 + $0x15c] sm:$0xff]
    %v5470 = vld [vmem:[#allocation8 + $0x170] sm:$0xff]
    %v5471 = vld [vmem:[#allocation8 + $0x184] sm:$0xff]
    %v5472 = vld [vmem:[#allocation8 + $0x198] sm:$0xff]
    %v5473 = vld [vmem:[#allocation8 + $0x1ac] sm:$0xff]
    %v5474 = vld [vmem:[#allocation8 + $0x1c0] sm:$0xff]
    %v5475 = vld [vmem:[#allocation8 + $0x1d4] sm:$0xff]
    %v5476 = vld [vmem:[#allocation8 + $0x1e8] sm:$0xff]
    %v5477 = vld [vmem:[#allocation8 + $0x1fc] sm:$0xff]
    %v5478 = vld [vmem:[#allocation8 + $0x210] sm:$0xff]
    %v5479 = vld [vmem:[#allocation8 + $0x224] sm:$0xff]
    %v5480 = vld [vmem:[#allocation8 + $0x238] sm:$0xff]
    %v5481 = vld [vmem:[#allocation8 + $0x24c] sm:$0xff]
    %v5482 = vld [vmem:[#allocation8 + $0x260] sm:$0xff]
    %v5483 = vld [vmem:[#allocation8 + $0x274] sm:$0xff]
    %v5484 = vld [vmem:[#allocation8 + $0x288] sm:$0xff]
    %v5485 = vld [vmem:[#allocation8 + $0x29c] sm:$0xff]
    %v5486 = vld [vmem:[#allocation8 + $0x2b0] sm:$0xff]
    %v5487 = vld [vmem:[#allocation8 + $0x2c4] sm:$0xff]
    %v5488 = vld [vmem:[#allocation8 + $0x2d8] sm:$0xff]
    %v5489 = vld [vmem:[#allocation8 + $0x2ec] sm:$0xff]
    %v5490 = vld [vmem:[#allocation8 + $0x300] sm:$0xff]
    %v5491 = vld [vmem:[#allocation8 + $0x314] sm:$0xff]
    %v5492 = vld [vmem:[#allocation8 + $0x328] sm:$0xff]
    %v5493 = vld [vmem:[#allocation8 + $0x33c] sm:$0xff]
    %v5494 = vld [vmem:[#allocation8 + $0x350] sm:$0xff]
    %v5495 = vld [vmem:[#allocation8 + $0x364] sm:$0xff]
    %v5496 = vld [vmem:[#allocation8 + $0x378] sm:$0xff]
    %v5497 = vld [vmem:[#allocation8 + $0x38c] sm:$0xff]
    %v5498 = vld [vmem:[#allocation8 + $0x3a0] sm:$0xff]
    %v5499 = vld [vmem:[#allocation8 + $0x3b4] sm:$0xff]
    %v5500 = vld [vmem:[#allocation8 + $0x3c8] sm:$0xff]
    %v5501 = vld [vmem:[#allocation8 + $0x3dc] sm:$0xff]
    %v5502 = vld [vmem:[#allocation8 + $0x3f0] sm:$0xff]
    %v5503 = vld [vmem:[#allocation8 + $0x404] sm:$0xff]
    %v5504 = vld [vmem:[#allocation8 + $0x418] sm:$0xff]
    %v5505 = vld [vmem:[#allocation8 + $0x42c] sm:$0xff]
    %v5506 = vld [vmem:[#allocation8 + $0x440] sm:$0xff]
    %v5507 = vld [vmem:[#allocation8 + $0x454] sm:$0xff]
    %v5508 = vld [vmem:[#allocation8 + $0x468] sm:$0xff]
    %v5509 = vld [vmem:[#allocation8 + $0x47c] sm:$0xff]
    %v5510 = vld [vmem:[#allocation8 + $0x490] sm:$0xff]
    %v5511 = vld [vmem:[#allocation8 + $0x4a4] sm:$0xff]
    %v5512 = vld [vmem:[#allocation8 + $0x4b8] sm:$0xff]
    %v5513 = vld [vmem:[#allocation8 + $0x4cc] sm:$0xff]
    %v5514 = vld [vmem:[#allocation8 + $0x4e0] sm:$0xff]
    %v5515 = vld [vmem:[#allocation8 + $0x4f4] sm:$0xff]
    %v5516 = vld [vmem:[%s8 + $0x19] sm:$0x3]
    %v5518 = vlaneseq
    %v5519 = vshrl.u32 %v5518, 7
    %v5520 = vsub.s32 0, %v5519
    %v5521 = vrot.slane %v5516, %v5520
    %v5522 = vlaneseq
    %v5523 = vshrl.u32 %v5522, 7
    %v5524 = vsub.s32 1, %v5523
    %v5525 = vrot.slane %v5516, %v5524
    %v5592 = vunpack.c.l.b16 %v5452
    %v5593 = vunpack.c.h.b16 %v5452
    %v5594 = vunpack.c.l.b16 %v5453
    %v5595 = vunpack.c.h.b16 %v5453
    %v5596 = vunpack.c.l.b16 %v5454
    %v5597 = vunpack.c.h.b16 %v5454
    %v5598 = vunpack.c.l.b16 %v5455
    %v5599 = vunpack.c.h.b16 %v5455
    %v5600 = vunpack.c.l.b16 %v5456
    %v5601 = vunpack.c.h.b16 %v5456
    %v5602 = vunpack.c.l.b16 %v5457
    %v5603 = vunpack.c.h.b16 %v5457
    %v5604 = vunpack.c.l.b16 %v5458
    %v5605 = vunpack.c.h.b16 %v5458
    %v5606 = vunpack.c.l.b16 %v5459
    %v5607 = vunpack.c.h.b16 %v5459
    %v5608 = vunpack.c.l.b16 %v5460
    %v5609 = vunpack.c.h.b16 %v5460
    %v5610 = vunpack.c.l.b16 %v5461
    %v5611 = vunpack.c.h.b16 %v5461
    %v5612 = vunpack.c.l.b16 %v5462
    %v5613 = vunpack.c.h.b16 %v5462
    %v5614 = vunpack.c.l.b16 %v5463
    %v5615 = vunpack.c.h.b16 %v5463
    %v5616 = vunpack.c.l.b16 %v5464
    %v5617 = vunpack.c.h.b16 %v5464
    %v5618 = vunpack.c.l.b16 %v5465
    %v5619 = vunpack.c.h.b16 %v5465
    %v5620 = vunpack.c.l.b16 %v5466
    %v5621 = vunpack.c.h.b16 %v5466
    %v5622 = vunpack.c.l.b16 %v5467
    %v5623 = vunpack.c.h.b16 %v5467
    %v5624 = vunpack.c.l.b16 %v5468
    %v5625 = vunpack.c.h.b16 %v5468
    %v5626 = vunpack.c.l.b16 %v5469
    %v5627 = vunpack.c.h.b16 %v5469
    %v5628 = vunpack.c.l.b16 %v5470
    %v5629 = vunpack.c.h.b16 %v5470
    %v5630 = vunpack.c.l.b16 %v5471
    %v5631 = vunpack.c.h.b16 %v5471
    %v5632 = vunpack.c.l.b16 %v5472
    %v5633 = vunpack.c.h.b16 %v5472
    %v5634 = vunpack.c.l.b16 %v5473
    %v5635 = vunpack.c.h.b16 %v5473
    %v5636 = vunpack.c.l.b16 %v5474
    %v5637 = vunpack.c.h.b16 %v5474
    %v5638 = vunpack.c.l.b16 %v5475
    %v5639 = vunpack.c.h.b16 %v5475
    %v5640 = vunpack.c.l.b16 %v5476
    %v5641 = vunpack.c.h.b16 %v5476
    %v5642 = vunpack.c.l.b16 %v5477
    %v5643 = vunpack.c.h.b16 %v5477
    %v5644 = vunpack.c.l.b16 %v5478
    %v5645 = vunpack.c.h.b16 %v5478
    %v5646 = vunpack.c.l.b16 %v5479
    %v5647 = vunpack.c.h.b16 %v5479
    %v5648 = vunpack.c.l.b16 %v5480
    %v5649 = vunpack.c.h.b16 %v5480
    %v5650 = vunpack.c.l.b16 %v5481
    %v5651 = vunpack.c.h.b16 %v5481
    %v5652 = vunpack.c.l.b16 %v5482
    %v5653 = vunpack.c.h.b16 %v5482
    %v5654 = vunpack.c.l.b16 %v5483
    %v5655 = vunpack.c.h.b16 %v5483
    %v5656 = vunpack.c.l.b16 %v5484
    %v5657 = vunpack.c.h.b16 %v5484
    %v5658 = vunpack.c.l.b16 %v5485
    %v5659 = vunpack.c.h.b16 %v5485
    %v5660 = vunpack.c.l.b16 %v5486
    %v5661 = vunpack.c.h.b16 %v5486
    %v5662 = vunpack.c.l.b16 %v5487
    %v5663 = vunpack.c.h.b16 %v5487
    %v5664 = vunpack.c.l.b16 %v5488
    %v5665 = vunpack.c.h.b16 %v5488
    %v5666 = vunpack.c.l.b16 %v5489
    %v5667 = vunpack.c.h.b16 %v5489
    %v5668 = vunpack.c.l.b16 %v5490
    %v5669 = vunpack.c.h.b16 %v5490
    %v5670 = vunpack.c.l.b16 %v5491
    %v5671 = vunpack.c.h.b16 %v5491
    %v5672 = vunpack.c.l.b16 %v5492
    %v5673 = vunpack.c.h.b16 %v5492
    %v5674 = vunpack.c.l.b16 %v5493
    %v5675 = vunpack.c.h.b16 %v5493
    %v5676 = vunpack.c.l.b16 %v5494
    %v5677 = vunpack.c.h.b16 %v5494
    %v5678 = vunpack.c.l.b16 %v5495
    %v5679 = vunpack.c.h.b16 %v5495
    %v5680 = vunpack.c.l.b16 %v5496
    %v5681 = vunpack.c.h.b16 %v5496
    %v5682 = vunpack.c.l.b16 %v5497
    %v5683 = vunpack.c.h.b16 %v5497
    %v5684 = vunpack.c.l.b16 %v5498
    %v5685 = vunpack.c.h.b16 %v5498
    %v5686 = vunpack.c.l.b16 %v5499
    %v5687 = vunpack.c.h.b16 %v5499
    %v5688 = vunpack.c.l.b16 %v5500
    %v5689 = vunpack.c.h.b16 %v5500
    %v5690 = vunpack.c.l.b16 %v5501
    %v5691 = vunpack.c.h.b16 %v5501
    %v5692 = vunpack.c.l.b16 %v5502
    %v5693 = vunpack.c.h.b16 %v5502
    %v5694 = vunpack.c.l.b16 %v5503
    %v5695 = vunpack.c.h.b16 %v5503
    %v5696 = vunpack.c.l.b16 %v5504
    %v5697 = vunpack.c.h.b16 %v5504
    %v5698 = vunpack.c.l.b16 %v5505
    %v5699 = vunpack.c.h.b16 %v5505
    %v5700 = vunpack.c.l.b16 %v5506
    %v5701 = vunpack.c.h.b16 %v5506
    %v5702 = vunpack.c.l.b16 %v5507
    %v5703 = vunpack.c.h.b16 %v5507
    %v5704 = vunpack.c.l.b16 %v5508
    %v5705 = vunpack.c.h.b16 %v5508
    %v5706 = vunpack.c.l.b16 %v5509
    %v5707 = vunpack.c.h.b16 %v5509
    %v5708 = vunpack.c.l.b16 %v5510
    %v5709 = vunpack.c.h.b16 %v5510
    %v5710 = vunpack.c.l.b16 %v5511
    %v5711 = vunpack.c.h.b16 %v5511
    %v5712 = vunpack.c.l.b16 %v5512
    %v5713 = vunpack.c.h.b16 %v5512
    %v5714 = vunpack.c.l.b16 %v5513
    %v5715 = vunpack.c.h.b16 %v5513
    %v5716 = vunpack.c.l.b16 %v5514
    %v5717 = vunpack.c.h.b16 %v5514
    %v5718 = vunpack.c.l.b16 %v5515
    %v5719 = vunpack.c.h.b16 %v5515
    %v5720 = vpack.c.b16 %v5594, %v5592
    %v5721 = vpack.c.b16 %v5595, %v5593
    %v5722 = vpack.c.b16 %v5598, %v5596
    %v5723 = vpack.c.b16 %v5599, %v5597
    %v5724 = vpack.c.b16 %v5602, %v5600
    %v5725 = vpack.c.b16 %v5603, %v5601
    %v5726 = vpack.c.b16 %v5606, %v5604
    %v5727 = vpack.c.b16 %v5607, %v5605
    %v5728 = vpack.c.b16 %v5610, %v5608
    %v5729 = vpack.c.b16 %v5611, %v5609
    %v5730 = vpack.c.b16 %v5614, %v5612
    %v5731 = vpack.c.b16 %v5615, %v5613
    %v5732 = vpack.c.b16 %v5618, %v5616
    %v5733 = vpack.c.b16 %v5619, %v5617
    %v5734 = vpack.c.b16 %v5622, %v5620
    %v5735 = vpack.c.b16 %v5623, %v5621
    %v5736 = vpack.c.b16 %v5626, %v5624
    %v5737 = vpack.c.b16 %v5627, %v5625
    %v5738 = vpack.c.b16 %v5630, %v5628
    %v5739 = vpack.c.b16 %v5631, %v5629
    %v5740 = vpack.c.b16 %v5634, %v5632
    %v5741 = vpack.c.b16 %v5635, %v5633
    %v5742 = vpack.c.b16 %v5638, %v5636
    %v5743 = vpack.c.b16 %v5639, %v5637
    %v5744 = vpack.c.b16 %v5642, %v5640
    %v5745 = vpack.c.b16 %v5643, %v5641
    %v5746 = vpack.c.b16 %v5646, %v5644
    %v5747 = vpack.c.b16 %v5647, %v5645
    %v5748 = vpack.c.b16 %v5650, %v5648
    %v5749 = vpack.c.b16 %v5651, %v5649
    %v5750 = vpack.c.b16 %v5654, %v5652
    %v5751 = vpack.c.b16 %v5655, %v5653
    %v5752 = vpack.c.b16 %v5658, %v5656
    %v5753 = vpack.c.b16 %v5659, %v5657
    %v5754 = vpack.c.b16 %v5662, %v5660
    %v5755 = vpack.c.b16 %v5663, %v5661
    %v5756 = vpack.c.b16 %v5666, %v5664
    %v5757 = vpack.c.b16 %v5667, %v5665
    %v5758 = vpack.c.b16 %v5670, %v5668
    %v5759 = vpack.c.b16 %v5671, %v5669
    %v5760 = vpack.c.b16 %v5674, %v5672
    %v5761 = vpack.c.b16 %v5675, %v5673
    %v5762 = vpack.c.b16 %v5678, %v5676
    %v5763 = vpack.c.b16 %v5679, %v5677
    %v5764 = vpack.c.b16 %v5682, %v5680
    %v5765 = vpack.c.b16 %v5683, %v5681
    %v5766 = vpack.c.b16 %v5686, %v5684
    %v5767 = vpack.c.b16 %v5687, %v5685
    %v5768 = vpack.c.b16 %v5690, %v5688
    %v5769 = vpack.c.b16 %v5691, %v5689
    %v5770 = vpack.c.b16 %v5694, %v5692
    %v5771 = vpack.c.b16 %v5695, %v5693
    %v5772 = vpack.c.b16 %v5698, %v5696
    %v5773 = vpack.c.b16 %v5699, %v5697
    %v5774 = vpack.c.b16 %v5702, %v5700
    %v5775 = vpack.c.b16 %v5703, %v5701
    %v5776 = vpack.c.b16 %v5706, %v5704
    %v5777 = vpack.c.b16 %v5707, %v5705
    %v5778 = vpack.c.b16 %v5710, %v5708
    %v5779 = vpack.c.b16 %v5711, %v5709
    %v5780 = vpack.c.b16 %v5714, %v5712
    %v5781 = vpack.c.b16 %v5715, %v5713
    %v5782 = vpack.c.b16 %v5718, %v5716
    %v5783 = vpack.c.b16 %v5719, %v5717
    %5848 = vmatprep.subr.bf16.mxu0 %v5721
    %5849 = vmatpush1.bf16.msra.mxu0 %v5720
    %5850 = vmatprep.subr.bf16.mxu0 %v5723
    %5851 = vmatpush1.bf16.msra.mxu0 %v5722
    %5852 = vmatprep.subr.bf16.mxu0 %v5725
    %5853 = vmatpush1.bf16.msra.mxu0 %v5724
    %5854 = vmatprep.subr.bf16.mxu0 %v5727
    %5855 = vmatpush1.bf16.msra.mxu0 %v5726
    %5856 = vmatprep.subr.bf16.mxu0 %v5729
    %5857 = vmatpush1.bf16.msra.mxu0 %v5728
    %5858 = vmatprep.subr.bf16.mxu0 %v5731
    %5859 = vmatpush1.bf16.msra.mxu0 %v5730
    %5860 = vmatprep.subr.bf16.mxu0 %v5733
    %5861 = vmatpush1.bf16.msra.mxu0 %v5732
    %5862 = vmatprep.subr.bf16.mxu0 %v5735
    %5863 = vmatpush1.bf16.msra.mxu0 %v5734
    %5864 = vmatprep.subr.bf16.mxu0 %v5737
    %5865 = vmatpush1.bf16.msra.mxu0 %v5736
    %5866 = vmatprep.subr.bf16.mxu0 %v5739
    %5867 = vmatpush1.bf16.msra.mxu0 %v5738
    %5868 = vmatprep.subr.bf16.mxu0 %v5741
    %5869 = vmatpush1.bf16.msra.mxu0 %v5740
    %5870 = vmatprep.subr.bf16.mxu0 %v5743
    %5871 = vmatpush1.bf16.msra.mxu0 %v5742
    %5872 = vmatprep.subr.bf16.mxu0 %v5745
    %5873 = vmatpush1.bf16.msra.mxu0 %v5744
    %5874 = vmatprep.subr.bf16.mxu0 %v5747
    %5875 = vmatpush1.bf16.msra.mxu0 %v5746
    %5876 = vmatprep.subr.bf16.mxu0 %v5749
    %5877 = vmatpush1.bf16.msra.mxu0 %v5748
    %5878 = vmatprep.subr.bf16.mxu0 %v5751
    %5879 = vmatpush1.bf16.msra.mxu0 %v5750
    %5880 = vmatprep.mubr.bf16.mxu0 %v5449
    %5881 = vmatmul.mubr.bf16.gmra.mrb[0].mxu0 %v5448
    %v5882 = vpop.f32.mrb[0].mxu0
    %v5883 = vadd.f32 %v5521, %v5882
    %v5884 = vpop.f32.mrb[0].mxu0
    %v5885 = vadd.f32 %v5525, %v5884
    %v5886 = vpop.f32.mrb[0].mxu0
    %v5887 = vadd.f32 %v5521, %v5886
    %v5888 = vpop.f32.mrb[0].mxu0
    %v5889 = vadd.f32 %v5525, %v5888
    %5890 = vdwg.mxu0
    %5891 = vmatprep.subr.bf16.mxu0 %v5753
    %5892 = vmatpush1.bf16.msra.mxu0 %v5752
    %5893 = vmatprep.subr.bf16.mxu0 %v5755
    %5894 = vmatpush1.bf16.msra.mxu0 %v5754
    %5895 = vmatprep.subr.bf16.mxu0 %v5757
    %5896 = vmatpush1.bf16.msra.mxu0 %v5756
    %5897 = vmatprep.subr.bf16.mxu0 %v5759
    %5898 = vmatpush1.bf16.msra.mxu0 %v5758
    %5899 = vmatprep.subr.bf16.mxu0 %v5761
    %5900 = vmatpush1.bf16.msra.mxu0 %v5760
    %5901 = vmatprep.subr.bf16.mxu0 %v5763
    %5902 = vmatpush1.bf16.msra.mxu0 %v5762
    %5903 = vmatprep.subr.bf16.mxu0 %v5765
    %5904 = vmatpush1.bf16.msra.mxu0 %v5764
    %5905 = vmatprep.subr.bf16.mxu0 %v5767
    %5906 = vmatpush1.bf16.msra.mxu0 %v5766
    %5907 = vmatprep.subr.bf16.mxu0 %v5769
    %5908 = vmatpush1.bf16.msra.mxu0 %v5768
    %5909 = vmatprep.subr.bf16.mxu0 %v5771
    %5910 = vmatpush1.bf16.msra.mxu0 %v5770
    %5911 = vmatprep.subr.bf16.mxu0 %v5773
    %5912 = vmatpush1.bf16.msra.mxu0 %v5772
    %5913 = vmatprep.subr.bf16.mxu0 %v5775
    %5914 = vmatpush1.bf16.msra.mxu0 %v5774
    %5915 = vmatprep.subr.bf16.mxu0 %v5777
    %5916 = vmatpush1.bf16.msra.mxu0 %v5776
    %5917 = vmatprep.subr.bf16.mxu0 %v5779
    %5918 = vmatpush1.bf16.msra.mxu0 %v5778
    %5919 = vmatprep.subr.bf16.mxu0 %v5781
    %5920 = vmatpush1.bf16.msra.mxu0 %v5780
    %5921 = vmatprep.subr.bf16.mxu0 %v5783
    %5922 = vmatpush1.bf16.msra.mxu0 %v5782
    %5923 = vmatprep.mubr.bf16.mxu0 %v5451
    %5924 = vmatmul.mubr.bf16.gmra.mrb[0].mxu0 %v5450
    %v5925 = vpop.f32.mrb[0].mxu0
    %v5926 = vadd.f32 %v5883, %v5925
    %v5927 = vpop.f32.mrb[0].mxu0
    %v5928 = vadd.f32 %v5885, %v5927
    %v5929 = vpop.f32.mrb[0].mxu0
    %v5930 = vadd.f32 %v5887, %v5929
    %v5931 = vpop.f32.mrb[0].mxu0
    %v5932 = vadd.f32 %v5889, %v5931
    %5933 = vdwg.mxu0
    %v5934 = vmax.f32 %v5926, 0.0
    %v5935 = vmax.f32 %v5928, 0.0
    %v5936 = vmax.f32 %v5930, 0.0
    %v5937 = vmax.f32 %v5932, 0.0
    %v5938 = vld [vmem:[#allocation8 + $0x10] sm:$0xf]
    %v5939 = vld [vmem:[#allocation8 + $0x24] sm:$0xf]
    %v5940 = vld [vmem:[#allocation8 + $0x38] sm:$0xf]
    %v5941 = vld [vmem:[#allocation8 + $0x4c] sm:$0xf]
    %v5942 = vld [vmem:[#allocation8 + $0x60] sm:$0xf]
    %v5943 = vld [vmem:[#allocation8 + $0x74] sm:$0xf]
    %v5944 = vld [vmem:[#allocation8 + $0x88] sm:$0xf]
    %v5945 = vld [vmem:[#allocation8 + $0x9c] sm:$0xf]
    %v5946 = vld [vmem:[#allocation8 + $0xb0] sm:$0xf]
    %v5947 = vld [vmem:[#allocation8 + $0xc4] sm:$0xf]
    %v5948 = vld [vmem:[#allocation8 + $0xd8] sm:$0xf]
    %v5949 = vld [vmem:[#allocation8 + $0xec] sm:$0xf]
    %v5950 = vld [vmem:[#allocation8 + $0x100] sm:$0xf]
    %v5951 = vld [vmem:[#allocation8 + $0x114] sm:$0xf]
    %v5952 = vld [vmem:[#allocation8 + $0x128] sm:$0xf]
    %v5953 = vld [vmem:[#allocation8 + $0x13c] sm:$0xf]
    %v5954 = vld [vmem:[#allocation8 + $0x150] sm:$0xf]
    %v5955 = vld [vmem:[#allocation8 + $0x164] sm:$0xf]
    %v5956 = vld [vmem:[#allocation8 + $0x178] sm:$0xf]
    %v5957 = vld [vmem:[#allocation8 + $0x18c] sm:$0xf]
    %v5958 = vld [vmem:[#allocation8 + $0x1a0] sm:$0xf]
    %v5959 = vld [vmem:[#allocation8 + $0x1b4] sm:$0xf]
    %v5960 = vld [vmem:[#allocation8 + $0x1c8] sm:$0xf]
    %v5961 = vld [vmem:[#allocation8 + $0x1dc] sm:$0xf]
    %v5962 = vld [vmem:[#allocation8 + $0x1f0] sm:$0xf]
    %v5963 = vld [vmem:[#allocation8 + $0x204] sm:$0xf]
    %v5964 = vld [vmem:[#allocation8 + $0x218] sm:$0xf]
    %v5965 = vld [vmem:[#allocation8 + $0x22c] sm:$0xf]
    %v5966 = vld [vmem:[#allocation8 + $0x240] sm:$0xf]
    %v5967 = vld [vmem:[#allocation8 + $0x254] sm:$0xf]
    %v5968 = vld [vmem:[#allocation8 + $0x268] sm:$0xf]
    %v5969 = vld [vmem:[#allocation8 + $0x27c] sm:$0xf]
    %v5970 = vld [vmem:[#allocation8 + $0x290] sm:$0xf]
    %v5971 = vld [vmem:[#allocation8 + $0x2a4] sm:$0xf]
    %v5972 = vld [vmem:[#allocation8 + $0x2b8] sm:$0xf]
    %v5973 = vld [vmem:[#allocation8 + $0x2cc] sm:$0xf]
    %v5974 = vld [vmem:[#allocation8 + $0x2e0] sm:$0xf]
    %v5975 = vld [vmem:[#allocation8 + $0x2f4] sm:$0xf]
    %v5976 = vld [vmem:[#allocation8 + $0x308] sm:$0xf]
    %v5977 = vld [vmem:[#allocation8 + $0x31c] sm:$0xf]
    %v5978 = vld [vmem:[#allocation8 + $0x330] sm:$0xf]
    %v5979 = vld [vmem:[#allocation8 + $0x344] sm:$0xf]
    %v5980 = vld [vmem:[#allocation8 + $0x358] sm:$0xf]
    %v5981 = vld [vmem:[#allocation8 + $0x36c] sm:$0xf]
    %v5982 = vld [vmem:[#allocation8 + $0x380] sm:$0xf]
    %v5983 = vld [vmem:[#allocation8 + $0x394] sm:$0xf]
    %v5984 = vld [vmem:[#allocation8 + $0x3a8] sm:$0xf]
    %v5985 = vld [vmem:[#allocation8 + $0x3bc] sm:$0xf]
    %v5986 = vld [vmem:[#allocation8 + $0x3d0] sm:$0xf]
    %v5987 = vld [vmem:[#allocation8 + $0x3e4] sm:$0xf]
    %v5988 = vld [vmem:[#allocation8 + $0x3f8] sm:$0xf]
    %v5989 = vld [vmem:[#allocation8 + $0x40c] sm:$0xf]
    %v5990 = vld [vmem:[#allocation8 + $0x420] sm:$0xf]
    %v5991 = vld [vmem:[#allocation8 + $0x434] sm:$0xf]
    %v5992 = vld [vmem:[#allocation8 + $0x448] sm:$0xf]
    %v5993 = vld [vmem:[#allocation8 + $0x45c] sm:$0xf]
    %v5994 = vld [vmem:[#allocation8 + $0x470] sm:$0xf]
    %v5995 = vld [vmem:[#allocation8 + $0x484] sm:$0xf]
    %v5996 = vld [vmem:[#allocation8 + $0x498] sm:$0xf]
    %v5997 = vld [vmem:[#allocation8 + $0x4ac] sm:$0xf]
    %v5998 = vld [vmem:[#allocation8 + $0x4c0] sm:$0xf]
    %v5999 = vld [vmem:[#allocation8 + $0x4d4] sm:$0xf]
    %v6000 = vld [vmem:[#allocation8 + $0x4e8] sm:$0xf]
    %v6001 = vld [vmem:[#allocation8 + $0x4fc] sm:$0xf]
    %v6002 = vpack.c.bf16 %v5936, %v5934
    %v6003 = vpack.c.bf16 %v5937, %v5935
    %v6036 = vunpack.c.l.b16 %v5970
    %v6037 = vunpack.c.l.b16 %v5971
    %v6038 = vunpack.c.l.b16 %v5972
    %v6039 = vunpack.c.l.b16 %v5973
    %v6040 = vunpack.c.l.b16 %v5974
    %v6041 = vunpack.c.l.b16 %v5975
    %v6042 = vunpack.c.l.b16 %v5976
    %v6043 = vunpack.c.l.b16 %v5977
    %v6044 = vunpack.c.l.b16 %v5978
    %v6045 = vunpack.c.l.b16 %v5979
    %v6046 = vunpack.c.l.b16 %v5980
    %v6047 = vunpack.c.l.b16 %v5981
    %v6048 = vunpack.c.l.b16 %v5982
    %v6049 = vunpack.c.l.b16 %v5983
    %v6050 = vunpack.c.l.b16 %v5984
    %v6051 = vunpack.c.l.b16 %v5985
    %v6052 = vunpack.c.l.b16 %v5986
    %v6053 = vunpack.c.l.b16 %v5987
    %v6054 = vunpack.c.l.b16 %v5988
    %v6055 = vunpack.c.l.b16 %v5989
    %v6056 = vunpack.c.l.b16 %v5990
    %v6057 = vunpack.c.l.b16 %v5991
    %v6058 = vunpack.c.l.b16 %v5992
    %v6059 = vunpack.c.l.b16 %v5993
    %v6060 = vunpack.c.l.b16 %v5994
    %v6061 = vunpack.c.l.b16 %v5995
    %v6062 = vunpack.c.l.b16 %v5996
    %v6063 = vunpack.c.l.b16 %v5997
    %v6064 = vunpack.c.l.b16 %v5998
    %v6065 = vunpack.c.l.b16 %v5999
    %v6066 = vunpack.c.l.b16 %v6000
    %v6067 = vunpack.c.l.b16 %v6001
    %v6068 = vpack.c.b16 %v6037, %v6036
    %v6069 = vpack.c.b16 %v6039, %v6038
    %v6070 = vpack.c.b16 %v6041, %v6040
    %v6071 = vpack.c.b16 %v6043, %v6042
    %v6072 = vpack.c.b16 %v6045, %v6044
    %v6073 = vpack.c.b16 %v6047, %v6046
    %v6074 = vpack.c.b16 %v6049, %v6048
    %v6075 = vpack.c.b16 %v6051, %v6050
    %v6076 = vpack.c.b16 %v6053, %v6052
    %v6077 = vpack.c.b16 %v6055, %v6054
    %v6078 = vpack.c.b16 %v6057, %v6056
    %v6079 = vpack.c.b16 %v6059, %v6058
    %v6080 = vpack.c.b16 %v6061, %v6060
    %v6081 = vpack.c.b16 %v6063, %v6062
    %v6082 = vpack.c.b16 %v6065, %v6064
    %v6083 = vpack.c.b16 %v6067, %v6066
    %6100 = vmatprep.subr.bf16.mxu0 0
    %6101 = vmatpush1.bf16.msra.mxu0 %v6068
    %6102 = vmatprep.subr.bf16.mxu0 0
    %6103 = vmatpush1.bf16.msra.mxu0 %v6069
    %6104 = vmatprep.subr.bf16.mxu0 0
    %6105 = vmatpush1.bf16.msra.mxu0 %v6070
    %6106 = vmatprep.subr.bf16.mxu0 0
    %6107 = vmatpush1.bf16.msra.mxu0 %v6071
    %6108 = vmatprep.subr.bf16.mxu0 0
    %6109 = vmatpush1.bf16.msra.mxu0 %v6072
    %6110 = vmatprep.subr.bf16.mxu0 0
    %6111 = vmatpush1.bf16.msra.mxu0 %v6073
    %6112 = vmatprep.subr.bf16.mxu0 0
    %6113 = vmatpush1.bf16.msra.mxu0 %v6074
    %6114 = vmatprep.subr.bf16.mxu0 0
    %6115 = vmatpush1.bf16.msra.mxu0 %v6075
    %6116 = vmatprep.subr.bf16.mxu0 0
    %6117 = vmatpush1.bf16.msra.mxu0 %v6076
    %6118 = vmatprep.subr.bf16.mxu0 0
    %6119 = vmatpush1.bf16.msra.mxu0 %v6077
    %6120 = vmatprep.subr.bf16.mxu0 0
    %6121 = vmatpush1.bf16.msra.mxu0 %v6078
    %6122 = vmatprep.subr.bf16.mxu0 0
    %6123 = vmatpush1.bf16.msra.mxu0 %v6079
    %6124 = vmatprep.subr.bf16.mxu0 0
    %6125 = vmatpush1.bf16.msra.mxu0 %v6080
    %6126 = vmatprep.subr.bf16.mxu0 0
    %6127 = vmatpush1.bf16.msra.mxu0 %v6081
    %6128 = vmatprep.subr.bf16.mxu0 0
    %6129 = vmatpush1.bf16.msra.mxu0 %v6082
    %6130 = vmatprep.subr.bf16.mxu0 0
    %6131 = vmatpush1.bf16.msra.mxu0 %v6083
    %6132 = vmatprep.mubr.bf16.mxu0 %v4947
    %6133 = vmatmul.mubr.bf16.gmra.mrb[0].mxu0 %v4946
    %v6134 = vpop.f32.mrb[0].mxu0
    %v6135 = vadd.f32 0.0, %v6134
    %v6136 = vpop.f32.mrb[0].mxu0
    %v6137 = vpop.f32.mrb[0].mxu0
    %v6138 = vadd.f32 0.0, %v6137
    %v6139 = vpop.f32.mrb[0].mxu0
    %6140 = vdwg.mxu0
    %v6173 = vunpack.c.l.b16 %v5938
    %v6174 = vunpack.c.l.b16 %v5939
    %v6175 = vunpack.c.l.b16 %v5940
    %v6176 = vunpack.c.l.b16 %v5941
    %v6177 = vunpack.c.l.b16 %v5942
    %v6178 = vunpack.c.l.b16 %v5943
    %v6179 = vunpack.c.l.b16 %v5944
    %v6180 = vunpack.c.l.b16 %v5945
    %v6181 = vunpack.c.l.b16 %v5946
    %v6182 = vunpack.c.l.b16 %v5947
    %v6183 = vunpack.c.l.b16 %v5948
    %v6184 = vunpack.c.l.b16 %v5949
    %v6185 = vunpack.c.l.b16 %v5950
    %v6186 = vunpack.c.l.b16 %v5951
    %v6187 = vunpack.c.l.b16 %v5952
    %v6188 = vunpack.c.l.b16 %v5953
    %v6189 = vunpack.c.l.b16 %v5954
    %v6190 = vunpack.c.l.b16 %v5955
    %v6191 = vunpack.c.l.b16 %v5956
    %v6192 = vunpack.c.l.b16 %v5957
    %v6193 = vunpack.c.l.b16 %v5958
    %v6194 = vunpack.c.l.b16 %v5959
    %v6195 = vunpack.c.l.b16 %v5960
    %v6196 = vunpack.c.l.b16 %v5961
    %v6197 = vunpack.c.l.b16 %v5962
    %v6198 = vunpack.c.l.b16 %v5963
    %v6199 = vunpack.c.l.b16 %v5964
    %v6200 = vunpack.c.l.b16 %v5965
    %v6201 = vunpack.c.l.b16 %v5966
    %v6202 = vunpack.c.l.b16 %v5967
    %v6203 = vunpack.c.l.b16 %v5968
    %v6204 = vunpack.c.l.b16 %v5969
    %v6205 = vpack.c.b16 %v6174, %v6173
    %v6206 = vpack.c.b16 %v6176, %v6175
    %v6207 = vpack.c.b16 %v6178, %v6177
    %v6208 = vpack.c.b16 %v6180, %v6179
    %v6209 = vpack.c.b16 %v6182, %v6181
    %v6210 = vpack.c.b16 %v6184, %v6183
    %v6211 = vpack.c.b16 %v6186, %v6185
    %v6212 = vpack.c.b16 %v6188, %v6187
    %v6213 = vpack.c.b16 %v6190, %v6189
    %v6214 = vpack.c.b16 %v6192, %v6191
    %v6215 = vpack.c.b16 %v6194, %v6193
    %v6216 = vpack.c.b16 %v6196, %v6195
    %v6217 = vpack.c.b16 %v6198, %v6197
    %v6218 = vpack.c.b16 %v6200, %v6199
    %v6219 = vpack.c.b16 %v6202, %v6201
    %v6220 = vpack.c.b16 %v6204, %v6203
    %6237 = vmatprep.subr.bf16.mxu0 0
    %6238 = vmatpush1.bf16.msra.mxu0 %v6205
    %6239 = vmatprep.subr.bf16.mxu0 0
    %6240 = vmatpush1.bf16.msra.mxu0 %v6206
    %6241 = vmatprep.subr.bf16.mxu0 0
    %6242 = vmatpush1.bf16.msra.mxu0 %v6207
    %6243 = vmatprep.subr.bf16.mxu0 0
    %6244 = vmatpush1.bf16.msra.mxu0 %v6208
    %6245 = vmatprep.subr.bf16.mxu0 0
    %6246 = vmatpush1.bf16.msra.mxu0 %v6209
    %6247 = vmatprep.subr.bf16.mxu0 0
    %6248 = vmatpush1.bf16.msra.mxu0 %v6210
    %6249 = vmatprep.subr.bf16.mxu0 0
    %6250 = vmatpush1.bf16.msra.mxu0 %v6211
    %6251 = vmatprep.subr.bf16.mxu0 0
    %6252 = vmatpush1.bf16.msra.mxu0 %v6212
    %6253 = vmatprep.subr.bf16.mxu0 0
    %6254 = vmatpush1.bf16.msra.mxu0 %v6213
    %6255 = vmatprep.subr.bf16.mxu0 0
    %6256 = vmatpush1.bf16.msra.mxu0 %v6214
    %6257 = vmatprep.subr.bf16.mxu0 0
    %6258 = vmatpush1.bf16.msra.mxu0 %v6215
    %6259 = vmatprep.subr.bf16.mxu0 0
    %6260 = vmatpush1.bf16.msra.mxu0 %v6216
    %6261 = vmatprep.subr.bf16.mxu0 0
    %6262 = vmatpush1.bf16.msra.mxu0 %v6217
    %6263 = vmatprep.subr.bf16.mxu0 0
    %6264 = vmatpush1.bf16.msra.mxu0 %v6218
    %6265 = vmatprep.subr.bf16.mxu0 0
    %6266 = vmatpush1.bf16.msra.mxu0 %v6219
    %6267 = vmatprep.subr.bf16.mxu0 0
    %6268 = vmatpush1.bf16.msra.mxu0 %v6220
    %6269 = vmatprep.mubr.bf16.mxu0 %v6003
    %6270 = vmatmul.mubr.bf16.gmra.mrb[0].mxu0 %v6002
    %v6271 = vpop.f32.mrb[0].mxu0
    %v6272 = vadd.f32 %v6135, %v6271
    %v6273 = vpop.f32.mrb[0].mxu0
    %v6274 = vpop.f32.mrb[0].mxu0
    %v6275 = vadd.f32 %v6138, %v6274
    %v6276 = vpop.f32.mrb[0].mxu0
    %6277 = vdwg.mxu0
    %v6278 = vld [vmem:[%s8 + $0x1b] sm:$0x1]
    %v6280 = vlaneseq
    %v6281 = vshrl.u32 %v6280, 7
    %v6282 = vsub.s32 0, %v6281
    %v6283 = vrot.slane %v6278, %v6282
    %v6285 = vadd.f32 %v6272, %v6283
    %v6286 = vadd.f32 %v6275, %v6283
    %6287 = vst [vmem:[#allocation11] sm:$0xff] %v6285
    %6288 = vst [vmem:[#allocation11 + $0x8] sm:$0xff] %v6286
    // Predicated region
    $region54: #{tpu_custom_call.1} parent=1 // pred_check
      _
    $region55: #{tpu_custom_call.1} parent=1 // pred_check_branch
      %6290 = sbr.rel (0) target = $region57
    $region56: #{tpu_custom_call.1} parent=1 // pred_region
      %s6292 = ssub.s32 512, 512
      %6293 = vsyncadd [#allocation4], %s6292
      %s6294 = sshll.u32 [#allocation10], 4
      %s6295 = int_to_ptr.vmem [resolvable:$true] %s6294
      %6300 = dma.vmem_to_hbm [thread:$0]  %s6295, 512, %s9, [#allocation4], 256, 256, 16
    $region57: #{tpu_custom_call.1} parent=1 // pred_fallthru
      _
    // Predicated region
    $region58: #{tpu_custom_call.1} parent=1 // pred_check
      _
    $region59: #{tpu_custom_call.1} parent=1 // pred_check_branch
      %6302 = sbr.rel (0) target = $region61
    $region60: #{tpu_custom_call.1} parent=1 // pred_region
      %s6304 = ssub.s32 256, 256
      %6305 = vsyncadd [#allocation12], %s6304
      %s6306 = sshll.u32 [#allocation11], 4
      %s6307 = int_to_ptr.vmem [resolvable:$true] %s6306
      %6312 = dma.vmem_to_hbm [thread:$0]  %s6307, 256, %s10, [#allocation12], 128, 128, 8
    $region61: #{tpu_custom_call.1} parent=1 // pred_fallthru
      _
    // Predicated region
    $region62: #{tpu_custom_call.1} parent=1 // pred_check
      _
    $region63: #{tpu_custom_call.1} parent=1 // pred_check_branch
      %6314 = sbr.rel (0) target = $region65
    $region64: #{tpu_custom_call.1} parent=1 // pred_region
      %6315 = dma.done [#allocation4], 512
    $region65: #{tpu_custom_call.1} parent=1 // pred_fallthru
      _
    // Predicated region
    $region66: #{tpu_custom_call.1} parent=1 // pred_check
      _
    $region67: #{tpu_custom_call.1} parent=1 // pred_check_branch
      %6317 = sbr.rel (0) target = $region69
    $region68: #{tpu_custom_call.1} parent=1 // pred_region
      %6318 = dma.done [#allocation12], 256
    $region69: #{tpu_custom_call.1} parent=1 // pred_fallthru
      _
    %6319 = vsyncpa [#allocation3], 1
    %6320 = vsyncpa [#allocation6], 1
    %6321 = vsyncpa [#allocation9], 1
    %6322 = vsyncpa [#allocation4], 1
    %6323 = vsyncpa [#allocation12], 1

</llo_original>
